<compile_context>
chip_gen: v7x
topology: tpu7x:2x2x1
jax: 0.10.0
libtpu: 0.0.40
codegen_flags: <defaults>
</compile_context>

<pallas_src>
import jax
import jax.numpy as jnp
from jax.experimental import pallas as pl
from jax.experimental.pallas import tpu as pltpu

ROW_TILE = 256                 # max sublane rows per block (multiple of 8)
TARGET_TILE_ELEMS = 1 << 20    # ~4 MiB f32 per tile; in+out double-buffered ~16 MiB
_PALLAS_MIN_ELEMS = 1024       # below this, a fused XLA multiply-add wins


def affine_kernel(w_ref, b_ref, x_ref, o_ref):
    # w_ref / b_ref: (1, 1) scalars in SMEM; x_ref / o_ref: (block_n, block_l) VMEM tile.
    o_ref[...] = x_ref[...] * w_ref[0, 0] + b_ref[0, 0]


def conv1d_1x1(x, weight, bias):
    """Conv1d(1, 1, kernel_size=1): y = w * x + b elementwise.

    x: (N, 1, L).  weight: (1, 1, 1).  bias: (1,).  Returns (N, 1, L).
    """
    n, c, l = x.shape
    assert c == 1
    dtype = x.dtype
    total = n * l
    itemsize = jnp.dtype(dtype).itemsize

    w = weight.reshape(()).astype(dtype)
    b = bias.reshape(()).astype(dtype)

    # Tiny inputs: plain fused XLA beats any pallas_call fixed overhead.
    if total < _PALLAS_MIN_ELEMS:
        return x * w + b

    # Free (bitcast) 2-D view; lane axis = L, sublane axis = N.
    x2d = x.reshape(n, l)

    # Block sizes: second-to-last dim must be a multiple of 8 or the full dim,
    # last dim a multiple of 128 or the full dim.  Partial edge blocks are
    # masked by Pallas, so no padding traffic is generated.
    block_n = n if n <= ROW_TILE else ROW_TILE
    lane_budget = max(128, (TARGET_TILE_ELEMS // block_n) // 128 * 128)
    block_l = l if l <= lane_budget else lane_budget

    grid = (pl.cdiv(n, block_n), pl.cdiv(l, block_l))

    w_smem = w.reshape(1, 1)
    b_smem = b.reshape(1, 1)

    out2d = pl.pallas_call(
        affine_kernel,
        out_shape=jax.ShapeDtypeStruct((n, l), dtype),
        grid=grid,
        in_specs=[
            pl.BlockSpec(memory_space=pltpu.SMEM),                  # weight scalar
            pl.BlockSpec(memory_space=pltpu.SMEM),                  # bias scalar
            pl.BlockSpec((block_n, block_l), lambda i, j: (i, j)),  # input tile
        ],
        out_specs=pl.BlockSpec((block_n, block_l), lambda i, j: (i, j)),
        compiler_params=pltpu.CompilerParams(
            dimension_semantics=("parallel", "parallel"),
            vmem_limit_bytes=32 * 1024 * 1024,
        ),
        cost_estimate=pl.CostEstimate(
            flops=2 * total,
            transcendentals=0,
            bytes_accessed=2 * itemsize * total,  # read x + write y, no padding streamed
        ),
        # TODO(synk): add input_output_aliases={2: 0} when the caller can donate x
        # (halves peak HBM footprint; PyTorch semantics do not require it).
    )(w_smem, b_smem, x2d)

    return out2d.reshape(n, 1, l)


if __name__ == "__main__":
    key = jax.random.PRNGKey(0)
    k_x, k_w, k_b = jax.random.split(key, 3)

    # Deterministic parameter init mirroring PyTorch Conv1d default:
    # uniform(-sqrt(k), sqrt(k)) with k = 1 / (in_channels * kernel_size) = 1.
    weight = jax.random.uniform(k_w, (1, 1, 1), minval=-1.0, maxval=1.0, dtype=jnp.float32)
    bias = jax.random.uniform(k_b, (1,), minval=-1.0, maxval=1.0, dtype=jnp.float32)
    w0 = weight[0, 0, 0]
    b0 = bias[0]

    # 1) Small shape implied by the module (batch=2, channels=1, length=128).
    #    Takes the fused-XLA tiny-input fast path.
    x_small = jax.random.normal(k_x, (2, 1, 128), dtype=jnp.float32)
    out_small = jax.block_until_ready(conv1d_1x1(x_small, weight, bias))
    assert out_small.shape == (2, 1, 128)
    assert jnp.allclose(out_small, x_small * w0 + b0, atol=1e-6), "small-shape mismatch"

    # 2) Pallas path with a multi-step grid along L and a masked partial edge
    #    block (600000 = 524288 + 75712), no padding or pad/slice copies.
    x_l = jax.random.normal(k_x, (2, 1, 600000), dtype=jnp.float32)
    out_l = jax.block_until_ready(conv1d_1x1(x_l, weight, bias))
    assert out_l.shape == (2, 1, 600000)
    assert jnp.allclose(out_l, x_l * w0 + b0, atol=1e-6), "lane-tiled mismatch"

    # 3) Pallas path with a partial edge block along N (300 = 256 + 44) and a
    #    full-dim (non-128-multiple) lane axis.
    x_n = jax.random.normal(k_x, (300, 1, 1000), dtype=jnp.float32)
    out_n = jax.block_until_ready(conv1d_1x1(x_n, weight, bias))
    assert out_n.shape == (300, 1, 1000)
    assert jnp.allclose(out_n, x_n * w0 + b0, atol=1e-6), "row-tiled mismatch"

    print("KERNEL_OK")
</pallas_src>

<mosaic_0001>
module attributes {stable_mosaic.version = 11 : i64} {
  func.func @affine_kernel(%arg0: i32, %arg1: i32, %arg2: memref<1x1xf32, #tpu.memory_space<smem>>, %arg3: memref<1x1xf32, #tpu.memory_space<smem>>, %arg4: memref<2x524288xf32, #tpu.memory_space<vmem>>, %arg5: memref<2x524288xf32, #tpu.memory_space<vmem>>) attributes {dimension_semantics = [#tpu.dimension_semantics<parallel>, #tpu.dimension_semantics<parallel>], iteration_bounds = array<i64: 1, 2>, scalar_prefetch = 0 : i64, scratch_operands = 0 : i64, tpu.core_type = #tpu.core_type<tc>, window_params = [{transform_indices = @transform_0, window_bounds = array<i64: 1, 1>}, {transform_indices = @transform_1, window_bounds = array<i64: 1, 1>}, {transform_indices = @transform_2, window_bounds = array<i64: 2, 524288>}, {transform_indices = @transform_3, window_bounds = array<i64: 2, 524288>}]} {
    %c0 = arith.constant 0 : index
    %c0_0 = arith.constant 0 : index
    %0 = vector.load %arg4[%c0, %c0_0] : memref<2x524288xf32, #tpu.memory_space<vmem>>, vector<2x524288xf32>
    %c0_1 = arith.constant 0 : index
    %c0_2 = arith.constant 0 : index
    %1 = memref.load %arg2[%c0_1, %c0_2] : memref<1x1xf32, #tpu.memory_space<smem>>
    %2 = vector.broadcast %1 : f32 to vector<2x524288xf32>
    %3 = arith.mulf %0, %2 : vector<2x524288xf32>
    %c0_3 = arith.constant 0 : index
    %c0_4 = arith.constant 0 : index
    %4 = memref.load %arg3[%c0_3, %c0_4] : memref<1x1xf32, #tpu.memory_space<smem>>
    %5 = vector.broadcast %4 : f32 to vector<2x524288xf32>
    %6 = arith.addf %3, %5 : vector<2x524288xf32>
    %c0_5 = arith.constant 0 : index
    %c0_6 = arith.constant 0 : index
    %7 = vector.load %arg5[%c0_5, %c0_6] : memref<2x524288xf32, #tpu.memory_space<vmem>>, vector<2x524288xf32>
    tpu.vector_store %arg5[%c0_5, %c0_6], %6 {strides = array<i32>} : memref<2x524288xf32, #tpu.memory_space<vmem>>, vector<2x524288xf32>,
    return
  }
  func.func @transform_0(%arg0: i32, %arg1: i32) -> (i32, i32) {
    %c0_i32 = arith.constant 0 : i32
    %c0_i32_0 = arith.constant 0 : i32
    %c0_i32_1 = arith.constant 0 : i32
    return %c0_i32, %c0_i32_0 : i32, i32
  }
  func.func @transform_1(%arg0: i32, %arg1: i32) -> (i32, i32) {
    %c0_i32 = arith.constant 0 : i32
    %c0_i32_0 = arith.constant 0 : i32
    %c0_i32_1 = arith.constant 0 : i32
    return %c0_i32, %c0_i32_0 : i32, i32
  }
  func.func @transform_2(%arg0: i32, %arg1: i32) -> (i32, i32) {
    %c0_i32 = arith.constant 0 : i32
    return %arg0, %arg1 : i32, i32
  }
  func.func @transform_3(%arg0: i32, %arg1: i32) -> (i32, i32) {
    %c0_i32 = arith.constant 0 : i32
    return %arg0, %arg1 : i32, i32
  }
}

</mosaic_0001>

<llo_original>
// kernel: tpu_custom_call.1
$region0: #{tpu_custom_call.1}
  #allocation0 [shape = 'u32[]', space=smem, size = 0x4, offset = 0x4, fixed_abs, tag = 'smem constant byte address 0x4 - core index']
  #allocation1 [shape = 'u32[144,128]{1,0:T(1,128)}', space=vmem, size = 0x12000, scoped, tag = 'internal scratch']
  #allocation2 [shape = 'f32[1,1]{1,0:T(1,128)S(6)}', space=smem, size = 0x200, scoped, tag = 'scoped memory for tpu_custom_call.1']
  #allocation3 [shape = 'f32[1,1]{1,0:T(1,128)S(6)}', space=smem, size = 0x200, scoped, tag = 'scoped memory for tpu_custom_call.1']
  %s0 = inlined_call_operand.<no memory space> [shape: f32[1,1], index: 0, kind: input, shape index: {}]
  %s1 = inlined_call_operand.<no memory space> [shape: f32[1,1], index: 1, kind: input, shape index: {}]
  %s2 = inlined_call_operand.hbm [shape: f32[2,600000], index: 2, kind: input, shape index: {}]
  %s3 = inlined_call_operand.hbm [shape: f32[2,600000], index: 3, kind: output, shape index: {}]
  %s4 = sld [smem:[#allocation0]]
  $region49: #{tpu_custom_call.1} parent=0
    _
  %s6 = ssub.s32 1, %s4
  %s7 = scalar_select 0, %s6, %s4
  %8 = sst [smem:[#allocation2]] %s0
  %9 = sst [smem:[#allocation3]] %s1
  $region1: #{tpu_custom_call.1} parent=0
    #allocation4 [shape = 'u8[8388608]{0}', space=vmem, size = 0x800000, scoped, tag = 'input window, operand 2']
    #allocation5 [shape = 's32[2]{0}', space=sflag, size = 0x8, scoped, tag = 'scoped memory for tpu_custom_call.1']
    #allocation6 [shape = 's32[2]{0}', space=sflag, size = 0x8, scoped, tag = 'scoped memory for tpu_custom_call.1']
    #allocation7 [shape = 'u8[8388608]{0}', space=vmem, size = 0x800000, scoped, tag = 'output window, operand 0']
    %10 = vsyncpa [#allocation5], 0
    %s11 = scalar_lea.sflag [#allocation5], 1
    %12 = vsyncpa %s11, 0
    %13 = vsyncpa [#allocation6], 0
    %s14 = scalar_lea.sflag [#allocation6], 1
    %15 = vsyncpa %s14, 0
    loop: start=0, step=1, limit=4
    $region2: #{tpu_custom_call.1} parent=1 // loop_pre_header
      _
    $region3: #{tpu_custom_call.1} parent=1 // loop_header
      %s17 = sphi 0, %s21
      %p18 = scmp.ge.s32.totalorder %s17, 4
      %s24 = sphi 0, %s36
      %s25 = sphi 0, %s32
      %s26 = sphi 0, %s24
      %s27 = sphi 0, %s25
      %s28 = sphi 0, %s26
      %s29 = sphi 0, %s27
      %s37 = sphi 0, %s37
      %s39 = sphi 0, %s37
      %s40 = sphi 0, %s39
      %s54 = sphi 0, %s40
      %s58 = sphi 0, %s58
      %s60 = sphi 0, %s58
      %s61 = sphi 0, %s60
      %s75 = sphi 0, %s61
      %s83 = sphi 0, %s85
      %s86 = sphi 0, %s83
      %s87 = sphi 0, %s86
      %s103 = sphi 0, %s87
      %s111 = sphi 0, %s113
      %s114 = sphi 0, %s111
      %s115 = sphi 0, %s114
      %s131 = sphi 0, %s115
    $region4: #{tpu_custom_call.1} parent=1 // loop_header_branch
      %20 = sbr.rel (%p18) target = $region8
    $region5: #{tpu_custom_call.1} parent=1 // loop_body
      %s22 = ssub.s32 %s17, 1
      %s23 = ssub.s32 %s17, 2
      %s30 = sadd.s32 1, %s25
      %p31 = scmp.ge.s32.totalorder %s30, 2
      %s32 = scalar_select %p31, 0, %s30
      %s33 = sadd.s32 1, %s24
      %s34 = scalar_select %p31, %s33, %s24
      %p35 = scmp.ge.s32.totalorder %s34, 1
      %s36 = scalar_select %p35, 0, %s34
      %s38 = sadd.s32 %s37, 1
      %p41 = scmp.eq.s32.totalorder %s17, 1
      %p42 = scmp.ne.s32.totalorder %s37, %s39
      %p43 = scmp.eq.s32.totalorder %s17, 0
      %p44 = por %p42, %p43
      %p45 = scmp.ne.s32.totalorder %s37, %s39
      %p46 = scmp.eq.s32.totalorder %s22, 1
      %p47 = por %p45, %p46
      %p48 = scmp.ne.s32.totalorder %s39, %s40
      %p49 = scmp.eq.s32.totalorder %s22, 0
      %p50 = por %p48, %p49
      %p51 = scmp.ne.s32.totalorder %s39, %s40
      %p52 = scmp.eq.s32.totalorder %s23, 1
      %p53 = por %p51, %p52
      %p55 = scmp.ne.s32.totalorder %s40, %s54
      %p56 = scmp.eq.s32.totalorder %s23, 0
      %p57 = por %p55, %p56
      %s59 = sadd.s32 %s58, 1
      %p62 = scmp.eq.s32.totalorder %s17, 1
      %p63 = scmp.ne.s32.totalorder %s58, %s60
      %p64 = scmp.eq.s32.totalorder %s17, 0
      %p65 = por %p63, %p64
      %p66 = scmp.ne.s32.totalorder %s58, %s60
      %p67 = scmp.eq.s32.totalorder %s22, 1
      %p68 = por %p66, %p67
      %p69 = scmp.ne.s32.totalorder %s60, %s61
      %p70 = scmp.eq.s32.totalorder %s22, 0
      %p71 = por %p69, %p70
      %p72 = scmp.ne.s32.totalorder %s60, %s61
      %p73 = scmp.eq.s32.totalorder %s23, 1
      %p74 = por %p72, %p73
      %p76 = scmp.ne.s32.totalorder %s61, %s75
      %p77 = scmp.eq.s32.totalorder %s23, 0
      %p78 = por %p76, %p77
      %s79 = ssub.s32 %s24, %s36
      %s80 = ssub.s32 %s25, %s32
      %s81 = sor.u32 %s79, %s80
      %p82 = scmp.eq.s32.totalorder %s81, 0
      %s84 = sadd.s32 %s83, 1
      %s85 = scalar_select %p82, %s83, %s84
      %p88 = pneg %p82
      %p89 = scmp.eq.s32.totalorder %s17, 1
      %p90 = por %p88, %p89
      %p91 = scmp.ne.s32.totalorder %s83, %s86
      %p92 = scmp.eq.s32.totalorder %s17, 0
      %p93 = por %p91, %p92
      %p94 = scmp.ne.s32.totalorder %s83, %s86
      %p95 = scmp.eq.s32.totalorder %s22, 1
      %p96 = por %p94, %p95
      %p97 = scmp.ne.s32.totalorder %s86, %s87
      %p98 = scmp.eq.s32.totalorder %s22, 0
      %p99 = por %p97, %p98
      %p100 = scmp.ne.s32.totalorder %s86, %s87
      %p101 = scmp.eq.s32.totalorder %s23, 1
      %p102 = por %p100, %p101
      %p104 = scmp.ne.s32.totalorder %s87, %s103
      %p105 = scmp.eq.s32.totalorder %s23, 0
      %p106 = por %p104, %p105
      %s107 = ssub.s32 %s24, %s36
      %s108 = ssub.s32 %s25, %s32
      %s109 = sor.u32 %s107, %s108
      %p110 = scmp.eq.s32.totalorder %s109, 0
      %s112 = sadd.s32 %s111, 1
      %s113 = scalar_select %p110, %s111, %s112
      %p116 = pneg %p110
      %p117 = scmp.eq.s32.totalorder %s17, 1
      %p118 = por %p116, %p117
      %p119 = scmp.ne.s32.totalorder %s111, %s114
      %p120 = scmp.eq.s32.totalorder %s17, 0
      %p121 = por %p119, %p120
      %p122 = scmp.ne.s32.totalorder %s111, %s114
      %p123 = scmp.eq.s32.totalorder %s22, 1
      %p124 = por %p122, %p123
      %p125 = scmp.ne.s32.totalorder %s114, %s115
      %p126 = scmp.eq.s32.totalorder %s22, 0
      %p127 = por %p125, %p126
      %p128 = scmp.ne.s32.totalorder %s114, %s115
      %p129 = scmp.eq.s32.totalorder %s23, 1
      %p130 = por %p128, %p129
      %p132 = scmp.ne.s32.totalorder %s115, %s131
      %p133 = scmp.eq.s32.totalorder %s23, 0
      %p134 = por %p132, %p133
      %p135 = scmp.le.s32.totalorder 1, %s17
      %p136 = scmp.lt.s32.totalorder %s17, 3
      %p137 = pnand %p135, %p136
      %p138 = pneg %p137
      // Predicated region
      $region9: #{tpu_custom_call.1} parent=5 // pred_check
        _
      $region10: #{tpu_custom_call.1} parent=5 // pred_check_branch
        %140 = sbr.rel (%p137) target = $region12
      $region11: #{tpu_custom_call.1} parent=5 // pred_region
        %s141 = ssub.s32 %s17, 1
        // Predicated region
        $region13: #{tpu_custom_call.1} parent=11 // pred_check
          %p142 = pneg %p50
        $region14: #{tpu_custom_call.1} parent=11 // pred_check_branch
          %144 = sbr.rel (%p142) target = $region16
        $region15: #{tpu_custom_call.1} parent=11 // pred_region
          _
        $region16: #{tpu_custom_call.1} parent=11 // pred_fallthru
          _
        // Predicated region
        $region17: #{tpu_custom_call.1} parent=11 // pred_check
          %p145 = pneg %p71
        $region18: #{tpu_custom_call.1} parent=11 // pred_check_branch
          %147 = sbr.rel (%p145) target = $region20
        $region19: #{tpu_custom_call.1} parent=11 // pred_region
          _
        $region20: #{tpu_custom_call.1} parent=11 // pred_fallthru
          _
      $region12: #{tpu_custom_call.1} parent=5 // pred_fallthru
        _
      %p148 = scmp.lt.s32.totalorder %s17, 2
      // Predicated region
      $region21: #{tpu_custom_call.1} parent=5 // pred_check
        %p149 = pneg %p148
      $region22: #{tpu_custom_call.1} parent=5 // pred_check_branch
        %151 = sbr.rel (%p149) target = $region24
      $region23: #{tpu_custom_call.1} parent=5 // pred_region
        // Predicated region
        $region25: #{tpu_custom_call.1} parent=23 // pred_check
          %p152 = pneg %p93
        $region26: #{tpu_custom_call.1} parent=23 // pred_check_branch
          %154 = sbr.rel (%p152) target = $region28
        $region27: #{tpu_custom_call.1} parent=23 // pred_region
          %s155 = sand.u32 %s83, 1
          %s156 = scalar_lea.sflag [#allocation5], %s155
          %s157 = sand.u32 %s83, 1
          %s158 = smul.addr %s157, 8192
          %s159 = scalar_lea.vmem [#allocation4], %s158
          %s160 = smul.u32 4096, %s25
          %s161 = ssub.s32 4688, %s160
          %p162 = scmp.lt.s32.totalorder %s161, 4096
          %s163 = scalar_select %p162, %s161, 4096
          %s164 = smul.u32 32, %s163
          %s166 = ssub.s32 131072, %s164
          %167 = vsyncadd %s156, %s166
          %p168 = scmp.ne.s32.totalorder 0, %s164
          %s169 = smul.addr %s24, 4688
          %s170 = sadd.s32 %s160, %s169
          %s171 = smul.addr %s170, 32
          %s172 = scalar_lea.hbm %s2, %s171
          %s173 = smul.u32 %s163, 2
          %s174 = sshll.u32 %s173, 4
          %s175 = sshll.u32 %s159, 4
          %s176 = int_to_ptr.vmem [resolvable:$true] %s175
          %178 = dma.hbm_to_vmem [thread:$0]  (%p168), %s172, %s174, %s176, %s156
        $region28: #{tpu_custom_call.1} parent=23 // pred_fallthru
          _
      $region24: #{tpu_custom_call.1} parent=5 // pred_fallthru
        _
      %p179 = scmp.le.s32.totalorder 1, %s17
      %p180 = scmp.lt.s32.totalorder %s17, 3
      %p181 = pnand %p179, %p180
      %p182 = pneg %p181
      // Predicated region
      $region29: #{tpu_custom_call.1} parent=5 // pred_check
        _
      $region30: #{tpu_custom_call.1} parent=5 // pred_check_branch
        %184 = sbr.rel (%p181) target = $region32
      $region31: #{tpu_custom_call.1} parent=5 // pred_region
        %s185 = ssub.s32 %s17, 1
        %s186 = sand.u32 %s86, 1
        %s187 = scalar_lea.sflag [#allocation5], %s186
        %s188 = sand.u32 %s86, 1
        %s189 = smul.addr %s188, 8192
        %s190 = scalar_lea.vmem [#allocation4], %s189
        // Predicated region
        $region33: #{tpu_custom_call.1} parent=31 // pred_check
          %p191 = pneg %p99
        $region34: #{tpu_custom_call.1} parent=31 // pred_check_branch
          %193 = sbr.rel (%p191) target = $region36
        $region35: #{tpu_custom_call.1} parent=31 // pred_region
          %194 = dma.done %s187, 131072
        $region36: #{tpu_custom_call.1} parent=31 // pred_fallthru
          _
        %p195 = pneg %p50
        %p196 = pneg %p47
        %p197 = pneg %p71
        %p198 = pneg %p68
        %s199 = sand.u32 %s86, 1
        %s200 = scalar_lea.sflag [#allocation5], %s199
        %s201 = sand.u32 %s86, 1
        %s202 = smul.addr %s201, 8192
        %s203 = scalar_lea.vmem [#allocation4], %s202
        %p204 = pneg %p99
        %p205 = pneg %p96
        %p206 = pneg %p127
        %p207 = pneg %p124
        %s208 = sand.u32 %s114, 1
        %s209 = scalar_lea.sflag [#allocation6], %s208
        %s210 = sand.u32 %s114, 1
        %s211 = smul.addr %s210, 8192
        %s212 = scalar_lea.vmem [#allocation7], %s211
        %s213 = smul.u32 4096, %s27
        %s214 = ssub.s32 4688, %s213
        %p215 = scmp.lt.s32.totalorder %s214, 4096
        %s216 = scalar_select %p215, %s214, 4096
        %s217 = smul.u32 32, %s216
        %s218 = smul.u32 4096, %s27
        %s219 = ssub.s32 4688, %s218
        %p220 = scmp.lt.s32.totalorder %s219, 4096
        %s221 = scalar_select %p220, %s219, 4096
        %s222 = smul.u32 32, %s221
        %v223 = vld [vmem:[%s190] sm:$0xff]
        %v224 = vld [vmem:[%s190 + $0x8] sm:$0xff]
        %v225 = vld [vmem:[%s190 + $0x10] sm:$0xff]
        %v226 = vld [vmem:[%s190 + $0x18] sm:$0xff]
        %v227 = vld [vmem:[%s190 + $0x20] sm:$0xff]
        %v228 = vld [vmem:[%s190 + $0x28] sm:$0xff]
        %v229 = vld [vmem:[%s190 + $0x30] sm:$0xff]
        %v230 = vld [vmem:[%s190 + $0x38] sm:$0xff]
        %v231 = vld [vmem:[%s190 + $0x40] sm:$0xff]
        %v232 = vld [vmem:[%s190 + $0x48] sm:$0xff]
        %v233 = vld [vmem:[%s190 + $0x50] sm:$0xff]
        %v234 = vld [vmem:[%s190 + $0x58] sm:$0xff]
        %v235 = vld [vmem:[%s190 + $0x60] sm:$0xff]
        %v236 = vld [vmem:[%s190 + $0x68] sm:$0xff]
        %v237 = vld [vmem:[%s190 + $0x70] sm:$0xff]
        %v238 = vld [vmem:[%s190 + $0x78] sm:$0xff]
        %v239 = vld [vmem:[%s190 + $0x80] sm:$0xff]
        %v240 = vld [vmem:[%s190 + $0x88] sm:$0xff]
        %v241 = vld [vmem:[%s190 + $0x90] sm:$0xff]
        %v242 = vld [vmem:[%s190 + $0x98] sm:$0xff]
        %v243 = vld [vmem:[%s190 + $0xa0] sm:$0xff]
        %v244 = vld [vmem:[%s190 + $0xa8] sm:$0xff]
        %v245 = vld [vmem:[%s190 + $0xb0] sm:$0xff]
        %v246 = vld [vmem:[%s190 + $0xb8] sm:$0xff]
        %v247 = vld [vmem:[%s190 + $0xc0] sm:$0xff]
        %v248 = vld [vmem:[%s190 + $0xc8] sm:$0xff]
        %v249 = vld [vmem:[%s190 + $0xd0] sm:$0xff]
        %v250 = vld [vmem:[%s190 + $0xd8] sm:$0xff]
        %v251 = vld [vmem:[%s190 + $0xe0] sm:$0xff]
        %v252 = vld [vmem:[%s190 + $0xe8] sm:$0xff]
        %v253 = vld [vmem:[%s190 + $0xf0] sm:$0xff]
        %v254 = vld [vmem:[%s190 + $0xf8] sm:$0xff]
        %v255 = vld [vmem:[%s190 + $0x100] sm:$0xff]
        %v256 = vld [vmem:[%s190 + $0x108] sm:$0xff]
        %v257 = vld [vmem:[%s190 + $0x110] sm:$0xff]
        %v258 = vld [vmem:[%s190 + $0x118] sm:$0xff]
        %v259 = vld [vmem:[%s190 + $0x120] sm:$0xff]
        %v260 = vld [vmem:[%s190 + $0x128] sm:$0xff]
        %v261 = vld [vmem:[%s190 + $0x130] sm:$0xff]
        %v262 = vld [vmem:[%s190 + $0x138] sm:$0xff]
        %v263 = vld [vmem:[%s190 + $0x140] sm:$0xff]
        %v264 = vld [vmem:[%s190 + $0x148] sm:$0xff]
        %v265 = vld [vmem:[%s190 + $0x150] sm:$0xff]
        %v266 = vld [vmem:[%s190 + $0x158] sm:$0xff]
        %v267 = vld [vmem:[%s190 + $0x160] sm:$0xff]
        %v268 = vld [vmem:[%s190 + $0x168] sm:$0xff]
        %v269 = vld [vmem:[%s190 + $0x170] sm:$0xff]
        %v270 = vld [vmem:[%s190 + $0x178] sm:$0xff]
        %v271 = vld [vmem:[%s190 + $0x180] sm:$0xff]
        %v272 = vld [vmem:[%s190 + $0x188] sm:$0xff]
        %v273 = vld [vmem:[%s190 + $0x190] sm:$0xff]
        %v274 = vld [vmem:[%s190 + $0x198] sm:$0xff]
        %v275 = vld [vmem:[%s190 + $0x1a0] sm:$0xff]
        %v276 = vld [vmem:[%s190 + $0x1a8] sm:$0xff]
        %v277 = vld [vmem:[%s190 + $0x1b0] sm:$0xff]
        %v278 = vld [vmem:[%s190 + $0x1b8] sm:$0xff]
        %v279 = vld [vmem:[%s190 + $0x1c0] sm:$0xff]
        %v280 = vld [vmem:[%s190 + $0x1c8] sm:$0xff]
        %v281 = vld [vmem:[%s190 + $0x1d0] sm:$0xff]
        %v282 = vld [vmem:[%s190 + $0x1d8] sm:$0xff]
        %v283 = vld [vmem:[%s190 + $0x1e0] sm:$0xff]
        %v284 = vld [vmem:[%s190 + $0x1e8] sm:$0xff]
        %v285 = vld [vmem:[%s190 + $0x1f0] sm:$0xff]
        %v286 = vld [vmem:[%s190 + $0x1f8] sm:$0xff]
        %v287 = vld [vmem:[%s190 + $0x200] sm:$0xff]
        %v288 = vld [vmem:[%s190 + $0x208] sm:$0xff]
        %v289 = vld [vmem:[%s190 + $0x210] sm:$0xff]
        %v290 = vld [vmem:[%s190 + $0x218] sm:$0xff]
        %v291 = vld [vmem:[%s190 + $0x220] sm:$0xff]
        %v292 = vld [vmem:[%s190 + $0x228] sm:$0xff]
        %v293 = vld [vmem:[%s190 + $0x230] sm:$0xff]
        %v294 = vld [vmem:[%s190 + $0x238] sm:$0xff]
        %v295 = vld [vmem:[%s190 + $0x240] sm:$0xff]
        %v296 = vld [vmem:[%s190 + $0x248] sm:$0xff]
        %v297 = vld [vmem:[%s190 + $0x250] sm:$0xff]
        %v298 = vld [vmem:[%s190 + $0x258] sm:$0xff]
        %v299 = vld [vmem:[%s190 + $0x260] sm:$0xff]
        %v300 = vld [vmem:[%s190 + $0x268] sm:$0xff]
        %v301 = vld [vmem:[%s190 + $0x270] sm:$0xff]
        %v302 = vld [vmem:[%s190 + $0x278] sm:$0xff]
        %v303 = vld [vmem:[%s190 + $0x280] sm:$0xff]
        %v304 = vld [vmem:[%s190 + $0x288] sm:$0xff]
        %v305 = vld [vmem:[%s190 + $0x290] sm:$0xff]
        %v306 = vld [vmem:[%s190 + $0x298] sm:$0xff]
        %v307 = vld [vmem:[%s190 + $0x2a0] sm:$0xff]
        %v308 = vld [vmem:[%s190 + $0x2a8] sm:$0xff]
        %v309 = vld [vmem:[%s190 + $0x2b0] sm:$0xff]
        %v310 = vld [vmem:[%s190 + $0x2b8] sm:$0xff]
        %v311 = vld [vmem:[%s190 + $0x2c0] sm:$0xff]
        %v312 = vld [vmem:[%s190 + $0x2c8] sm:$0xff]
        %v313 = vld [vmem:[%s190 + $0x2d0] sm:$0xff]
        %v314 = vld [vmem:[%s190 + $0x2d8] sm:$0xff]
        %v315 = vld [vmem:[%s190 + $0x2e0] sm:$0xff]
        %v316 = vld [vmem:[%s190 + $0x2e8] sm:$0xff]
        %v317 = vld [vmem:[%s190 + $0x2f0] sm:$0xff]
        %v318 = vld [vmem:[%s190 + $0x2f8] sm:$0xff]
        %v319 = vld [vmem:[%s190 + $0x300] sm:$0xff]
        %v320 = vld [vmem:[%s190 + $0x308] sm:$0xff]
        %v321 = vld [vmem:[%s190 + $0x310] sm:$0xff]
        %v322 = vld [vmem:[%s190 + $0x318] sm:$0xff]
        %v323 = vld [vmem:[%s190 + $0x320] sm:$0xff]
        %v324 = vld [vmem:[%s190 + $0x328] sm:$0xff]
        %v325 = vld [vmem:[%s190 + $0x330] sm:$0xff]
        %v326 = vld [vmem:[%s190 + $0x338] sm:$0xff]
        %v327 = vld [vmem:[%s190 + $0x340] sm:$0xff]
        %v328 = vld [vmem:[%s190 + $0x348] sm:$0xff]
        %v329 = vld [vmem:[%s190 + $0x350] sm:$0xff]
        %v330 = vld [vmem:[%s190 + $0x358] sm:$0xff]
        %v331 = vld [vmem:[%s190 + $0x360] sm:$0xff]
        %v332 = vld [vmem:[%s190 + $0x368] sm:$0xff]
        %v333 = vld [vmem:[%s190 + $0x370] sm:$0xff]
        %v334 = vld [vmem:[%s190 + $0x378] sm:$0xff]
        %v335 = vld [vmem:[%s190 + $0x380] sm:$0xff]
        %v336 = vld [vmem:[%s190 + $0x388] sm:$0xff]
        %v337 = vld [vmem:[%s190 + $0x390] sm:$0xff]
        %v338 = vld [vmem:[%s190 + $0x398] sm:$0xff]
        %v339 = vld [vmem:[%s190 + $0x3a0] sm:$0xff]
        %v340 = vld [vmem:[%s190 + $0x3a8] sm:$0xff]
        %v341 = vld [vmem:[%s190 + $0x3b0] sm:$0xff]
        %v342 = vld [vmem:[%s190 + $0x3b8] sm:$0xff]
        %v343 = vld [vmem:[%s190 + $0x3c0] sm:$0xff]
        %v344 = vld [vmem:[%s190 + $0x3c8] sm:$0xff]
        %v345 = vld [vmem:[%s190 + $0x3d0] sm:$0xff]
        %v346 = vld [vmem:[%s190 + $0x3d8] sm:$0xff]
        %v347 = vld [vmem:[%s190 + $0x3e0] sm:$0xff]
        %v348 = vld [vmem:[%s190 + $0x3e8] sm:$0xff]
        %v349 = vld [vmem:[%s190 + $0x3f0] sm:$0xff]
        %v350 = vld [vmem:[%s190 + $0x3f8] sm:$0xff]
        %v351 = vld [vmem:[%s190 + $0x400] sm:$0xff]
        %v352 = vld [vmem:[%s190 + $0x408] sm:$0xff]
        %v353 = vld [vmem:[%s190 + $0x410] sm:$0xff]
        %v354 = vld [vmem:[%s190 + $0x418] sm:$0xff]
        %v355 = vld [vmem:[%s190 + $0x420] sm:$0xff]
        %v356 = vld [vmem:[%s190 + $0x428] sm:$0xff]
        %v357 = vld [vmem:[%s190 + $0x430] sm:$0xff]
        %v358 = vld [vmem:[%s190 + $0x438] sm:$0xff]
        %v359 = vld [vmem:[%s190 + $0x440] sm:$0xff]
        %v360 = vld [vmem:[%s190 + $0x448] sm:$0xff]
        %v361 = vld [vmem:[%s190 + $0x450] sm:$0xff]
        %v362 = vld [vmem:[%s190 + $0x458] sm:$0xff]
        %v363 = vld [vmem:[%s190 + $0x460] sm:$0xff]
        %v364 = vld [vmem:[%s190 + $0x468] sm:$0xff]
        %v365 = vld [vmem:[%s190 + $0x470] sm:$0xff]
        %v366 = vld [vmem:[%s190 + $0x478] sm:$0xff]
        %v367 = vld [vmem:[%s190 + $0x480] sm:$0xff]
        %v368 = vld [vmem:[%s190 + $0x488] sm:$0xff]
        %v369 = vld [vmem:[%s190 + $0x490] sm:$0xff]
        %v370 = vld [vmem:[%s190 + $0x498] sm:$0xff]
        %v371 = vld [vmem:[%s190 + $0x4a0] sm:$0xff]
        %v372 = vld [vmem:[%s190 + $0x4a8] sm:$0xff]
        %v373 = vld [vmem:[%s190 + $0x4b0] sm:$0xff]
        %v374 = vld [vmem:[%s190 + $0x4b8] sm:$0xff]
        %v375 = vld [vmem:[%s190 + $0x4c0] sm:$0xff]
        %v376 = vld [vmem:[%s190 + $0x4c8] sm:$0xff]
        %v377 = vld [vmem:[%s190 + $0x4d0] sm:$0xff]
        %v378 = vld [vmem:[%s190 + $0x4d8] sm:$0xff]
        %v379 = vld [vmem:[%s190 + $0x4e0] sm:$0xff]
        %v380 = vld [vmem:[%s190 + $0x4e8] sm:$0xff]
        %v381 = vld [vmem:[%s190 + $0x4f0] sm:$0xff]
        %v382 = vld [vmem:[%s190 + $0x4f8] sm:$0xff]
        %v383 = vld [vmem:[%s190 + $0x500] sm:$0xff]
        %v384 = vld [vmem:[%s190 + $0x508] sm:$0xff]
        %v385 = vld [vmem:[%s190 + $0x510] sm:$0xff]
        %v386 = vld [vmem:[%s190 + $0x518] sm:$0xff]
        %v387 = vld [vmem:[%s190 + $0x520] sm:$0xff]
        %v388 = vld [vmem:[%s190 + $0x528] sm:$0xff]
        %v389 = vld [vmem:[%s190 + $0x530] sm:$0xff]
        %v390 = vld [vmem:[%s190 + $0x538] sm:$0xff]
        %v391 = vld [vmem:[%s190 + $0x540] sm:$0xff]
        %v392 = vld [vmem:[%s190 + $0x548] sm:$0xff]
        %v393 = vld [vmem:[%s190 + $0x550] sm:$0xff]
        %v394 = vld [vmem:[%s190 + $0x558] sm:$0xff]
        %v395 = vld [vmem:[%s190 + $0x560] sm:$0xff]
        %v396 = vld [vmem:[%s190 + $0x568] sm:$0xff]
        %v397 = vld [vmem:[%s190 + $0x570] sm:$0xff]
        %v398 = vld [vmem:[%s190 + $0x578] sm:$0xff]
        %v399 = vld [vmem:[%s190 + $0x580] sm:$0xff]
        %v400 = vld [vmem:[%s190 + $0x588] sm:$0xff]
        %v401 = vld [vmem:[%s190 + $0x590] sm:$0xff]
        %v402 = vld [vmem:[%s190 + $0x598] sm:$0xff]
        %v403 = vld [vmem:[%s190 + $0x5a0] sm:$0xff]
        %v404 = vld [vmem:[%s190 + $0x5a8] sm:$0xff]
        %v405 = vld [vmem:[%s190 + $0x5b0] sm:$0xff]
        %v406 = vld [vmem:[%s190 + $0x5b8] sm:$0xff]
        %v407 = vld [vmem:[%s190 + $0x5c0] sm:$0xff]
        %v408 = vld [vmem:[%s190 + $0x5c8] sm:$0xff]
        %v409 = vld [vmem:[%s190 + $0x5d0] sm:$0xff]
        %v410 = vld [vmem:[%s190 + $0x5d8] sm:$0xff]
        %v411 = vld [vmem:[%s190 + $0x5e0] sm:$0xff]
        %v412 = vld [vmem:[%s190 + $0x5e8] sm:$0xff]
        %v413 = vld [vmem:[%s190 + $0x5f0] sm:$0xff]
        %v414 = vld [vmem:[%s190 + $0x5f8] sm:$0xff]
        %v415 = vld [vmem:[%s190 + $0x600] sm:$0xff]
        %v416 = vld [vmem:[%s190 + $0x608] sm:$0xff]
        %v417 = vld [vmem:[%s190 + $0x610] sm:$0xff]
        %v418 = vld [vmem:[%s190 + $0x618] sm:$0xff]
        %v419 = vld [vmem:[%s190 + $0x620] sm:$0xff]
        %v420 = vld [vmem:[%s190 + $0x628] sm:$0xff]
        %v421 = vld [vmem:[%s190 + $0x630] sm:$0xff]
        %v422 = vld [vmem:[%s190 + $0x638] sm:$0xff]
        %v423 = vld [vmem:[%s190 + $0x640] sm:$0xff]
        %v424 = vld [vmem:[%s190 + $0x648] sm:$0xff]
        %v425 = vld [vmem:[%s190 + $0x650] sm:$0xff]
        %v426 = vld [vmem:[%s190 + $0x658] sm:$0xff]
        %v427 = vld [vmem:[%s190 + $0x660] sm:$0xff]
        %v428 = vld [vmem:[%s190 + $0x668] sm:$0xff]
        %v429 = vld [vmem:[%s190 + $0x670] sm:$0xff]
        %v430 = vld [vmem:[%s190 + $0x678] sm:$0xff]
        %v431 = vld [vmem:[%s190 + $0x680] sm:$0xff]
        %v432 = vld [vmem:[%s190 + $0x688] sm:$0xff]
        %v433 = vld [vmem:[%s190 + $0x690] sm:$0xff]
        %v434 = vld [vmem:[%s190 + $0x698] sm:$0xff]
        %v435 = vld [vmem:[%s190 + $0x6a0] sm:$0xff]
        %v436 = vld [vmem:[%s190 + $0x6a8] sm:$0xff]
        %v437 = vld [vmem:[%s190 + $0x6b0] sm:$0xff]
        %v438 = vld [vmem:[%s190 + $0x6b8] sm:$0xff]
        %v439 = vld [vmem:[%s190 + $0x6c0] sm:$0xff]
        %v440 = vld [vmem:[%s190 + $0x6c8] sm:$0xff]
        %v441 = vld [vmem:[%s190 + $0x6d0] sm:$0xff]
        %v442 = vld [vmem:[%s190 + $0x6d8] sm:$0xff]
        %v443 = vld [vmem:[%s190 + $0x6e0] sm:$0xff]
        %v444 = vld [vmem:[%s190 + $0x6e8] sm:$0xff]
        %v445 = vld [vmem:[%s190 + $0x6f0] sm:$0xff]
        %v446 = vld [vmem:[%s190 + $0x6f8] sm:$0xff]
        %v447 = vld [vmem:[%s190 + $0x700] sm:$0xff]
        %v448 = vld [vmem:[%s190 + $0x708] sm:$0xff]
        %v449 = vld [vmem:[%s190 + $0x710] sm:$0xff]
        %v450 = vld [vmem:[%s190 + $0x718] sm:$0xff]
        %v451 = vld [vmem:[%s190 + $0x720] sm:$0xff]
        %v452 = vld [vmem:[%s190 + $0x728] sm:$0xff]
        %v453 = vld [vmem:[%s190 + $0x730] sm:$0xff]
        %v454 = vld [vmem:[%s190 + $0x738] sm:$0xff]
        %v455 = vld [vmem:[%s190 + $0x740] sm:$0xff]
        %v456 = vld [vmem:[%s190 + $0x748] sm:$0xff]
        %v457 = vld [vmem:[%s190 + $0x750] sm:$0xff]
        %v458 = vld [vmem:[%s190 + $0x758] sm:$0xff]
        %v459 = vld [vmem:[%s190 + $0x760] sm:$0xff]
        %v460 = vld [vmem:[%s190 + $0x768] sm:$0xff]
        %v461 = vld [vmem:[%s190 + $0x770] sm:$0xff]
        %v462 = vld [vmem:[%s190 + $0x778] sm:$0xff]
        %v463 = vld [vmem:[%s190 + $0x780] sm:$0xff]
        %v464 = vld [vmem:[%s190 + $0x788] sm:$0xff]
        %v465 = vld [vmem:[%s190 + $0x790] sm:$0xff]
        %v466 = vld [vmem:[%s190 + $0x798] sm:$0xff]
        %v467 = vld [vmem:[%s190 + $0x7a0] sm:$0xff]
        %v468 = vld [vmem:[%s190 + $0x7a8] sm:$0xff]
        %v469 = vld [vmem:[%s190 + $0x7b0] sm:$0xff]
        %v470 = vld [vmem:[%s190 + $0x7b8] sm:$0xff]
        %v471 = vld [vmem:[%s190 + $0x7c0] sm:$0xff]
        %v472 = vld [vmem:[%s190 + $0x7c8] sm:$0xff]
        %v473 = vld [vmem:[%s190 + $0x7d0] sm:$0xff]
        %v474 = vld [vmem:[%s190 + $0x7d8] sm:$0xff]
        %v475 = vld [vmem:[%s190 + $0x7e0] sm:$0xff]
        %v476 = vld [vmem:[%s190 + $0x7e8] sm:$0xff]
        %v477 = vld [vmem:[%s190 + $0x7f0] sm:$0xff]
        %v478 = vld [vmem:[%s190 + $0x7f8] sm:$0xff]
        %v479 = vld [vmem:[%s190 + $0x800] sm:$0xff]
        %v480 = vld [vmem:[%s190 + $0x808] sm:$0xff]
        %v481 = vld [vmem:[%s190 + $0x810] sm:$0xff]
        %v482 = vld [vmem:[%s190 + $0x818] sm:$0xff]
        %v483 = vld [vmem:[%s190 + $0x820] sm:$0xff]
        %v484 = vld [vmem:[%s190 + $0x828] sm:$0xff]
        %v485 = vld [vmem:[%s190 + $0x830] sm:$0xff]
        %v486 = vld [vmem:[%s190 + $0x838] sm:$0xff]
        %v487 = vld [vmem:[%s190 + $0x840] sm:$0xff]
        %v488 = vld [vmem:[%s190 + $0x848] sm:$0xff]
        %v489 = vld [vmem:[%s190 + $0x850] sm:$0xff]
        %v490 = vld [vmem:[%s190 + $0x858] sm:$0xff]
        %v491 = vld [vmem:[%s190 + $0x860] sm:$0xff]
        %v492 = vld [vmem:[%s190 + $0x868] sm:$0xff]
        %v493 = vld [vmem:[%s190 + $0x870] sm:$0xff]
        %v494 = vld [vmem:[%s190 + $0x878] sm:$0xff]
        %v495 = vld [vmem:[%s190 + $0x880] sm:$0xff]
        %v496 = vld [vmem:[%s190 + $0x888] sm:$0xff]
        %v497 = vld [vmem:[%s190 + $0x890] sm:$0xff]
        %v498 = vld [vmem:[%s190 + $0x898] sm:$0xff]
        %v499 = vld [vmem:[%s190 + $0x8a0] sm:$0xff]
        %v500 = vld [vmem:[%s190 + $0x8a8] sm:$0xff]
        %v501 = vld [vmem:[%s190 + $0x8b0] sm:$0xff]
        %v502 = vld [vmem:[%s190 + $0x8b8] sm:$0xff]
        %v503 = vld [vmem:[%s190 + $0x8c0] sm:$0xff]
        %v504 = vld [vmem:[%s190 + $0x8c8] sm:$0xff]
        %v505 = vld [vmem:[%s190 + $0x8d0] sm:$0xff]
        %v506 = vld [vmem:[%s190 + $0x8d8] sm:$0xff]
        %v507 = vld [vmem:[%s190 + $0x8e0] sm:$0xff]
        %v508 = vld [vmem:[%s190 + $0x8e8] sm:$0xff]
        %v509 = vld [vmem:[%s190 + $0x8f0] sm:$0xff]
        %v510 = vld [vmem:[%s190 + $0x8f8] sm:$0xff]
        %v511 = vld [vmem:[%s190 + $0x900] sm:$0xff]
        %v512 = vld [vmem:[%s190 + $0x908] sm:$0xff]
        %v513 = vld [vmem:[%s190 + $0x910] sm:$0xff]
        %v514 = vld [vmem:[%s190 + $0x918] sm:$0xff]
        %v515 = vld [vmem:[%s190 + $0x920] sm:$0xff]
        %v516 = vld [vmem:[%s190 + $0x928] sm:$0xff]
        %v517 = vld [vmem:[%s190 + $0x930] sm:$0xff]
        %v518 = vld [vmem:[%s190 + $0x938] sm:$0xff]
        %v519 = vld [vmem:[%s190 + $0x940] sm:$0xff]
        %v520 = vld [vmem:[%s190 + $0x948] sm:$0xff]
        %v521 = vld [vmem:[%s190 + $0x950] sm:$0xff]
        %v522 = vld [vmem:[%s190 + $0x958] sm:$0xff]
        %v523 = vld [vmem:[%s190 + $0x960] sm:$0xff]
        %v524 = vld [vmem:[%s190 + $0x968] sm:$0xff]
        %v525 = vld [vmem:[%s190 + $0x970] sm:$0xff]
        %v526 = vld [vmem:[%s190 + $0x978] sm:$0xff]
        %v527 = vld [vmem:[%s190 + $0x980] sm:$0xff]
        %v528 = vld [vmem:[%s190 + $0x988] sm:$0xff]
        %v529 = vld [vmem:[%s190 + $0x990] sm:$0xff]
        %v530 = vld [vmem:[%s190 + $0x998] sm:$0xff]
        %v531 = vld [vmem:[%s190 + $0x9a0] sm:$0xff]
        %v532 = vld [vmem:[%s190 + $0x9a8] sm:$0xff]
        %v533 = vld [vmem:[%s190 + $0x9b0] sm:$0xff]
        %v534 = vld [vmem:[%s190 + $0x9b8] sm:$0xff]
        %v535 = vld [vmem:[%s190 + $0x9c0] sm:$0xff]
        %v536 = vld [vmem:[%s190 + $0x9c8] sm:$0xff]
        %v537 = vld [vmem:[%s190 + $0x9d0] sm:$0xff]
        %v538 = vld [vmem:[%s190 + $0x9d8] sm:$0xff]
        %v539 = vld [vmem:[%s190 + $0x9e0] sm:$0xff]
        %v540 = vld [vmem:[%s190 + $0x9e8] sm:$0xff]
        %v541 = vld [vmem:[%s190 + $0x9f0] sm:$0xff]
        %v542 = vld [vmem:[%s190 + $0x9f8] sm:$0xff]
        %v543 = vld [vmem:[%s190 + $0xa00] sm:$0xff]
        %v544 = vld [vmem:[%s190 + $0xa08] sm:$0xff]
        %v545 = vld [vmem:[%s190 + $0xa10] sm:$0xff]
        %v546 = vld [vmem:[%s190 + $0xa18] sm:$0xff]
        %v547 = vld [vmem:[%s190 + $0xa20] sm:$0xff]
        %v548 = vld [vmem:[%s190 + $0xa28] sm:$0xff]
        %v549 = vld [vmem:[%s190 + $0xa30] sm:$0xff]
        %v550 = vld [vmem:[%s190 + $0xa38] sm:$0xff]
        %v551 = vld [vmem:[%s190 + $0xa40] sm:$0xff]
        %v552 = vld [vmem:[%s190 + $0xa48] sm:$0xff]
        %v553 = vld [vmem:[%s190 + $0xa50] sm:$0xff]
        %v554 = vld [vmem:[%s190 + $0xa58] sm:$0xff]
        %v555 = vld [vmem:[%s190 + $0xa60] sm:$0xff]
        %v556 = vld [vmem:[%s190 + $0xa68] sm:$0xff]
        %v557 = vld [vmem:[%s190 + $0xa70] sm:$0xff]
        %v558 = vld [vmem:[%s190 + $0xa78] sm:$0xff]
        %v559 = vld [vmem:[%s190 + $0xa80] sm:$0xff]
        %v560 = vld [vmem:[%s190 + $0xa88] sm:$0xff]
        %v561 = vld [vmem:[%s190 + $0xa90] sm:$0xff]
        %v562 = vld [vmem:[%s190 + $0xa98] sm:$0xff]
        %v563 = vld [vmem:[%s190 + $0xaa0] sm:$0xff]
        %v564 = vld [vmem:[%s190 + $0xaa8] sm:$0xff]
        %v565 = vld [vmem:[%s190 + $0xab0] sm:$0xff]
        %v566 = vld [vmem:[%s190 + $0xab8] sm:$0xff]
        %v567 = vld [vmem:[%s190 + $0xac0] sm:$0xff]
        %v568 = vld [vmem:[%s190 + $0xac8] sm:$0xff]
        %v569 = vld [vmem:[%s190 + $0xad0] sm:$0xff]
        %v570 = vld [vmem:[%s190 + $0xad8] sm:$0xff]
        %v571 = vld [vmem:[%s190 + $0xae0] sm:$0xff]
        %v572 = vld [vmem:[%s190 + $0xae8] sm:$0xff]
        %v573 = vld [vmem:[%s190 + $0xaf0] sm:$0xff]
        %v574 = vld [vmem:[%s190 + $0xaf8] sm:$0xff]
        %v575 = vld [vmem:[%s190 + $0xb00] sm:$0xff]
        %v576 = vld [vmem:[%s190 + $0xb08] sm:$0xff]
        %v577 = vld [vmem:[%s190 + $0xb10] sm:$0xff]
        %v578 = vld [vmem:[%s190 + $0xb18] sm:$0xff]
        %v579 = vld [vmem:[%s190 + $0xb20] sm:$0xff]
        %v580 = vld [vmem:[%s190 + $0xb28] sm:$0xff]
        %v581 = vld [vmem:[%s190 + $0xb30] sm:$0xff]
        %v582 = vld [vmem:[%s190 + $0xb38] sm:$0xff]
        %v583 = vld [vmem:[%s190 + $0xb40] sm:$0xff]
        %v584 = vld [vmem:[%s190 + $0xb48] sm:$0xff]
        %v585 = vld [vmem:[%s190 + $0xb50] sm:$0xff]
        %v586 = vld [vmem:[%s190 + $0xb58] sm:$0xff]
        %v587 = vld [vmem:[%s190 + $0xb60] sm:$0xff]
        %v588 = vld [vmem:[%s190 + $0xb68] sm:$0xff]
        %v589 = vld [vmem:[%s190 + $0xb70] sm:$0xff]
        %v590 = vld [vmem:[%s190 + $0xb78] sm:$0xff]
        %v591 = vld [vmem:[%s190 + $0xb80] sm:$0xff]
        %v592 = vld [vmem:[%s190 + $0xb88] sm:$0xff]
        %v593 = vld [vmem:[%s190 + $0xb90] sm:$0xff]
        %v594 = vld [vmem:[%s190 + $0xb98] sm:$0xff]
        %v595 = vld [vmem:[%s190 + $0xba0] sm:$0xff]
        %v596 = vld [vmem:[%s190 + $0xba8] sm:$0xff]
        %v597 = vld [vmem:[%s190 + $0xbb0] sm:$0xff]
        %v598 = vld [vmem:[%s190 + $0xbb8] sm:$0xff]
        %v599 = vld [vmem:[%s190 + $0xbc0] sm:$0xff]
        %v600 = vld [vmem:[%s190 + $0xbc8] sm:$0xff]
        %v601 = vld [vmem:[%s190 + $0xbd0] sm:$0xff]
        %v602 = vld [vmem:[%s190 + $0xbd8] sm:$0xff]
        %v603 = vld [vmem:[%s190 + $0xbe0] sm:$0xff]
        %v604 = vld [vmem:[%s190 + $0xbe8] sm:$0xff]
        %v605 = vld [vmem:[%s190 + $0xbf0] sm:$0xff]
        %v606 = vld [vmem:[%s190 + $0xbf8] sm:$0xff]
        %v607 = vld [vmem:[%s190 + $0xc00] sm:$0xff]
        %v608 = vld [vmem:[%s190 + $0xc08] sm:$0xff]
        %v609 = vld [vmem:[%s190 + $0xc10] sm:$0xff]
        %v610 = vld [vmem:[%s190 + $0xc18] sm:$0xff]
        %v611 = vld [vmem:[%s190 + $0xc20] sm:$0xff]
        %v612 = vld [vmem:[%s190 + $0xc28] sm:$0xff]
        %v613 = vld [vmem:[%s190 + $0xc30] sm:$0xff]
        %v614 = vld [vmem:[%s190 + $0xc38] sm:$0xff]
        %v615 = vld [vmem:[%s190 + $0xc40] sm:$0xff]
        %v616 = vld [vmem:[%s190 + $0xc48] sm:$0xff]
        %v617 = vld [vmem:[%s190 + $0xc50] sm:$0xff]
        %v618 = vld [vmem:[%s190 + $0xc58] sm:$0xff]
        %v619 = vld [vmem:[%s190 + $0xc60] sm:$0xff]
        %v620 = vld [vmem:[%s190 + $0xc68] sm:$0xff]
        %v621 = vld [vmem:[%s190 + $0xc70] sm:$0xff]
        %v622 = vld [vmem:[%s190 + $0xc78] sm:$0xff]
        %v623 = vld [vmem:[%s190 + $0xc80] sm:$0xff]
        %v624 = vld [vmem:[%s190 + $0xc88] sm:$0xff]
        %v625 = vld [vmem:[%s190 + $0xc90] sm:$0xff]
        %v626 = vld [vmem:[%s190 + $0xc98] sm:$0xff]
        %v627 = vld [vmem:[%s190 + $0xca0] sm:$0xff]
        %v628 = vld [vmem:[%s190 + $0xca8] sm:$0xff]
        %v629 = vld [vmem:[%s190 + $0xcb0] sm:$0xff]
        %v630 = vld [vmem:[%s190 + $0xcb8] sm:$0xff]
        %v631 = vld [vmem:[%s190 + $0xcc0] sm:$0xff]
        %v632 = vld [vmem:[%s190 + $0xcc8] sm:$0xff]
        %v633 = vld [vmem:[%s190 + $0xcd0] sm:$0xff]
        %v634 = vld [vmem:[%s190 + $0xcd8] sm:$0xff]
        %v635 = vld [vmem:[%s190 + $0xce0] sm:$0xff]
        %v636 = vld [vmem:[%s190 + $0xce8] sm:$0xff]
        %v637 = vld [vmem:[%s190 + $0xcf0] sm:$0xff]
        %v638 = vld [vmem:[%s190 + $0xcf8] sm:$0xff]
        %v639 = vld [vmem:[%s190 + $0xd00] sm:$0xff]
        %v640 = vld [vmem:[%s190 + $0xd08] sm:$0xff]
        %v641 = vld [vmem:[%s190 + $0xd10] sm:$0xff]
        %v642 = vld [vmem:[%s190 + $0xd18] sm:$0xff]
        %v643 = vld [vmem:[%s190 + $0xd20] sm:$0xff]
        %v644 = vld [vmem:[%s190 + $0xd28] sm:$0xff]
        %v645 = vld [vmem:[%s190 + $0xd30] sm:$0xff]
        %v646 = vld [vmem:[%s190 + $0xd38] sm:$0xff]
        %v647 = vld [vmem:[%s190 + $0xd40] sm:$0xff]
        %v648 = vld [vmem:[%s190 + $0xd48] sm:$0xff]
        %v649 = vld [vmem:[%s190 + $0xd50] sm:$0xff]
        %v650 = vld [vmem:[%s190 + $0xd58] sm:$0xff]
        %v651 = vld [vmem:[%s190 + $0xd60] sm:$0xff]
        %v652 = vld [vmem:[%s190 + $0xd68] sm:$0xff]
        %v653 = vld [vmem:[%s190 + $0xd70] sm:$0xff]
        %v654 = vld [vmem:[%s190 + $0xd78] sm:$0xff]
        %v655 = vld [vmem:[%s190 + $0xd80] sm:$0xff]
        %v656 = vld [vmem:[%s190 + $0xd88] sm:$0xff]
        %v657 = vld [vmem:[%s190 + $0xd90] sm:$0xff]
        %v658 = vld [vmem:[%s190 + $0xd98] sm:$0xff]
        %v659 = vld [vmem:[%s190 + $0xda0] sm:$0xff]
        %v660 = vld [vmem:[%s190 + $0xda8] sm:$0xff]
        %v661 = vld [vmem:[%s190 + $0xdb0] sm:$0xff]
        %v662 = vld [vmem:[%s190 + $0xdb8] sm:$0xff]
        %v663 = vld [vmem:[%s190 + $0xdc0] sm:$0xff]
        %v664 = vld [vmem:[%s190 + $0xdc8] sm:$0xff]
        %v665 = vld [vmem:[%s190 + $0xdd0] sm:$0xff]
        %v666 = vld [vmem:[%s190 + $0xdd8] sm:$0xff]
        %v667 = vld [vmem:[%s190 + $0xde0] sm:$0xff]
        %v668 = vld [vmem:[%s190 + $0xde8] sm:$0xff]
        %v669 = vld [vmem:[%s190 + $0xdf0] sm:$0xff]
        %v670 = vld [vmem:[%s190 + $0xdf8] sm:$0xff]
        %v671 = vld [vmem:[%s190 + $0xe00] sm:$0xff]
        %v672 = vld [vmem:[%s190 + $0xe08] sm:$0xff]
        %v673 = vld [vmem:[%s190 + $0xe10] sm:$0xff]
        %v674 = vld [vmem:[%s190 + $0xe18] sm:$0xff]
        %v675 = vld [vmem:[%s190 + $0xe20] sm:$0xff]
        %v676 = vld [vmem:[%s190 + $0xe28] sm:$0xff]
        %v677 = vld [vmem:[%s190 + $0xe30] sm:$0xff]
        %v678 = vld [vmem:[%s190 + $0xe38] sm:$0xff]
        %v679 = vld [vmem:[%s190 + $0xe40] sm:$0xff]
        %v680 = vld [vmem:[%s190 + $0xe48] sm:$0xff]
        %v681 = vld [vmem:[%s190 + $0xe50] sm:$0xff]
        %v682 = vld [vmem:[%s190 + $0xe58] sm:$0xff]
        %v683 = vld [vmem:[%s190 + $0xe60] sm:$0xff]
        %v684 = vld [vmem:[%s190 + $0xe68] sm:$0xff]
        %v685 = vld [vmem:[%s190 + $0xe70] sm:$0xff]
        %v686 = vld [vmem:[%s190 + $0xe78] sm:$0xff]
        %v687 = vld [vmem:[%s190 + $0xe80] sm:$0xff]
        %v688 = vld [vmem:[%s190 + $0xe88] sm:$0xff]
        %v689 = vld [vmem:[%s190 + $0xe90] sm:$0xff]
        %v690 = vld [vmem:[%s190 + $0xe98] sm:$0xff]
        %v691 = vld [vmem:[%s190 + $0xea0] sm:$0xff]
        %v692 = vld [vmem:[%s190 + $0xea8] sm:$0xff]
        %v693 = vld [vmem:[%s190 + $0xeb0] sm:$0xff]
        %v694 = vld [vmem:[%s190 + $0xeb8] sm:$0xff]
        %v695 = vld [vmem:[%s190 + $0xec0] sm:$0xff]
        %v696 = vld [vmem:[%s190 + $0xec8] sm:$0xff]
        %v697 = vld [vmem:[%s190 + $0xed0] sm:$0xff]
        %v698 = vld [vmem:[%s190 + $0xed8] sm:$0xff]
        %v699 = vld [vmem:[%s190 + $0xee0] sm:$0xff]
        %v700 = vld [vmem:[%s190 + $0xee8] sm:$0xff]
        %v701 = vld [vmem:[%s190 + $0xef0] sm:$0xff]
        %v702 = vld [vmem:[%s190 + $0xef8] sm:$0xff]
        %v703 = vld [vmem:[%s190 + $0xf00] sm:$0xff]
        %v704 = vld [vmem:[%s190 + $0xf08] sm:$0xff]
        %v705 = vld [vmem:[%s190 + $0xf10] sm:$0xff]
        %v706 = vld [vmem:[%s190 + $0xf18] sm:$0xff]
        %v707 = vld [vmem:[%s190 + $0xf20] sm:$0xff]
        %v708 = vld [vmem:[%s190 + $0xf28] sm:$0xff]
        %v709 = vld [vmem:[%s190 + $0xf30] sm:$0xff]
        %v710 = vld [vmem:[%s190 + $0xf38] sm:$0xff]
        %v711 = vld [vmem:[%s190 + $0xf40] sm:$0xff]
        %v712 = vld [vmem:[%s190 + $0xf48] sm:$0xff]
        %v713 = vld [vmem:[%s190 + $0xf50] sm:$0xff]
        %v714 = vld [vmem:[%s190 + $0xf58] sm:$0xff]
        %v715 = vld [vmem:[%s190 + $0xf60] sm:$0xff]
        %v716 = vld [vmem:[%s190 + $0xf68] sm:$0xff]
        %v717 = vld [vmem:[%s190 + $0xf70] sm:$0xff]
        %v718 = vld [vmem:[%s190 + $0xf78] sm:$0xff]
        %v719 = vld [vmem:[%s190 + $0xf80] sm:$0xff]
        %v720 = vld [vmem:[%s190 + $0xf88] sm:$0xff]
        %v721 = vld [vmem:[%s190 + $0xf90] sm:$0xff]
        %v722 = vld [vmem:[%s190 + $0xf98] sm:$0xff]
        %v723 = vld [vmem:[%s190 + $0xfa0] sm:$0xff]
        %v724 = vld [vmem:[%s190 + $0xfa8] sm:$0xff]
        %v725 = vld [vmem:[%s190 + $0xfb0] sm:$0xff]
        %v726 = vld [vmem:[%s190 + $0xfb8] sm:$0xff]
        %v727 = vld [vmem:[%s190 + $0xfc0] sm:$0xff]
        %v728 = vld [vmem:[%s190 + $0xfc8] sm:$0xff]
        %v729 = vld [vmem:[%s190 + $0xfd0] sm:$0xff]
        %v730 = vld [vmem:[%s190 + $0xfd8] sm:$0xff]
        %v731 = vld [vmem:[%s190 + $0xfe0] sm:$0xff]
        %v732 = vld [vmem:[%s190 + $0xfe8] sm:$0xff]
        %v733 = vld [vmem:[%s190 + $0xff0] sm:$0xff]
        %v734 = vld [vmem:[%s190 + $0xff8] sm:$0xff]
        %v735 = vld [vmem:[%s190 + $0x1000] sm:$0xff]
        %v736 = vld [vmem:[%s190 + $0x1008] sm:$0xff]
        %v737 = vld [vmem:[%s190 + $0x1010] sm:$0xff]
        %v738 = vld [vmem:[%s190 + $0x1018] sm:$0xff]
        %v739 = vld [vmem:[%s190 + $0x1020] sm:$0xff]
        %v740 = vld [vmem:[%s190 + $0x1028] sm:$0xff]
        %v741 = vld [vmem:[%s190 + $0x1030] sm:$0xff]
        %v742 = vld [vmem:[%s190 + $0x1038] sm:$0xff]
        %v743 = vld [vmem:[%s190 + $0x1040] sm:$0xff]
        %v744 = vld [vmem:[%s190 + $0x1048] sm:$0xff]
        %v745 = vld [vmem:[%s190 + $0x1050] sm:$0xff]
        %v746 = vld [vmem:[%s190 + $0x1058] sm:$0xff]
        %v747 = vld [vmem:[%s190 + $0x1060] sm:$0xff]
        %v748 = vld [vmem:[%s190 + $0x1068] sm:$0xff]
        %v749 = vld [vmem:[%s190 + $0x1070] sm:$0xff]
        %v750 = vld [vmem:[%s190 + $0x1078] sm:$0xff]
        %v751 = vld [vmem:[%s190 + $0x1080] sm:$0xff]
        %v752 = vld [vmem:[%s190 + $0x1088] sm:$0xff]
        %v753 = vld [vmem:[%s190 + $0x1090] sm:$0xff]
        %v754 = vld [vmem:[%s190 + $0x1098] sm:$0xff]
        %v755 = vld [vmem:[%s190 + $0x10a0] sm:$0xff]
        %v756 = vld [vmem:[%s190 + $0x10a8] sm:$0xff]
        %v757 = vld [vmem:[%s190 + $0x10b0] sm:$0xff]
        %v758 = vld [vmem:[%s190 + $0x10b8] sm:$0xff]
        %v759 = vld [vmem:[%s190 + $0x10c0] sm:$0xff]
        %v760 = vld [vmem:[%s190 + $0x10c8] sm:$0xff]
        %v761 = vld [vmem:[%s190 + $0x10d0] sm:$0xff]
        %v762 = vld [vmem:[%s190 + $0x10d8] sm:$0xff]
        %v763 = vld [vmem:[%s190 + $0x10e0] sm:$0xff]
        %v764 = vld [vmem:[%s190 + $0x10e8] sm:$0xff]
        %v765 = vld [vmem:[%s190 + $0x10f0] sm:$0xff]
        %v766 = vld [vmem:[%s190 + $0x10f8] sm:$0xff]
        %v767 = vld [vmem:[%s190 + $0x1100] sm:$0xff]
        %v768 = vld [vmem:[%s190 + $0x1108] sm:$0xff]
        %v769 = vld [vmem:[%s190 + $0x1110] sm:$0xff]
        %v770 = vld [vmem:[%s190 + $0x1118] sm:$0xff]
        %v771 = vld [vmem:[%s190 + $0x1120] sm:$0xff]
        %v772 = vld [vmem:[%s190 + $0x1128] sm:$0xff]
        %v773 = vld [vmem:[%s190 + $0x1130] sm:$0xff]
        %v774 = vld [vmem:[%s190 + $0x1138] sm:$0xff]
        %v775 = vld [vmem:[%s190 + $0x1140] sm:$0xff]
        %v776 = vld [vmem:[%s190 + $0x1148] sm:$0xff]
        %v777 = vld [vmem:[%s190 + $0x1150] sm:$0xff]
        %v778 = vld [vmem:[%s190 + $0x1158] sm:$0xff]
        %v779 = vld [vmem:[%s190 + $0x1160] sm:$0xff]
        %v780 = vld [vmem:[%s190 + $0x1168] sm:$0xff]
        %v781 = vld [vmem:[%s190 + $0x1170] sm:$0xff]
        %v782 = vld [vmem:[%s190 + $0x1178] sm:$0xff]
        %v783 = vld [vmem:[%s190 + $0x1180] sm:$0xff]
        %v784 = vld [vmem:[%s190 + $0x1188] sm:$0xff]
        %v785 = vld [vmem:[%s190 + $0x1190] sm:$0xff]
        %v786 = vld [vmem:[%s190 + $0x1198] sm:$0xff]
        %v787 = vld [vmem:[%s190 + $0x11a0] sm:$0xff]
        %v788 = vld [vmem:[%s190 + $0x11a8] sm:$0xff]
        %v789 = vld [vmem:[%s190 + $0x11b0] sm:$0xff]
        %v790 = vld [vmem:[%s190 + $0x11b8] sm:$0xff]
        %v791 = vld [vmem:[%s190 + $0x11c0] sm:$0xff]
        %v792 = vld [vmem:[%s190 + $0x11c8] sm:$0xff]
        %v793 = vld [vmem:[%s190 + $0x11d0] sm:$0xff]
        %v794 = vld [vmem:[%s190 + $0x11d8] sm:$0xff]
        %v795 = vld [vmem:[%s190 + $0x11e0] sm:$0xff]
        %v796 = vld [vmem:[%s190 + $0x11e8] sm:$0xff]
        %v797 = vld [vmem:[%s190 + $0x11f0] sm:$0xff]
        %v798 = vld [vmem:[%s190 + $0x11f8] sm:$0xff]
        %v799 = vld [vmem:[%s190 + $0x1200] sm:$0xff]
        %v800 = vld [vmem:[%s190 + $0x1208] sm:$0xff]
        %v801 = vld [vmem:[%s190 + $0x1210] sm:$0xff]
        %v802 = vld [vmem:[%s190 + $0x1218] sm:$0xff]
        %v803 = vld [vmem:[%s190 + $0x1220] sm:$0xff]
        %v804 = vld [vmem:[%s190 + $0x1228] sm:$0xff]
        %v805 = vld [vmem:[%s190 + $0x1230] sm:$0xff]
        %v806 = vld [vmem:[%s190 + $0x1238] sm:$0xff]
        %v807 = vld [vmem:[%s190 + $0x1240] sm:$0xff]
        %v808 = vld [vmem:[%s190 + $0x1248] sm:$0xff]
        %v809 = vld [vmem:[%s190 + $0x1250] sm:$0xff]
        %v810 = vld [vmem:[%s190 + $0x1258] sm:$0xff]
        %v811 = vld [vmem:[%s190 + $0x1260] sm:$0xff]
        %v812 = vld [vmem:[%s190 + $0x1268] sm:$0xff]
        %v813 = vld [vmem:[%s190 + $0x1270] sm:$0xff]
        %v814 = vld [vmem:[%s190 + $0x1278] sm:$0xff]
        %v815 = vld [vmem:[%s190 + $0x1280] sm:$0xff]
        %v816 = vld [vmem:[%s190 + $0x1288] sm:$0xff]
        %v817 = vld [vmem:[%s190 + $0x1290] sm:$0xff]
        %v818 = vld [vmem:[%s190 + $0x1298] sm:$0xff]
        %v819 = vld [vmem:[%s190 + $0x12a0] sm:$0xff]
        %v820 = vld [vmem:[%s190 + $0x12a8] sm:$0xff]
        %v821 = vld [vmem:[%s190 + $0x12b0] sm:$0xff]
        %v822 = vld [vmem:[%s190 + $0x12b8] sm:$0xff]
        %v823 = vld [vmem:[%s190 + $0x12c0] sm:$0xff]
        %v824 = vld [vmem:[%s190 + $0x12c8] sm:$0xff]
        %v825 = vld [vmem:[%s190 + $0x12d0] sm:$0xff]
        %v826 = vld [vmem:[%s190 + $0x12d8] sm:$0xff]
        %v827 = vld [vmem:[%s190 + $0x12e0] sm:$0xff]
        %v828 = vld [vmem:[%s190 + $0x12e8] sm:$0xff]
        %v829 = vld [vmem:[%s190 + $0x12f0] sm:$0xff]
        %v830 = vld [vmem:[%s190 + $0x12f8] sm:$0xff]
        %v831 = vld [vmem:[%s190 + $0x1300] sm:$0xff]
        %v832 = vld [vmem:[%s190 + $0x1308] sm:$0xff]
        %v833 = vld [vmem:[%s190 + $0x1310] sm:$0xff]
        %v834 = vld [vmem:[%s190 + $0x1318] sm:$0xff]
        %v835 = vld [vmem:[%s190 + $0x1320] sm:$0xff]
        %v836 = vld [vmem:[%s190 + $0x1328] sm:$0xff]
        %v837 = vld [vmem:[%s190 + $0x1330] sm:$0xff]
        %v838 = vld [vmem:[%s190 + $0x1338] sm:$0xff]
        %v839 = vld [vmem:[%s190 + $0x1340] sm:$0xff]
        %v840 = vld [vmem:[%s190 + $0x1348] sm:$0xff]
        %v841 = vld [vmem:[%s190 + $0x1350] sm:$0xff]
        %v842 = vld [vmem:[%s190 + $0x1358] sm:$0xff]
        %v843 = vld [vmem:[%s190 + $0x1360] sm:$0xff]
        %v844 = vld [vmem:[%s190 + $0x1368] sm:$0xff]
        %v845 = vld [vmem:[%s190 + $0x1370] sm:$0xff]
        %v846 = vld [vmem:[%s190 + $0x1378] sm:$0xff]
        %v847 = vld [vmem:[%s190 + $0x1380] sm:$0xff]
        %v848 = vld [vmem:[%s190 + $0x1388] sm:$0xff]
        %v849 = vld [vmem:[%s190 + $0x1390] sm:$0xff]
        %v850 = vld [vmem:[%s190 + $0x1398] sm:$0xff]
        %v851 = vld [vmem:[%s190 + $0x13a0] sm:$0xff]
        %v852 = vld [vmem:[%s190 + $0x13a8] sm:$0xff]
        %v853 = vld [vmem:[%s190 + $0x13b0] sm:$0xff]
        %v854 = vld [vmem:[%s190 + $0x13b8] sm:$0xff]
        %v855 = vld [vmem:[%s190 + $0x13c0] sm:$0xff]
        %v856 = vld [vmem:[%s190 + $0x13c8] sm:$0xff]
        %v857 = vld [vmem:[%s190 + $0x13d0] sm:$0xff]
        %v858 = vld [vmem:[%s190 + $0x13d8] sm:$0xff]
        %v859 = vld [vmem:[%s190 + $0x13e0] sm:$0xff]
        %v860 = vld [vmem:[%s190 + $0x13e8] sm:$0xff]
        %v861 = vld [vmem:[%s190 + $0x13f0] sm:$0xff]
        %v862 = vld [vmem:[%s190 + $0x13f8] sm:$0xff]
        %v863 = vld [vmem:[%s190 + $0x1400] sm:$0xff]
        %v864 = vld [vmem:[%s190 + $0x1408] sm:$0xff]
        %v865 = vld [vmem:[%s190 + $0x1410] sm:$0xff]
        %v866 = vld [vmem:[%s190 + $0x1418] sm:$0xff]
        %v867 = vld [vmem:[%s190 + $0x1420] sm:$0xff]
        %v868 = vld [vmem:[%s190 + $0x1428] sm:$0xff]
        %v869 = vld [vmem:[%s190 + $0x1430] sm:$0xff]
        %v870 = vld [vmem:[%s190 + $0x1438] sm:$0xff]
        %v871 = vld [vmem:[%s190 + $0x1440] sm:$0xff]
        %v872 = vld [vmem:[%s190 + $0x1448] sm:$0xff]
        %v873 = vld [vmem:[%s190 + $0x1450] sm:$0xff]
        %v874 = vld [vmem:[%s190 + $0x1458] sm:$0xff]
        %v875 = vld [vmem:[%s190 + $0x1460] sm:$0xff]
        %v876 = vld [vmem:[%s190 + $0x1468] sm:$0xff]
        %v877 = vld [vmem:[%s190 + $0x1470] sm:$0xff]
        %v878 = vld [vmem:[%s190 + $0x1478] sm:$0xff]
        %v879 = vld [vmem:[%s190 + $0x1480] sm:$0xff]
        %v880 = vld [vmem:[%s190 + $0x1488] sm:$0xff]
        %v881 = vld [vmem:[%s190 + $0x1490] sm:$0xff]
        %v882 = vld [vmem:[%s190 + $0x1498] sm:$0xff]
        %v883 = vld [vmem:[%s190 + $0x14a0] sm:$0xff]
        %v884 = vld [vmem:[%s190 + $0x14a8] sm:$0xff]
        %v885 = vld [vmem:[%s190 + $0x14b0] sm:$0xff]
        %v886 = vld [vmem:[%s190 + $0x14b8] sm:$0xff]
        %v887 = vld [vmem:[%s190 + $0x14c0] sm:$0xff]
        %v888 = vld [vmem:[%s190 + $0x14c8] sm:$0xff]
        %v889 = vld [vmem:[%s190 + $0x14d0] sm:$0xff]
        %v890 = vld [vmem:[%s190 + $0x14d8] sm:$0xff]
        %v891 = vld [vmem:[%s190 + $0x14e0] sm:$0xff]
        %v892 = vld [vmem:[%s190 + $0x14e8] sm:$0xff]
        %v893 = vld [vmem:[%s190 + $0x14f0] sm:$0xff]
        %v894 = vld [vmem:[%s190 + $0x14f8] sm:$0xff]
        %v895 = vld [vmem:[%s190 + $0x1500] sm:$0xff]
        %v896 = vld [vmem:[%s190 + $0x1508] sm:$0xff]
        %v897 = vld [vmem:[%s190 + $0x1510] sm:$0xff]
        %v898 = vld [vmem:[%s190 + $0x1518] sm:$0xff]
        %v899 = vld [vmem:[%s190 + $0x1520] sm:$0xff]
        %v900 = vld [vmem:[%s190 + $0x1528] sm:$0xff]
        %v901 = vld [vmem:[%s190 + $0x1530] sm:$0xff]
        %v902 = vld [vmem:[%s190 + $0x1538] sm:$0xff]
        %v903 = vld [vmem:[%s190 + $0x1540] sm:$0xff]
        %v904 = vld [vmem:[%s190 + $0x1548] sm:$0xff]
        %v905 = vld [vmem:[%s190 + $0x1550] sm:$0xff]
        %v906 = vld [vmem:[%s190 + $0x1558] sm:$0xff]
        %v907 = vld [vmem:[%s190 + $0x1560] sm:$0xff]
        %v908 = vld [vmem:[%s190 + $0x1568] sm:$0xff]
        %v909 = vld [vmem:[%s190 + $0x1570] sm:$0xff]
        %v910 = vld [vmem:[%s190 + $0x1578] sm:$0xff]
        %v911 = vld [vmem:[%s190 + $0x1580] sm:$0xff]
        %v912 = vld [vmem:[%s190 + $0x1588] sm:$0xff]
        %v913 = vld [vmem:[%s190 + $0x1590] sm:$0xff]
        %v914 = vld [vmem:[%s190 + $0x1598] sm:$0xff]
        %v915 = vld [vmem:[%s190 + $0x15a0] sm:$0xff]
        %v916 = vld [vmem:[%s190 + $0x15a8] sm:$0xff]
        %v917 = vld [vmem:[%s190 + $0x15b0] sm:$0xff]
        %v918 = vld [vmem:[%s190 + $0x15b8] sm:$0xff]
        %v919 = vld [vmem:[%s190 + $0x15c0] sm:$0xff]
        %v920 = vld [vmem:[%s190 + $0x15c8] sm:$0xff]
        %v921 = vld [vmem:[%s190 + $0x15d0] sm:$0xff]
        %v922 = vld [vmem:[%s190 + $0x15d8] sm:$0xff]
        %v923 = vld [vmem:[%s190 + $0x15e0] sm:$0xff]
        %v924 = vld [vmem:[%s190 + $0x15e8] sm:$0xff]
        %v925 = vld [vmem:[%s190 + $0x15f0] sm:$0xff]
        %v926 = vld [vmem:[%s190 + $0x15f8] sm:$0xff]
        %v927 = vld [vmem:[%s190 + $0x1600] sm:$0xff]
        %v928 = vld [vmem:[%s190 + $0x1608] sm:$0xff]
        %v929 = vld [vmem:[%s190 + $0x1610] sm:$0xff]
        %v930 = vld [vmem:[%s190 + $0x1618] sm:$0xff]
        %v931 = vld [vmem:[%s190 + $0x1620] sm:$0xff]
        %v932 = vld [vmem:[%s190 + $0x1628] sm:$0xff]
        %v933 = vld [vmem:[%s190 + $0x1630] sm:$0xff]
        %v934 = vld [vmem:[%s190 + $0x1638] sm:$0xff]
        %v935 = vld [vmem:[%s190 + $0x1640] sm:$0xff]
        %v936 = vld [vmem:[%s190 + $0x1648] sm:$0xff]
        %v937 = vld [vmem:[%s190 + $0x1650] sm:$0xff]
        %v938 = vld [vmem:[%s190 + $0x1658] sm:$0xff]
        %v939 = vld [vmem:[%s190 + $0x1660] sm:$0xff]
        %v940 = vld [vmem:[%s190 + $0x1668] sm:$0xff]
        %v941 = vld [vmem:[%s190 + $0x1670] sm:$0xff]
        %v942 = vld [vmem:[%s190 + $0x1678] sm:$0xff]
        %v943 = vld [vmem:[%s190 + $0x1680] sm:$0xff]
        %v944 = vld [vmem:[%s190 + $0x1688] sm:$0xff]
        %v945 = vld [vmem:[%s190 + $0x1690] sm:$0xff]
        %v946 = vld [vmem:[%s190 + $0x1698] sm:$0xff]
        %v947 = vld [vmem:[%s190 + $0x16a0] sm:$0xff]
        %v948 = vld [vmem:[%s190 + $0x16a8] sm:$0xff]
        %v949 = vld [vmem:[%s190 + $0x16b0] sm:$0xff]
        %v950 = vld [vmem:[%s190 + $0x16b8] sm:$0xff]
        %v951 = vld [vmem:[%s190 + $0x16c0] sm:$0xff]
        %v952 = vld [vmem:[%s190 + $0x16c8] sm:$0xff]
        %v953 = vld [vmem:[%s190 + $0x16d0] sm:$0xff]
        %v954 = vld [vmem:[%s190 + $0x16d8] sm:$0xff]
        %v955 = vld [vmem:[%s190 + $0x16e0] sm:$0xff]
        %v956 = vld [vmem:[%s190 + $0x16e8] sm:$0xff]
        %v957 = vld [vmem:[%s190 + $0x16f0] sm:$0xff]
        %v958 = vld [vmem:[%s190 + $0x16f8] sm:$0xff]
        %v959 = vld [vmem:[%s190 + $0x1700] sm:$0xff]
        %v960 = vld [vmem:[%s190 + $0x1708] sm:$0xff]
        %v961 = vld [vmem:[%s190 + $0x1710] sm:$0xff]
        %v962 = vld [vmem:[%s190 + $0x1718] sm:$0xff]
        %v963 = vld [vmem:[%s190 + $0x1720] sm:$0xff]
        %v964 = vld [vmem:[%s190 + $0x1728] sm:$0xff]
        %v965 = vld [vmem:[%s190 + $0x1730] sm:$0xff]
        %v966 = vld [vmem:[%s190 + $0x1738] sm:$0xff]
        %v967 = vld [vmem:[%s190 + $0x1740] sm:$0xff]
        %v968 = vld [vmem:[%s190 + $0x1748] sm:$0xff]
        %v969 = vld [vmem:[%s190 + $0x1750] sm:$0xff]
        %v970 = vld [vmem:[%s190 + $0x1758] sm:$0xff]
        %v971 = vld [vmem:[%s190 + $0x1760] sm:$0xff]
        %v972 = vld [vmem:[%s190 + $0x1768] sm:$0xff]
        %v973 = vld [vmem:[%s190 + $0x1770] sm:$0xff]
        %v974 = vld [vmem:[%s190 + $0x1778] sm:$0xff]
        %v975 = vld [vmem:[%s190 + $0x1780] sm:$0xff]
        %v976 = vld [vmem:[%s190 + $0x1788] sm:$0xff]
        %v977 = vld [vmem:[%s190 + $0x1790] sm:$0xff]
        %v978 = vld [vmem:[%s190 + $0x1798] sm:$0xff]
        %v979 = vld [vmem:[%s190 + $0x17a0] sm:$0xff]
        %v980 = vld [vmem:[%s190 + $0x17a8] sm:$0xff]
        %v981 = vld [vmem:[%s190 + $0x17b0] sm:$0xff]
        %v982 = vld [vmem:[%s190 + $0x17b8] sm:$0xff]
        %v983 = vld [vmem:[%s190 + $0x17c0] sm:$0xff]
        %v984 = vld [vmem:[%s190 + $0x17c8] sm:$0xff]
        %v985 = vld [vmem:[%s190 + $0x17d0] sm:$0xff]
        %v986 = vld [vmem:[%s190 + $0x17d8] sm:$0xff]
        %v987 = vld [vmem:[%s190 + $0x17e0] sm:$0xff]
        %v988 = vld [vmem:[%s190 + $0x17e8] sm:$0xff]
        %v989 = vld [vmem:[%s190 + $0x17f0] sm:$0xff]
        %v990 = vld [vmem:[%s190 + $0x17f8] sm:$0xff]
        %v991 = vld [vmem:[%s190 + $0x1800] sm:$0xff]
        %v992 = vld [vmem:[%s190 + $0x1808] sm:$0xff]
        %v993 = vld [vmem:[%s190 + $0x1810] sm:$0xff]
        %v994 = vld [vmem:[%s190 + $0x1818] sm:$0xff]
        %v995 = vld [vmem:[%s190 + $0x1820] sm:$0xff]
        %v996 = vld [vmem:[%s190 + $0x1828] sm:$0xff]
        %v997 = vld [vmem:[%s190 + $0x1830] sm:$0xff]
        %v998 = vld [vmem:[%s190 + $0x1838] sm:$0xff]
        %v999 = vld [vmem:[%s190 + $0x1840] sm:$0xff]
        %v1000 = vld [vmem:[%s190 + $0x1848] sm:$0xff]
        %v1001 = vld [vmem:[%s190 + $0x1850] sm:$0xff]
        %v1002 = vld [vmem:[%s190 + $0x1858] sm:$0xff]
        %v1003 = vld [vmem:[%s190 + $0x1860] sm:$0xff]
        %v1004 = vld [vmem:[%s190 + $0x1868] sm:$0xff]
        %v1005 = vld [vmem:[%s190 + $0x1870] sm:$0xff]
        %v1006 = vld [vmem:[%s190 + $0x1878] sm:$0xff]
        %v1007 = vld [vmem:[%s190 + $0x1880] sm:$0xff]
        %v1008 = vld [vmem:[%s190 + $0x1888] sm:$0xff]
        %v1009 = vld [vmem:[%s190 + $0x1890] sm:$0xff]
        %v1010 = vld [vmem:[%s190 + $0x1898] sm:$0xff]
        %v1011 = vld [vmem:[%s190 + $0x18a0] sm:$0xff]
        %v1012 = vld [vmem:[%s190 + $0x18a8] sm:$0xff]
        %v1013 = vld [vmem:[%s190 + $0x18b0] sm:$0xff]
        %v1014 = vld [vmem:[%s190 + $0x18b8] sm:$0xff]
        %v1015 = vld [vmem:[%s190 + $0x18c0] sm:$0xff]
        %v1016 = vld [vmem:[%s190 + $0x18c8] sm:$0xff]
        %v1017 = vld [vmem:[%s190 + $0x18d0] sm:$0xff]
        %v1018 = vld [vmem:[%s190 + $0x18d8] sm:$0xff]
        %v1019 = vld [vmem:[%s190 + $0x18e0] sm:$0xff]
        %v1020 = vld [vmem:[%s190 + $0x18e8] sm:$0xff]
        %v1021 = vld [vmem:[%s190 + $0x18f0] sm:$0xff]
        %v1022 = vld [vmem:[%s190 + $0x18f8] sm:$0xff]
        %v1023 = vld [vmem:[%s190 + $0x1900] sm:$0xff]
        %v1024 = vld [vmem:[%s190 + $0x1908] sm:$0xff]
        %v1025 = vld [vmem:[%s190 + $0x1910] sm:$0xff]
        %v1026 = vld [vmem:[%s190 + $0x1918] sm:$0xff]
        %v1027 = vld [vmem:[%s190 + $0x1920] sm:$0xff]
        %v1028 = vld [vmem:[%s190 + $0x1928] sm:$0xff]
        %v1029 = vld [vmem:[%s190 + $0x1930] sm:$0xff]
        %v1030 = vld [vmem:[%s190 + $0x1938] sm:$0xff]
        %v1031 = vld [vmem:[%s190 + $0x1940] sm:$0xff]
        %v1032 = vld [vmem:[%s190 + $0x1948] sm:$0xff]
        %v1033 = vld [vmem:[%s190 + $0x1950] sm:$0xff]
        %v1034 = vld [vmem:[%s190 + $0x1958] sm:$0xff]
        %v1035 = vld [vmem:[%s190 + $0x1960] sm:$0xff]
        %v1036 = vld [vmem:[%s190 + $0x1968] sm:$0xff]
        %v1037 = vld [vmem:[%s190 + $0x1970] sm:$0xff]
        %v1038 = vld [vmem:[%s190 + $0x1978] sm:$0xff]
        %v1039 = vld [vmem:[%s190 + $0x1980] sm:$0xff]
        %v1040 = vld [vmem:[%s190 + $0x1988] sm:$0xff]
        %v1041 = vld [vmem:[%s190 + $0x1990] sm:$0xff]
        %v1042 = vld [vmem:[%s190 + $0x1998] sm:$0xff]
        %v1043 = vld [vmem:[%s190 + $0x19a0] sm:$0xff]
        %v1044 = vld [vmem:[%s190 + $0x19a8] sm:$0xff]
        %v1045 = vld [vmem:[%s190 + $0x19b0] sm:$0xff]
        %v1046 = vld [vmem:[%s190 + $0x19b8] sm:$0xff]
        %v1047 = vld [vmem:[%s190 + $0x19c0] sm:$0xff]
        %v1048 = vld [vmem:[%s190 + $0x19c8] sm:$0xff]
        %v1049 = vld [vmem:[%s190 + $0x19d0] sm:$0xff]
        %v1050 = vld [vmem:[%s190 + $0x19d8] sm:$0xff]
        %v1051 = vld [vmem:[%s190 + $0x19e0] sm:$0xff]
        %v1052 = vld [vmem:[%s190 + $0x19e8] sm:$0xff]
        %v1053 = vld [vmem:[%s190 + $0x19f0] sm:$0xff]
        %v1054 = vld [vmem:[%s190 + $0x19f8] sm:$0xff]
        %v1055 = vld [vmem:[%s190 + $0x1a00] sm:$0xff]
        %v1056 = vld [vmem:[%s190 + $0x1a08] sm:$0xff]
        %v1057 = vld [vmem:[%s190 + $0x1a10] sm:$0xff]
        %v1058 = vld [vmem:[%s190 + $0x1a18] sm:$0xff]
        %v1059 = vld [vmem:[%s190 + $0x1a20] sm:$0xff]
        %v1060 = vld [vmem:[%s190 + $0x1a28] sm:$0xff]
        %v1061 = vld [vmem:[%s190 + $0x1a30] sm:$0xff]
        %v1062 = vld [vmem:[%s190 + $0x1a38] sm:$0xff]
        %v1063 = vld [vmem:[%s190 + $0x1a40] sm:$0xff]
        %v1064 = vld [vmem:[%s190 + $0x1a48] sm:$0xff]
        %v1065 = vld [vmem:[%s190 + $0x1a50] sm:$0xff]
        %v1066 = vld [vmem:[%s190 + $0x1a58] sm:$0xff]
        %v1067 = vld [vmem:[%s190 + $0x1a60] sm:$0xff]
        %v1068 = vld [vmem:[%s190 + $0x1a68] sm:$0xff]
        %v1069 = vld [vmem:[%s190 + $0x1a70] sm:$0xff]
        %v1070 = vld [vmem:[%s190 + $0x1a78] sm:$0xff]
        %v1071 = vld [vmem:[%s190 + $0x1a80] sm:$0xff]
        %v1072 = vld [vmem:[%s190 + $0x1a88] sm:$0xff]
        %v1073 = vld [vmem:[%s190 + $0x1a90] sm:$0xff]
        %v1074 = vld [vmem:[%s190 + $0x1a98] sm:$0xff]
        %v1075 = vld [vmem:[%s190 + $0x1aa0] sm:$0xff]
        %v1076 = vld [vmem:[%s190 + $0x1aa8] sm:$0xff]
        %v1077 = vld [vmem:[%s190 + $0x1ab0] sm:$0xff]
        %v1078 = vld [vmem:[%s190 + $0x1ab8] sm:$0xff]
        %v1079 = vld [vmem:[%s190 + $0x1ac0] sm:$0xff]
        %v1080 = vld [vmem:[%s190 + $0x1ac8] sm:$0xff]
        %v1081 = vld [vmem:[%s190 + $0x1ad0] sm:$0xff]
        %v1082 = vld [vmem:[%s190 + $0x1ad8] sm:$0xff]
        %v1083 = vld [vmem:[%s190 + $0x1ae0] sm:$0xff]
        %v1084 = vld [vmem:[%s190 + $0x1ae8] sm:$0xff]
        %v1085 = vld [vmem:[%s190 + $0x1af0] sm:$0xff]
        %v1086 = vld [vmem:[%s190 + $0x1af8] sm:$0xff]
        %v1087 = vld [vmem:[%s190 + $0x1b00] sm:$0xff]
        %v1088 = vld [vmem:[%s190 + $0x1b08] sm:$0xff]
        %v1089 = vld [vmem:[%s190 + $0x1b10] sm:$0xff]
        %v1090 = vld [vmem:[%s190 + $0x1b18] sm:$0xff]
        %v1091 = vld [vmem:[%s190 + $0x1b20] sm:$0xff]
        %v1092 = vld [vmem:[%s190 + $0x1b28] sm:$0xff]
        %v1093 = vld [vmem:[%s190 + $0x1b30] sm:$0xff]
        %v1094 = vld [vmem:[%s190 + $0x1b38] sm:$0xff]
        %v1095 = vld [vmem:[%s190 + $0x1b40] sm:$0xff]
        %v1096 = vld [vmem:[%s190 + $0x1b48] sm:$0xff]
        %v1097 = vld [vmem:[%s190 + $0x1b50] sm:$0xff]
        %v1098 = vld [vmem:[%s190 + $0x1b58] sm:$0xff]
        %v1099 = vld [vmem:[%s190 + $0x1b60] sm:$0xff]
        %v1100 = vld [vmem:[%s190 + $0x1b68] sm:$0xff]
        %v1101 = vld [vmem:[%s190 + $0x1b70] sm:$0xff]
        %v1102 = vld [vmem:[%s190 + $0x1b78] sm:$0xff]
        %v1103 = vld [vmem:[%s190 + $0x1b80] sm:$0xff]
        %v1104 = vld [vmem:[%s190 + $0x1b88] sm:$0xff]
        %v1105 = vld [vmem:[%s190 + $0x1b90] sm:$0xff]
        %v1106 = vld [vmem:[%s190 + $0x1b98] sm:$0xff]
        %v1107 = vld [vmem:[%s190 + $0x1ba0] sm:$0xff]
        %v1108 = vld [vmem:[%s190 + $0x1ba8] sm:$0xff]
        %v1109 = vld [vmem:[%s190 + $0x1bb0] sm:$0xff]
        %v1110 = vld [vmem:[%s190 + $0x1bb8] sm:$0xff]
        %v1111 = vld [vmem:[%s190 + $0x1bc0] sm:$0xff]
        %v1112 = vld [vmem:[%s190 + $0x1bc8] sm:$0xff]
        %v1113 = vld [vmem:[%s190 + $0x1bd0] sm:$0xff]
        %v1114 = vld [vmem:[%s190 + $0x1bd8] sm:$0xff]
        %v1115 = vld [vmem:[%s190 + $0x1be0] sm:$0xff]
        %v1116 = vld [vmem:[%s190 + $0x1be8] sm:$0xff]
        %v1117 = vld [vmem:[%s190 + $0x1bf0] sm:$0xff]
        %v1118 = vld [vmem:[%s190 + $0x1bf8] sm:$0xff]
        %v1119 = vld [vmem:[%s190 + $0x1c00] sm:$0xff]
        %v1120 = vld [vmem:[%s190 + $0x1c08] sm:$0xff]
        %v1121 = vld [vmem:[%s190 + $0x1c10] sm:$0xff]
        %v1122 = vld [vmem:[%s190 + $0x1c18] sm:$0xff]
        %v1123 = vld [vmem:[%s190 + $0x1c20] sm:$0xff]
        %v1124 = vld [vmem:[%s190 + $0x1c28] sm:$0xff]
        %v1125 = vld [vmem:[%s190 + $0x1c30] sm:$0xff]
        %v1126 = vld [vmem:[%s190 + $0x1c38] sm:$0xff]
        %v1127 = vld [vmem:[%s190 + $0x1c40] sm:$0xff]
        %v1128 = vld [vmem:[%s190 + $0x1c48] sm:$0xff]
        %v1129 = vld [vmem:[%s190 + $0x1c50] sm:$0xff]
        %v1130 = vld [vmem:[%s190 + $0x1c58] sm:$0xff]
        %v1131 = vld [vmem:[%s190 + $0x1c60] sm:$0xff]
        %v1132 = vld [vmem:[%s190 + $0x1c68] sm:$0xff]
        %v1133 = vld [vmem:[%s190 + $0x1c70] sm:$0xff]
        %v1134 = vld [vmem:[%s190 + $0x1c78] sm:$0xff]
        %v1135 = vld [vmem:[%s190 + $0x1c80] sm:$0xff]
        %v1136 = vld [vmem:[%s190 + $0x1c88] sm:$0xff]
        %v1137 = vld [vmem:[%s190 + $0x1c90] sm:$0xff]
        %v1138 = vld [vmem:[%s190 + $0x1c98] sm:$0xff]
        %v1139 = vld [vmem:[%s190 + $0x1ca0] sm:$0xff]
        %v1140 = vld [vmem:[%s190 + $0x1ca8] sm:$0xff]
        %v1141 = vld [vmem:[%s190 + $0x1cb0] sm:$0xff]
        %v1142 = vld [vmem:[%s190 + $0x1cb8] sm:$0xff]
        %v1143 = vld [vmem:[%s190 + $0x1cc0] sm:$0xff]
        %v1144 = vld [vmem:[%s190 + $0x1cc8] sm:$0xff]
        %v1145 = vld [vmem:[%s190 + $0x1cd0] sm:$0xff]
        %v1146 = vld [vmem:[%s190 + $0x1cd8] sm:$0xff]
        %v1147 = vld [vmem:[%s190 + $0x1ce0] sm:$0xff]
        %v1148 = vld [vmem:[%s190 + $0x1ce8] sm:$0xff]
        %v1149 = vld [vmem:[%s190 + $0x1cf0] sm:$0xff]
        %v1150 = vld [vmem:[%s190 + $0x1cf8] sm:$0xff]
        %v1151 = vld [vmem:[%s190 + $0x1d00] sm:$0xff]
        %v1152 = vld [vmem:[%s190 + $0x1d08] sm:$0xff]
        %v1153 = vld [vmem:[%s190 + $0x1d10] sm:$0xff]
        %v1154 = vld [vmem:[%s190 + $0x1d18] sm:$0xff]
        %v1155 = vld [vmem:[%s190 + $0x1d20] sm:$0xff]
        %v1156 = vld [vmem:[%s190 + $0x1d28] sm:$0xff]
        %v1157 = vld [vmem:[%s190 + $0x1d30] sm:$0xff]
        %v1158 = vld [vmem:[%s190 + $0x1d38] sm:$0xff]
        %v1159 = vld [vmem:[%s190 + $0x1d40] sm:$0xff]
        %v1160 = vld [vmem:[%s190 + $0x1d48] sm:$0xff]
        %v1161 = vld [vmem:[%s190 + $0x1d50] sm:$0xff]
        %v1162 = vld [vmem:[%s190 + $0x1d58] sm:$0xff]
        %v1163 = vld [vmem:[%s190 + $0x1d60] sm:$0xff]
        %v1164 = vld [vmem:[%s190 + $0x1d68] sm:$0xff]
        %v1165 = vld [vmem:[%s190 + $0x1d70] sm:$0xff]
        %v1166 = vld [vmem:[%s190 + $0x1d78] sm:$0xff]
        %v1167 = vld [vmem:[%s190 + $0x1d80] sm:$0xff]
        %v1168 = vld [vmem:[%s190 + $0x1d88] sm:$0xff]
        %v1169 = vld [vmem:[%s190 + $0x1d90] sm:$0xff]
        %v1170 = vld [vmem:[%s190 + $0x1d98] sm:$0xff]
        %v1171 = vld [vmem:[%s190 + $0x1da0] sm:$0xff]
        %v1172 = vld [vmem:[%s190 + $0x1da8] sm:$0xff]
        %v1173 = vld [vmem:[%s190 + $0x1db0] sm:$0xff]
        %v1174 = vld [vmem:[%s190 + $0x1db8] sm:$0xff]
        %v1175 = vld [vmem:[%s190 + $0x1dc0] sm:$0xff]
        %v1176 = vld [vmem:[%s190 + $0x1dc8] sm:$0xff]
        %v1177 = vld [vmem:[%s190 + $0x1dd0] sm:$0xff]
        %v1178 = vld [vmem:[%s190 + $0x1dd8] sm:$0xff]
        %v1179 = vld [vmem:[%s190 + $0x1de0] sm:$0xff]
        %v1180 = vld [vmem:[%s190 + $0x1de8] sm:$0xff]
        %v1181 = vld [vmem:[%s190 + $0x1df0] sm:$0xff]
        %v1182 = vld [vmem:[%s190 + $0x1df8] sm:$0xff]
        %v1183 = vld [vmem:[%s190 + $0x1e00] sm:$0xff]
        %v1184 = vld [vmem:[%s190 + $0x1e08] sm:$0xff]
        %v1185 = vld [vmem:[%s190 + $0x1e10] sm:$0xff]
        %v1186 = vld [vmem:[%s190 + $0x1e18] sm:$0xff]
        %v1187 = vld [vmem:[%s190 + $0x1e20] sm:$0xff]
        %v1188 = vld [vmem:[%s190 + $0x1e28] sm:$0xff]
        %v1189 = vld [vmem:[%s190 + $0x1e30] sm:$0xff]
        %v1190 = vld [vmem:[%s190 + $0x1e38] sm:$0xff]
        %v1191 = vld [vmem:[%s190 + $0x1e40] sm:$0xff]
        %v1192 = vld [vmem:[%s190 + $0x1e48] sm:$0xff]
        %v1193 = vld [vmem:[%s190 + $0x1e50] sm:$0xff]
        %v1194 = vld [vmem:[%s190 + $0x1e58] sm:$0xff]
        %v1195 = vld [vmem:[%s190 + $0x1e60] sm:$0xff]
        %v1196 = vld [vmem:[%s190 + $0x1e68] sm:$0xff]
        %v1197 = vld [vmem:[%s190 + $0x1e70] sm:$0xff]
        %v1198 = vld [vmem:[%s190 + $0x1e78] sm:$0xff]
        %v1199 = vld [vmem:[%s190 + $0x1e80] sm:$0xff]
        %v1200 = vld [vmem:[%s190 + $0x1e88] sm:$0xff]
        %v1201 = vld [vmem:[%s190 + $0x1e90] sm:$0xff]
        %v1202 = vld [vmem:[%s190 + $0x1e98] sm:$0xff]
        %v1203 = vld [vmem:[%s190 + $0x1ea0] sm:$0xff]
        %v1204 = vld [vmem:[%s190 + $0x1ea8] sm:$0xff]
        %v1205 = vld [vmem:[%s190 + $0x1eb0] sm:$0xff]
        %v1206 = vld [vmem:[%s190 + $0x1eb8] sm:$0xff]
        %v1207 = vld [vmem:[%s190 + $0x1ec0] sm:$0xff]
        %v1208 = vld [vmem:[%s190 + $0x1ec8] sm:$0xff]
        %v1209 = vld [vmem:[%s190 + $0x1ed0] sm:$0xff]
        %v1210 = vld [vmem:[%s190 + $0x1ed8] sm:$0xff]
        %v1211 = vld [vmem:[%s190 + $0x1ee0] sm:$0xff]
        %v1212 = vld [vmem:[%s190 + $0x1ee8] sm:$0xff]
        %v1213 = vld [vmem:[%s190 + $0x1ef0] sm:$0xff]
        %v1214 = vld [vmem:[%s190 + $0x1ef8] sm:$0xff]
        %v1215 = vld [vmem:[%s190 + $0x1f00] sm:$0xff]
        %v1216 = vld [vmem:[%s190 + $0x1f08] sm:$0xff]
        %v1217 = vld [vmem:[%s190 + $0x1f10] sm:$0xff]
        %v1218 = vld [vmem:[%s190 + $0x1f18] sm:$0xff]
        %v1219 = vld [vmem:[%s190 + $0x1f20] sm:$0xff]
        %v1220 = vld [vmem:[%s190 + $0x1f28] sm:$0xff]
        %v1221 = vld [vmem:[%s190 + $0x1f30] sm:$0xff]
        %v1222 = vld [vmem:[%s190 + $0x1f38] sm:$0xff]
        %v1223 = vld [vmem:[%s190 + $0x1f40] sm:$0xff]
        %v1224 = vld [vmem:[%s190 + $0x1f48] sm:$0xff]
        %v1225 = vld [vmem:[%s190 + $0x1f50] sm:$0xff]
        %v1226 = vld [vmem:[%s190 + $0x1f58] sm:$0xff]
        %v1227 = vld [vmem:[%s190 + $0x1f60] sm:$0xff]
        %v1228 = vld [vmem:[%s190 + $0x1f68] sm:$0xff]
        %v1229 = vld [vmem:[%s190 + $0x1f70] sm:$0xff]
        %v1230 = vld [vmem:[%s190 + $0x1f78] sm:$0xff]
        %v1231 = vld [vmem:[%s190 + $0x1f80] sm:$0xff]
        %v1232 = vld [vmem:[%s190 + $0x1f88] sm:$0xff]
        %v1233 = vld [vmem:[%s190 + $0x1f90] sm:$0xff]
        %v1234 = vld [vmem:[%s190 + $0x1f98] sm:$0xff]
        %v1235 = vld [vmem:[%s190 + $0x1fa0] sm:$0xff]
        %v1236 = vld [vmem:[%s190 + $0x1fa8] sm:$0xff]
        %v1237 = vld [vmem:[%s190 + $0x1fb0] sm:$0xff]
        %v1238 = vld [vmem:[%s190 + $0x1fb8] sm:$0xff]
        %v1239 = vld [vmem:[%s190 + $0x1fc0] sm:$0xff]
        %v1240 = vld [vmem:[%s190 + $0x1fc8] sm:$0xff]
        %v1241 = vld [vmem:[%s190 + $0x1fd0] sm:$0xff]
        %v1242 = vld [vmem:[%s190 + $0x1fd8] sm:$0xff]
        %v1243 = vld [vmem:[%s190 + $0x1fe0] sm:$0xff]
        %v1244 = vld [vmem:[%s190 + $0x1fe8] sm:$0xff]
        %v1245 = vld [vmem:[%s190 + $0x1ff0] sm:$0xff]
        %v1246 = vld [vmem:[%s190 + $0x1ff8] sm:$0xff]
        %s1247 = sld [smem:[#allocation2]]
        %v1248 = vstv %s1247
        %v1249 = vmul.f32 %v223, %v1248
        %v1250 = vmul.f32 %v224, %v1248
        %v1251 = vmul.f32 %v225, %v1248
        %v1252 = vmul.f32 %v226, %v1248
        %v1253 = vmul.f32 %v227, %v1248
        %v1254 = vmul.f32 %v228, %v1248
        %v1255 = vmul.f32 %v229, %v1248
        %v1256 = vmul.f32 %v230, %v1248
        %v1257 = vmul.f32 %v231, %v1248
        %v1258 = vmul.f32 %v232, %v1248
        %v1259 = vmul.f32 %v233, %v1248
        %v1260 = vmul.f32 %v234, %v1248
        %v1261 = vmul.f32 %v235, %v1248
        %v1262 = vmul.f32 %v236, %v1248
        %v1263 = vmul.f32 %v237, %v1248
        %v1264 = vmul.f32 %v238, %v1248
        %v1265 = vmul.f32 %v239, %v1248
        %v1266 = vmul.f32 %v240, %v1248
        %v1267 = vmul.f32 %v241, %v1248
        %v1268 = vmul.f32 %v242, %v1248
        %v1269 = vmul.f32 %v243, %v1248
        %v1270 = vmul.f32 %v244, %v1248
        %v1271 = vmul.f32 %v245, %v1248
        %v1272 = vmul.f32 %v246, %v1248
        %v1273 = vmul.f32 %v247, %v1248
        %v1274 = vmul.f32 %v248, %v1248
        %v1275 = vmul.f32 %v249, %v1248
        %v1276 = vmul.f32 %v250, %v1248
        %v1277 = vmul.f32 %v251, %v1248
        %v1278 = vmul.f32 %v252, %v1248
        %v1279 = vmul.f32 %v253, %v1248
        %v1280 = vmul.f32 %v254, %v1248
        %v1281 = vmul.f32 %v255, %v1248
        %v1282 = vmul.f32 %v256, %v1248
        %v1283 = vmul.f32 %v257, %v1248
        %v1284 = vmul.f32 %v258, %v1248
        %v1285 = vmul.f32 %v259, %v1248
        %v1286 = vmul.f32 %v260, %v1248
        %v1287 = vmul.f32 %v261, %v1248
        %v1288 = vmul.f32 %v262, %v1248
        %v1289 = vmul.f32 %v263, %v1248
        %v1290 = vmul.f32 %v264, %v1248
        %v1291 = vmul.f32 %v265, %v1248
        %v1292 = vmul.f32 %v266, %v1248
        %v1293 = vmul.f32 %v267, %v1248
        %v1294 = vmul.f32 %v268, %v1248
        %v1295 = vmul.f32 %v269, %v1248
        %v1296 = vmul.f32 %v270, %v1248
        %v1297 = vmul.f32 %v271, %v1248
        %v1298 = vmul.f32 %v272, %v1248
        %v1299 = vmul.f32 %v273, %v1248
        %v1300 = vmul.f32 %v274, %v1248
        %v1301 = vmul.f32 %v275, %v1248
        %v1302 = vmul.f32 %v276, %v1248
        %v1303 = vmul.f32 %v277, %v1248
        %v1304 = vmul.f32 %v278, %v1248
        %v1305 = vmul.f32 %v279, %v1248
        %v1306 = vmul.f32 %v280, %v1248
        %v1307 = vmul.f32 %v281, %v1248
        %v1308 = vmul.f32 %v282, %v1248
        %v1309 = vmul.f32 %v283, %v1248
        %v1310 = vmul.f32 %v284, %v1248
        %v1311 = vmul.f32 %v285, %v1248
        %v1312 = vmul.f32 %v286, %v1248
        %v1313 = vmul.f32 %v287, %v1248
        %v1314 = vmul.f32 %v288, %v1248
        %v1315 = vmul.f32 %v289, %v1248
        %v1316 = vmul.f32 %v290, %v1248
        %v1317 = vmul.f32 %v291, %v1248
        %v1318 = vmul.f32 %v292, %v1248
        %v1319 = vmul.f32 %v293, %v1248
        %v1320 = vmul.f32 %v294, %v1248
        %v1321 = vmul.f32 %v295, %v1248
        %v1322 = vmul.f32 %v296, %v1248
        %v1323 = vmul.f32 %v297, %v1248
        %v1324 = vmul.f32 %v298, %v1248
        %v1325 = vmul.f32 %v299, %v1248
        %v1326 = vmul.f32 %v300, %v1248
        %v1327 = vmul.f32 %v301, %v1248
        %v1328 = vmul.f32 %v302, %v1248
        %v1329 = vmul.f32 %v303, %v1248
        %v1330 = vmul.f32 %v304, %v1248
        %v1331 = vmul.f32 %v305, %v1248
        %v1332 = vmul.f32 %v306, %v1248
        %v1333 = vmul.f32 %v307, %v1248
        %v1334 = vmul.f32 %v308, %v1248
        %v1335 = vmul.f32 %v309, %v1248
        %v1336 = vmul.f32 %v310, %v1248
        %v1337 = vmul.f32 %v311, %v1248
        %v1338 = vmul.f32 %v312, %v1248
        %v1339 = vmul.f32 %v313, %v1248
        %v1340 = vmul.f32 %v314, %v1248
        %v1341 = vmul.f32 %v315, %v1248
        %v1342 = vmul.f32 %v316, %v1248
        %v1343 = vmul.f32 %v317, %v1248
        %v1344 = vmul.f32 %v318, %v1248
        %v1345 = vmul.f32 %v319, %v1248
        %v1346 = vmul.f32 %v320, %v1248
        %v1347 = vmul.f32 %v321, %v1248
        %v1348 = vmul.f32 %v322, %v1248
        %v1349 = vmul.f32 %v323, %v1248
        %v1350 = vmul.f32 %v324, %v1248
        %v1351 = vmul.f32 %v325, %v1248
        %v1352 = vmul.f32 %v326, %v1248
        %v1353 = vmul.f32 %v327, %v1248
        %v1354 = vmul.f32 %v328, %v1248
        %v1355 = vmul.f32 %v329, %v1248
        %v1356 = vmul.f32 %v330, %v1248
        %v1357 = vmul.f32 %v331, %v1248
        %v1358 = vmul.f32 %v332, %v1248
        %v1359 = vmul.f32 %v333, %v1248
        %v1360 = vmul.f32 %v334, %v1248
        %v1361 = vmul.f32 %v335, %v1248
        %v1362 = vmul.f32 %v336, %v1248
        %v1363 = vmul.f32 %v337, %v1248
        %v1364 = vmul.f32 %v338, %v1248
        %v1365 = vmul.f32 %v339, %v1248
        %v1366 = vmul.f32 %v340, %v1248
        %v1367 = vmul.f32 %v341, %v1248
        %v1368 = vmul.f32 %v342, %v1248
        %v1369 = vmul.f32 %v343, %v1248
        %v1370 = vmul.f32 %v344, %v1248
        %v1371 = vmul.f32 %v345, %v1248
        %v1372 = vmul.f32 %v346, %v1248
        %v1373 = vmul.f32 %v347, %v1248
        %v1374 = vmul.f32 %v348, %v1248
        %v1375 = vmul.f32 %v349, %v1248
        %v1376 = vmul.f32 %v350, %v1248
        %v1377 = vmul.f32 %v351, %v1248
        %v1378 = vmul.f32 %v352, %v1248
        %v1379 = vmul.f32 %v353, %v1248
        %v1380 = vmul.f32 %v354, %v1248
        %v1381 = vmul.f32 %v355, %v1248
        %v1382 = vmul.f32 %v356, %v1248
        %v1383 = vmul.f32 %v357, %v1248
        %v1384 = vmul.f32 %v358, %v1248
        %v1385 = vmul.f32 %v359, %v1248
        %v1386 = vmul.f32 %v360, %v1248
        %v1387 = vmul.f32 %v361, %v1248
        %v1388 = vmul.f32 %v362, %v1248
        %v1389 = vmul.f32 %v363, %v1248
        %v1390 = vmul.f32 %v364, %v1248
        %v1391 = vmul.f32 %v365, %v1248
        %v1392 = vmul.f32 %v366, %v1248
        %v1393 = vmul.f32 %v367, %v1248
        %v1394 = vmul.f32 %v368, %v1248
        %v1395 = vmul.f32 %v369, %v1248
        %v1396 = vmul.f32 %v370, %v1248
        %v1397 = vmul.f32 %v371, %v1248
        %v1398 = vmul.f32 %v372, %v1248
        %v1399 = vmul.f32 %v373, %v1248
        %v1400 = vmul.f32 %v374, %v1248
        %v1401 = vmul.f32 %v375, %v1248
        %v1402 = vmul.f32 %v376, %v1248
        %v1403 = vmul.f32 %v377, %v1248
        %v1404 = vmul.f32 %v378, %v1248
        %v1405 = vmul.f32 %v379, %v1248
        %v1406 = vmul.f32 %v380, %v1248
        %v1407 = vmul.f32 %v381, %v1248
        %v1408 = vmul.f32 %v382, %v1248
        %v1409 = vmul.f32 %v383, %v1248
        %v1410 = vmul.f32 %v384, %v1248
        %v1411 = vmul.f32 %v385, %v1248
        %v1412 = vmul.f32 %v386, %v1248
        %v1413 = vmul.f32 %v387, %v1248
        %v1414 = vmul.f32 %v388, %v1248
        %v1415 = vmul.f32 %v389, %v1248
        %v1416 = vmul.f32 %v390, %v1248
        %v1417 = vmul.f32 %v391, %v1248
        %v1418 = vmul.f32 %v392, %v1248
        %v1419 = vmul.f32 %v393, %v1248
        %v1420 = vmul.f32 %v394, %v1248
        %v1421 = vmul.f32 %v395, %v1248
        %v1422 = vmul.f32 %v396, %v1248
        %v1423 = vmul.f32 %v397, %v1248
        %v1424 = vmul.f32 %v398, %v1248
        %v1425 = vmul.f32 %v399, %v1248
        %v1426 = vmul.f32 %v400, %v1248
        %v1427 = vmul.f32 %v401, %v1248
        %v1428 = vmul.f32 %v402, %v1248
        %v1429 = vmul.f32 %v403, %v1248
        %v1430 = vmul.f32 %v404, %v1248
        %v1431 = vmul.f32 %v405, %v1248
        %v1432 = vmul.f32 %v406, %v1248
        %v1433 = vmul.f32 %v407, %v1248
        %v1434 = vmul.f32 %v408, %v1248
        %v1435 = vmul.f32 %v409, %v1248
        %v1436 = vmul.f32 %v410, %v1248
        %v1437 = vmul.f32 %v411, %v1248
        %v1438 = vmul.f32 %v412, %v1248
        %v1439 = vmul.f32 %v413, %v1248
        %v1440 = vmul.f32 %v414, %v1248
        %v1441 = vmul.f32 %v415, %v1248
        %v1442 = vmul.f32 %v416, %v1248
        %v1443 = vmul.f32 %v417, %v1248
        %v1444 = vmul.f32 %v418, %v1248
        %v1445 = vmul.f32 %v419, %v1248
        %v1446 = vmul.f32 %v420, %v1248
        %v1447 = vmul.f32 %v421, %v1248
        %v1448 = vmul.f32 %v422, %v1248
        %v1449 = vmul.f32 %v423, %v1248
        %v1450 = vmul.f32 %v424, %v1248
        %v1451 = vmul.f32 %v425, %v1248
        %v1452 = vmul.f32 %v426, %v1248
        %v1453 = vmul.f32 %v427, %v1248
        %v1454 = vmul.f32 %v428, %v1248
        %v1455 = vmul.f32 %v429, %v1248
        %v1456 = vmul.f32 %v430, %v1248
        %v1457 = vmul.f32 %v431, %v1248
        %v1458 = vmul.f32 %v432, %v1248
        %v1459 = vmul.f32 %v433, %v1248
        %v1460 = vmul.f32 %v434, %v1248
        %v1461 = vmul.f32 %v435, %v1248
        %v1462 = vmul.f32 %v436, %v1248
        %v1463 = vmul.f32 %v437, %v1248
        %v1464 = vmul.f32 %v438, %v1248
        %v1465 = vmul.f32 %v439, %v1248
        %v1466 = vmul.f32 %v440, %v1248
        %v1467 = vmul.f32 %v441, %v1248
        %v1468 = vmul.f32 %v442, %v1248
        %v1469 = vmul.f32 %v443, %v1248
        %v1470 = vmul.f32 %v444, %v1248
        %v1471 = vmul.f32 %v445, %v1248
        %v1472 = vmul.f32 %v446, %v1248
        %v1473 = vmul.f32 %v447, %v1248
        %v1474 = vmul.f32 %v448, %v1248
        %v1475 = vmul.f32 %v449, %v1248
        %v1476 = vmul.f32 %v450, %v1248
        %v1477 = vmul.f32 %v451, %v1248
        %v1478 = vmul.f32 %v452, %v1248
        %v1479 = vmul.f32 %v453, %v1248
        %v1480 = vmul.f32 %v454, %v1248
        %v1481 = vmul.f32 %v455, %v1248
        %v1482 = vmul.f32 %v456, %v1248
        %v1483 = vmul.f32 %v457, %v1248
        %v1484 = vmul.f32 %v458, %v1248
        %v1485 = vmul.f32 %v459, %v1248
        %v1486 = vmul.f32 %v460, %v1248
        %v1487 = vmul.f32 %v461, %v1248
        %v1488 = vmul.f32 %v462, %v1248
        %v1489 = vmul.f32 %v463, %v1248
        %v1490 = vmul.f32 %v464, %v1248
        %v1491 = vmul.f32 %v465, %v1248
        %v1492 = vmul.f32 %v466, %v1248
        %v1493 = vmul.f32 %v467, %v1248
        %v1494 = vmul.f32 %v468, %v1248
        %v1495 = vmul.f32 %v469, %v1248
        %v1496 = vmul.f32 %v470, %v1248
        %v1497 = vmul.f32 %v471, %v1248
        %v1498 = vmul.f32 %v472, %v1248
        %v1499 = vmul.f32 %v473, %v1248
        %v1500 = vmul.f32 %v474, %v1248
        %v1501 = vmul.f32 %v475, %v1248
        %v1502 = vmul.f32 %v476, %v1248
        %v1503 = vmul.f32 %v477, %v1248
        %v1504 = vmul.f32 %v478, %v1248
        %v1505 = vmul.f32 %v479, %v1248
        %v1506 = vmul.f32 %v480, %v1248
        %v1507 = vmul.f32 %v481, %v1248
        %v1508 = vmul.f32 %v482, %v1248
        %v1509 = vmul.f32 %v483, %v1248
        %v1510 = vmul.f32 %v484, %v1248
        %v1511 = vmul.f32 %v485, %v1248
        %v1512 = vmul.f32 %v486, %v1248
        %v1513 = vmul.f32 %v487, %v1248
        %v1514 = vmul.f32 %v488, %v1248
        %v1515 = vmul.f32 %v489, %v1248
        %v1516 = vmul.f32 %v490, %v1248
        %v1517 = vmul.f32 %v491, %v1248
        %v1518 = vmul.f32 %v492, %v1248
        %v1519 = vmul.f32 %v493, %v1248
        %v1520 = vmul.f32 %v494, %v1248
        %v1521 = vmul.f32 %v495, %v1248
        %v1522 = vmul.f32 %v496, %v1248
        %v1523 = vmul.f32 %v497, %v1248
        %v1524 = vmul.f32 %v498, %v1248
        %v1525 = vmul.f32 %v499, %v1248
        %v1526 = vmul.f32 %v500, %v1248
        %v1527 = vmul.f32 %v501, %v1248
        %v1528 = vmul.f32 %v502, %v1248
        %v1529 = vmul.f32 %v503, %v1248
        %v1530 = vmul.f32 %v504, %v1248
        %v1531 = vmul.f32 %v505, %v1248
        %v1532 = vmul.f32 %v506, %v1248
        %v1533 = vmul.f32 %v507, %v1248
        %v1534 = vmul.f32 %v508, %v1248
        %v1535 = vmul.f32 %v509, %v1248
        %v1536 = vmul.f32 %v510, %v1248
        %v1537 = vmul.f32 %v511, %v1248
        %v1538 = vmul.f32 %v512, %v1248
        %v1539 = vmul.f32 %v513, %v1248
        %v1540 = vmul.f32 %v514, %v1248
        %v1541 = vmul.f32 %v515, %v1248
        %v1542 = vmul.f32 %v516, %v1248
        %v1543 = vmul.f32 %v517, %v1248
        %v1544 = vmul.f32 %v518, %v1248
        %v1545 = vmul.f32 %v519, %v1248
        %v1546 = vmul.f32 %v520, %v1248
        %v1547 = vmul.f32 %v521, %v1248
        %v1548 = vmul.f32 %v522, %v1248
        %v1549 = vmul.f32 %v523, %v1248
        %v1550 = vmul.f32 %v524, %v1248
        %v1551 = vmul.f32 %v525, %v1248
        %v1552 = vmul.f32 %v526, %v1248
        %v1553 = vmul.f32 %v527, %v1248
        %v1554 = vmul.f32 %v528, %v1248
        %v1555 = vmul.f32 %v529, %v1248
        %v1556 = vmul.f32 %v530, %v1248
        %v1557 = vmul.f32 %v531, %v1248
        %v1558 = vmul.f32 %v532, %v1248
        %v1559 = vmul.f32 %v533, %v1248
        %v1560 = vmul.f32 %v534, %v1248
        %v1561 = vmul.f32 %v535, %v1248
        %v1562 = vmul.f32 %v536, %v1248
        %v1563 = vmul.f32 %v537, %v1248
        %v1564 = vmul.f32 %v538, %v1248
        %v1565 = vmul.f32 %v539, %v1248
        %v1566 = vmul.f32 %v540, %v1248
        %v1567 = vmul.f32 %v541, %v1248
        %v1568 = vmul.f32 %v542, %v1248
        %v1569 = vmul.f32 %v543, %v1248
        %v1570 = vmul.f32 %v544, %v1248
        %v1571 = vmul.f32 %v545, %v1248
        %v1572 = vmul.f32 %v546, %v1248
        %v1573 = vmul.f32 %v547, %v1248
        %v1574 = vmul.f32 %v548, %v1248
        %v1575 = vmul.f32 %v549, %v1248
        %v1576 = vmul.f32 %v550, %v1248
        %v1577 = vmul.f32 %v551, %v1248
        %v1578 = vmul.f32 %v552, %v1248
        %v1579 = vmul.f32 %v553, %v1248
        %v1580 = vmul.f32 %v554, %v1248
        %v1581 = vmul.f32 %v555, %v1248
        %v1582 = vmul.f32 %v556, %v1248
        %v1583 = vmul.f32 %v557, %v1248
        %v1584 = vmul.f32 %v558, %v1248
        %v1585 = vmul.f32 %v559, %v1248
        %v1586 = vmul.f32 %v560, %v1248
        %v1587 = vmul.f32 %v561, %v1248
        %v1588 = vmul.f32 %v562, %v1248
        %v1589 = vmul.f32 %v563, %v1248
        %v1590 = vmul.f32 %v564, %v1248
        %v1591 = vmul.f32 %v565, %v1248
        %v1592 = vmul.f32 %v566, %v1248
        %v1593 = vmul.f32 %v567, %v1248
        %v1594 = vmul.f32 %v568, %v1248
        %v1595 = vmul.f32 %v569, %v1248
        %v1596 = vmul.f32 %v570, %v1248
        %v1597 = vmul.f32 %v571, %v1248
        %v1598 = vmul.f32 %v572, %v1248
        %v1599 = vmul.f32 %v573, %v1248
        %v1600 = vmul.f32 %v574, %v1248
        %v1601 = vmul.f32 %v575, %v1248
        %v1602 = vmul.f32 %v576, %v1248
        %v1603 = vmul.f32 %v577, %v1248
        %v1604 = vmul.f32 %v578, %v1248
        %v1605 = vmul.f32 %v579, %v1248
        %v1606 = vmul.f32 %v580, %v1248
        %v1607 = vmul.f32 %v581, %v1248
        %v1608 = vmul.f32 %v582, %v1248
        %v1609 = vmul.f32 %v583, %v1248
        %v1610 = vmul.f32 %v584, %v1248
        %v1611 = vmul.f32 %v585, %v1248
        %v1612 = vmul.f32 %v586, %v1248
        %v1613 = vmul.f32 %v587, %v1248
        %v1614 = vmul.f32 %v588, %v1248
        %v1615 = vmul.f32 %v589, %v1248
        %v1616 = vmul.f32 %v590, %v1248
        %v1617 = vmul.f32 %v591, %v1248
        %v1618 = vmul.f32 %v592, %v1248
        %v1619 = vmul.f32 %v593, %v1248
        %v1620 = vmul.f32 %v594, %v1248
        %v1621 = vmul.f32 %v595, %v1248
        %v1622 = vmul.f32 %v596, %v1248
        %v1623 = vmul.f32 %v597, %v1248
        %v1624 = vmul.f32 %v598, %v1248
        %v1625 = vmul.f32 %v599, %v1248
        %v1626 = vmul.f32 %v600, %v1248
        %v1627 = vmul.f32 %v601, %v1248
        %v1628 = vmul.f32 %v602, %v1248
        %v1629 = vmul.f32 %v603, %v1248
        %v1630 = vmul.f32 %v604, %v1248
        %v1631 = vmul.f32 %v605, %v1248
        %v1632 = vmul.f32 %v606, %v1248
        %v1633 = vmul.f32 %v607, %v1248
        %v1634 = vmul.f32 %v608, %v1248
        %v1635 = vmul.f32 %v609, %v1248
        %v1636 = vmul.f32 %v610, %v1248
        %v1637 = vmul.f32 %v611, %v1248
        %v1638 = vmul.f32 %v612, %v1248
        %v1639 = vmul.f32 %v613, %v1248
        %v1640 = vmul.f32 %v614, %v1248
        %v1641 = vmul.f32 %v615, %v1248
        %v1642 = vmul.f32 %v616, %v1248
        %v1643 = vmul.f32 %v617, %v1248
        %v1644 = vmul.f32 %v618, %v1248
        %v1645 = vmul.f32 %v619, %v1248
        %v1646 = vmul.f32 %v620, %v1248
        %v1647 = vmul.f32 %v621, %v1248
        %v1648 = vmul.f32 %v622, %v1248
        %v1649 = vmul.f32 %v623, %v1248
        %v1650 = vmul.f32 %v624, %v1248
        %v1651 = vmul.f32 %v625, %v1248
        %v1652 = vmul.f32 %v626, %v1248
        %v1653 = vmul.f32 %v627, %v1248
        %v1654 = vmul.f32 %v628, %v1248
        %v1655 = vmul.f32 %v629, %v1248
        %v1656 = vmul.f32 %v630, %v1248
        %v1657 = vmul.f32 %v631, %v1248
        %v1658 = vmul.f32 %v632, %v1248
        %v1659 = vmul.f32 %v633, %v1248
        %v1660 = vmul.f32 %v634, %v1248
        %v1661 = vmul.f32 %v635, %v1248
        %v1662 = vmul.f32 %v636, %v1248
        %v1663 = vmul.f32 %v637, %v1248
        %v1664 = vmul.f32 %v638, %v1248
        %v1665 = vmul.f32 %v639, %v1248
        %v1666 = vmul.f32 %v640, %v1248
        %v1667 = vmul.f32 %v641, %v1248
        %v1668 = vmul.f32 %v642, %v1248
        %v1669 = vmul.f32 %v643, %v1248
        %v1670 = vmul.f32 %v644, %v1248
        %v1671 = vmul.f32 %v645, %v1248
        %v1672 = vmul.f32 %v646, %v1248
        %v1673 = vmul.f32 %v647, %v1248
        %v1674 = vmul.f32 %v648, %v1248
        %v1675 = vmul.f32 %v649, %v1248
        %v1676 = vmul.f32 %v650, %v1248
        %v1677 = vmul.f32 %v651, %v1248
        %v1678 = vmul.f32 %v652, %v1248
        %v1679 = vmul.f32 %v653, %v1248
        %v1680 = vmul.f32 %v654, %v1248
        %v1681 = vmul.f32 %v655, %v1248
        %v1682 = vmul.f32 %v656, %v1248
        %v1683 = vmul.f32 %v657, %v1248
        %v1684 = vmul.f32 %v658, %v1248
        %v1685 = vmul.f32 %v659, %v1248
        %v1686 = vmul.f32 %v660, %v1248
        %v1687 = vmul.f32 %v661, %v1248
        %v1688 = vmul.f32 %v662, %v1248
        %v1689 = vmul.f32 %v663, %v1248
        %v1690 = vmul.f32 %v664, %v1248
        %v1691 = vmul.f32 %v665, %v1248
        %v1692 = vmul.f32 %v666, %v1248
        %v1693 = vmul.f32 %v667, %v1248
        %v1694 = vmul.f32 %v668, %v1248
        %v1695 = vmul.f32 %v669, %v1248
        %v1696 = vmul.f32 %v670, %v1248
        %v1697 = vmul.f32 %v671, %v1248
        %v1698 = vmul.f32 %v672, %v1248
        %v1699 = vmul.f32 %v673, %v1248
        %v1700 = vmul.f32 %v674, %v1248
        %v1701 = vmul.f32 %v675, %v1248
        %v1702 = vmul.f32 %v676, %v1248
        %v1703 = vmul.f32 %v677, %v1248
        %v1704 = vmul.f32 %v678, %v1248
        %v1705 = vmul.f32 %v679, %v1248
        %v1706 = vmul.f32 %v680, %v1248
        %v1707 = vmul.f32 %v681, %v1248
        %v1708 = vmul.f32 %v682, %v1248
        %v1709 = vmul.f32 %v683, %v1248
        %v1710 = vmul.f32 %v684, %v1248
        %v1711 = vmul.f32 %v685, %v1248
        %v1712 = vmul.f32 %v686, %v1248
        %v1713 = vmul.f32 %v687, %v1248
        %v1714 = vmul.f32 %v688, %v1248
        %v1715 = vmul.f32 %v689, %v1248
        %v1716 = vmul.f32 %v690, %v1248
        %v1717 = vmul.f32 %v691, %v1248
        %v1718 = vmul.f32 %v692, %v1248
        %v1719 = vmul.f32 %v693, %v1248
        %v1720 = vmul.f32 %v694, %v1248
        %v1721 = vmul.f32 %v695, %v1248
        %v1722 = vmul.f32 %v696, %v1248
        %v1723 = vmul.f32 %v697, %v1248
        %v1724 = vmul.f32 %v698, %v1248
        %v1725 = vmul.f32 %v699, %v1248
        %v1726 = vmul.f32 %v700, %v1248
        %v1727 = vmul.f32 %v701, %v1248
        %v1728 = vmul.f32 %v702, %v1248
        %v1729 = vmul.f32 %v703, %v1248
        %v1730 = vmul.f32 %v704, %v1248
        %v1731 = vmul.f32 %v705, %v1248
        %v1732 = vmul.f32 %v706, %v1248
        %v1733 = vmul.f32 %v707, %v1248
        %v1734 = vmul.f32 %v708, %v1248
        %v1735 = vmul.f32 %v709, %v1248
        %v1736 = vmul.f32 %v710, %v1248
        %v1737 = vmul.f32 %v711, %v1248
        %v1738 = vmul.f32 %v712, %v1248
        %v1739 = vmul.f32 %v713, %v1248
        %v1740 = vmul.f32 %v714, %v1248
        %v1741 = vmul.f32 %v715, %v1248
        %v1742 = vmul.f32 %v716, %v1248
        %v1743 = vmul.f32 %v717, %v1248
        %v1744 = vmul.f32 %v718, %v1248
        %v1745 = vmul.f32 %v719, %v1248
        %v1746 = vmul.f32 %v720, %v1248
        %v1747 = vmul.f32 %v721, %v1248
        %v1748 = vmul.f32 %v722, %v1248
        %v1749 = vmul.f32 %v723, %v1248
        %v1750 = vmul.f32 %v724, %v1248
        %v1751 = vmul.f32 %v725, %v1248
        %v1752 = vmul.f32 %v726, %v1248
        %v1753 = vmul.f32 %v727, %v1248
        %v1754 = vmul.f32 %v728, %v1248
        %v1755 = vmul.f32 %v729, %v1248
        %v1756 = vmul.f32 %v730, %v1248
        %v1757 = vmul.f32 %v731, %v1248
        %v1758 = vmul.f32 %v732, %v1248
        %v1759 = vmul.f32 %v733, %v1248
        %v1760 = vmul.f32 %v734, %v1248
        %v1761 = vmul.f32 %v735, %v1248
        %v1762 = vmul.f32 %v736, %v1248
        %v1763 = vmul.f32 %v737, %v1248
        %v1764 = vmul.f32 %v738, %v1248
        %v1765 = vmul.f32 %v739, %v1248
        %v1766 = vmul.f32 %v740, %v1248
        %v1767 = vmul.f32 %v741, %v1248
        %v1768 = vmul.f32 %v742, %v1248
        %v1769 = vmul.f32 %v743, %v1248
        %v1770 = vmul.f32 %v744, %v1248
        %v1771 = vmul.f32 %v745, %v1248
        %v1772 = vmul.f32 %v746, %v1248
        %v1773 = vmul.f32 %v747, %v1248
        %v1774 = vmul.f32 %v748, %v1248
        %v1775 = vmul.f32 %v749, %v1248
        %v1776 = vmul.f32 %v750, %v1248
        %v1777 = vmul.f32 %v751, %v1248
        %v1778 = vmul.f32 %v752, %v1248
        %v1779 = vmul.f32 %v753, %v1248
        %v1780 = vmul.f32 %v754, %v1248
        %v1781 = vmul.f32 %v755, %v1248
        %v1782 = vmul.f32 %v756, %v1248
        %v1783 = vmul.f32 %v757, %v1248
        %v1784 = vmul.f32 %v758, %v1248
        %v1785 = vmul.f32 %v759, %v1248
        %v1786 = vmul.f32 %v760, %v1248
        %v1787 = vmul.f32 %v761, %v1248
        %v1788 = vmul.f32 %v762, %v1248
        %v1789 = vmul.f32 %v763, %v1248
        %v1790 = vmul.f32 %v764, %v1248
        %v1791 = vmul.f32 %v765, %v1248
        %v1792 = vmul.f32 %v766, %v1248
        %v1793 = vmul.f32 %v767, %v1248
        %v1794 = vmul.f32 %v768, %v1248
        %v1795 = vmul.f32 %v769, %v1248
        %v1796 = vmul.f32 %v770, %v1248
        %v1797 = vmul.f32 %v771, %v1248
        %v1798 = vmul.f32 %v772, %v1248
        %v1799 = vmul.f32 %v773, %v1248
        %v1800 = vmul.f32 %v774, %v1248
        %v1801 = vmul.f32 %v775, %v1248
        %v1802 = vmul.f32 %v776, %v1248
        %v1803 = vmul.f32 %v777, %v1248
        %v1804 = vmul.f32 %v778, %v1248
        %v1805 = vmul.f32 %v779, %v1248
        %v1806 = vmul.f32 %v780, %v1248
        %v1807 = vmul.f32 %v781, %v1248
        %v1808 = vmul.f32 %v782, %v1248
        %v1809 = vmul.f32 %v783, %v1248
        %v1810 = vmul.f32 %v784, %v1248
        %v1811 = vmul.f32 %v785, %v1248
        %v1812 = vmul.f32 %v786, %v1248
        %v1813 = vmul.f32 %v787, %v1248
        %v1814 = vmul.f32 %v788, %v1248
        %v1815 = vmul.f32 %v789, %v1248
        %v1816 = vmul.f32 %v790, %v1248
        %v1817 = vmul.f32 %v791, %v1248
        %v1818 = vmul.f32 %v792, %v1248
        %v1819 = vmul.f32 %v793, %v1248
        %v1820 = vmul.f32 %v794, %v1248
        %v1821 = vmul.f32 %v795, %v1248
        %v1822 = vmul.f32 %v796, %v1248
        %v1823 = vmul.f32 %v797, %v1248
        %v1824 = vmul.f32 %v798, %v1248
        %v1825 = vmul.f32 %v799, %v1248
        %v1826 = vmul.f32 %v800, %v1248
        %v1827 = vmul.f32 %v801, %v1248
        %v1828 = vmul.f32 %v802, %v1248
        %v1829 = vmul.f32 %v803, %v1248
        %v1830 = vmul.f32 %v804, %v1248
        %v1831 = vmul.f32 %v805, %v1248
        %v1832 = vmul.f32 %v806, %v1248
        %v1833 = vmul.f32 %v807, %v1248
        %v1834 = vmul.f32 %v808, %v1248
        %v1835 = vmul.f32 %v809, %v1248
        %v1836 = vmul.f32 %v810, %v1248
        %v1837 = vmul.f32 %v811, %v1248
        %v1838 = vmul.f32 %v812, %v1248
        %v1839 = vmul.f32 %v813, %v1248
        %v1840 = vmul.f32 %v814, %v1248
        %v1841 = vmul.f32 %v815, %v1248
        %v1842 = vmul.f32 %v816, %v1248
        %v1843 = vmul.f32 %v817, %v1248
        %v1844 = vmul.f32 %v818, %v1248
        %v1845 = vmul.f32 %v819, %v1248
        %v1846 = vmul.f32 %v820, %v1248
        %v1847 = vmul.f32 %v821, %v1248
        %v1848 = vmul.f32 %v822, %v1248
        %v1849 = vmul.f32 %v823, %v1248
        %v1850 = vmul.f32 %v824, %v1248
        %v1851 = vmul.f32 %v825, %v1248
        %v1852 = vmul.f32 %v826, %v1248
        %v1853 = vmul.f32 %v827, %v1248
        %v1854 = vmul.f32 %v828, %v1248
        %v1855 = vmul.f32 %v829, %v1248
        %v1856 = vmul.f32 %v830, %v1248
        %v1857 = vmul.f32 %v831, %v1248
        %v1858 = vmul.f32 %v832, %v1248
        %v1859 = vmul.f32 %v833, %v1248
        %v1860 = vmul.f32 %v834, %v1248
        %v1861 = vmul.f32 %v835, %v1248
        %v1862 = vmul.f32 %v836, %v1248
        %v1863 = vmul.f32 %v837, %v1248
        %v1864 = vmul.f32 %v838, %v1248
        %v1865 = vmul.f32 %v839, %v1248
        %v1866 = vmul.f32 %v840, %v1248
        %v1867 = vmul.f32 %v841, %v1248
        %v1868 = vmul.f32 %v842, %v1248
        %v1869 = vmul.f32 %v843, %v1248
        %v1870 = vmul.f32 %v844, %v1248
        %v1871 = vmul.f32 %v845, %v1248
        %v1872 = vmul.f32 %v846, %v1248
        %v1873 = vmul.f32 %v847, %v1248
        %v1874 = vmul.f32 %v848, %v1248
        %v1875 = vmul.f32 %v849, %v1248
        %v1876 = vmul.f32 %v850, %v1248
        %v1877 = vmul.f32 %v851, %v1248
        %v1878 = vmul.f32 %v852, %v1248
        %v1879 = vmul.f32 %v853, %v1248
        %v1880 = vmul.f32 %v854, %v1248
        %v1881 = vmul.f32 %v855, %v1248
        %v1882 = vmul.f32 %v856, %v1248
        %v1883 = vmul.f32 %v857, %v1248
        %v1884 = vmul.f32 %v858, %v1248
        %v1885 = vmul.f32 %v859, %v1248
        %v1886 = vmul.f32 %v860, %v1248
        %v1887 = vmul.f32 %v861, %v1248
        %v1888 = vmul.f32 %v862, %v1248
        %v1889 = vmul.f32 %v863, %v1248
        %v1890 = vmul.f32 %v864, %v1248
        %v1891 = vmul.f32 %v865, %v1248
        %v1892 = vmul.f32 %v866, %v1248
        %v1893 = vmul.f32 %v867, %v1248
        %v1894 = vmul.f32 %v868, %v1248
        %v1895 = vmul.f32 %v869, %v1248
        %v1896 = vmul.f32 %v870, %v1248
        %v1897 = vmul.f32 %v871, %v1248
        %v1898 = vmul.f32 %v872, %v1248
        %v1899 = vmul.f32 %v873, %v1248
        %v1900 = vmul.f32 %v874, %v1248
        %v1901 = vmul.f32 %v875, %v1248
        %v1902 = vmul.f32 %v876, %v1248
        %v1903 = vmul.f32 %v877, %v1248
        %v1904 = vmul.f32 %v878, %v1248
        %v1905 = vmul.f32 %v879, %v1248
        %v1906 = vmul.f32 %v880, %v1248
        %v1907 = vmul.f32 %v881, %v1248
        %v1908 = vmul.f32 %v882, %v1248
        %v1909 = vmul.f32 %v883, %v1248
        %v1910 = vmul.f32 %v884, %v1248
        %v1911 = vmul.f32 %v885, %v1248
        %v1912 = vmul.f32 %v886, %v1248
        %v1913 = vmul.f32 %v887, %v1248
        %v1914 = vmul.f32 %v888, %v1248
        %v1915 = vmul.f32 %v889, %v1248
        %v1916 = vmul.f32 %v890, %v1248
        %v1917 = vmul.f32 %v891, %v1248
        %v1918 = vmul.f32 %v892, %v1248
        %v1919 = vmul.f32 %v893, %v1248
        %v1920 = vmul.f32 %v894, %v1248
        %v1921 = vmul.f32 %v895, %v1248
        %v1922 = vmul.f32 %v896, %v1248
        %v1923 = vmul.f32 %v897, %v1248
        %v1924 = vmul.f32 %v898, %v1248
        %v1925 = vmul.f32 %v899, %v1248
        %v1926 = vmul.f32 %v900, %v1248
        %v1927 = vmul.f32 %v901, %v1248
        %v1928 = vmul.f32 %v902, %v1248
        %v1929 = vmul.f32 %v903, %v1248
        %v1930 = vmul.f32 %v904, %v1248
        %v1931 = vmul.f32 %v905, %v1248
        %v1932 = vmul.f32 %v906, %v1248
        %v1933 = vmul.f32 %v907, %v1248
        %v1934 = vmul.f32 %v908, %v1248
        %v1935 = vmul.f32 %v909, %v1248
        %v1936 = vmul.f32 %v910, %v1248
        %v1937 = vmul.f32 %v911, %v1248
        %v1938 = vmul.f32 %v912, %v1248
        %v1939 = vmul.f32 %v913, %v1248
        %v1940 = vmul.f32 %v914, %v1248
        %v1941 = vmul.f32 %v915, %v1248
        %v1942 = vmul.f32 %v916, %v1248
        %v1943 = vmul.f32 %v917, %v1248
        %v1944 = vmul.f32 %v918, %v1248
        %v1945 = vmul.f32 %v919, %v1248
        %v1946 = vmul.f32 %v920, %v1248
        %v1947 = vmul.f32 %v921, %v1248
        %v1948 = vmul.f32 %v922, %v1248
        %v1949 = vmul.f32 %v923, %v1248
        %v1950 = vmul.f32 %v924, %v1248
        %v1951 = vmul.f32 %v925, %v1248
        %v1952 = vmul.f32 %v926, %v1248
        %v1953 = vmul.f32 %v927, %v1248
        %v1954 = vmul.f32 %v928, %v1248
        %v1955 = vmul.f32 %v929, %v1248
        %v1956 = vmul.f32 %v930, %v1248
        %v1957 = vmul.f32 %v931, %v1248
        %v1958 = vmul.f32 %v932, %v1248
        %v1959 = vmul.f32 %v933, %v1248
        %v1960 = vmul.f32 %v934, %v1248
        %v1961 = vmul.f32 %v935, %v1248
        %v1962 = vmul.f32 %v936, %v1248
        %v1963 = vmul.f32 %v937, %v1248
        %v1964 = vmul.f32 %v938, %v1248
        %v1965 = vmul.f32 %v939, %v1248
        %v1966 = vmul.f32 %v940, %v1248
        %v1967 = vmul.f32 %v941, %v1248
        %v1968 = vmul.f32 %v942, %v1248
        %v1969 = vmul.f32 %v943, %v1248
        %v1970 = vmul.f32 %v944, %v1248
        %v1971 = vmul.f32 %v945, %v1248
        %v1972 = vmul.f32 %v946, %v1248
        %v1973 = vmul.f32 %v947, %v1248
        %v1974 = vmul.f32 %v948, %v1248
        %v1975 = vmul.f32 %v949, %v1248
        %v1976 = vmul.f32 %v950, %v1248
        %v1977 = vmul.f32 %v951, %v1248
        %v1978 = vmul.f32 %v952, %v1248
        %v1979 = vmul.f32 %v953, %v1248
        %v1980 = vmul.f32 %v954, %v1248
        %v1981 = vmul.f32 %v955, %v1248
        %v1982 = vmul.f32 %v956, %v1248
        %v1983 = vmul.f32 %v957, %v1248
        %v1984 = vmul.f32 %v958, %v1248
        %v1985 = vmul.f32 %v959, %v1248
        %v1986 = vmul.f32 %v960, %v1248
        %v1987 = vmul.f32 %v961, %v1248
        %v1988 = vmul.f32 %v962, %v1248
        %v1989 = vmul.f32 %v963, %v1248
        %v1990 = vmul.f32 %v964, %v1248
        %v1991 = vmul.f32 %v965, %v1248
        %v1992 = vmul.f32 %v966, %v1248
        %v1993 = vmul.f32 %v967, %v1248
        %v1994 = vmul.f32 %v968, %v1248
        %v1995 = vmul.f32 %v969, %v1248
        %v1996 = vmul.f32 %v970, %v1248
        %v1997 = vmul.f32 %v971, %v1248
        %v1998 = vmul.f32 %v972, %v1248
        %v1999 = vmul.f32 %v973, %v1248
        %v2000 = vmul.f32 %v974, %v1248
        %v2001 = vmul.f32 %v975, %v1248
        %v2002 = vmul.f32 %v976, %v1248
        %v2003 = vmul.f32 %v977, %v1248
        %v2004 = vmul.f32 %v978, %v1248
        %v2005 = vmul.f32 %v979, %v1248
        %v2006 = vmul.f32 %v980, %v1248
        %v2007 = vmul.f32 %v981, %v1248
        %v2008 = vmul.f32 %v982, %v1248
        %v2009 = vmul.f32 %v983, %v1248
        %v2010 = vmul.f32 %v984, %v1248
        %v2011 = vmul.f32 %v985, %v1248
        %v2012 = vmul.f32 %v986, %v1248
        %v2013 = vmul.f32 %v987, %v1248
        %v2014 = vmul.f32 %v988, %v1248
        %v2015 = vmul.f32 %v989, %v1248
        %v2016 = vmul.f32 %v990, %v1248
        %v2017 = vmul.f32 %v991, %v1248
        %v2018 = vmul.f32 %v992, %v1248
        %v2019 = vmul.f32 %v993, %v1248
        %v2020 = vmul.f32 %v994, %v1248
        %v2021 = vmul.f32 %v995, %v1248
        %v2022 = vmul.f32 %v996, %v1248
        %v2023 = vmul.f32 %v997, %v1248
        %v2024 = vmul.f32 %v998, %v1248
        %v2025 = vmul.f32 %v999, %v1248
        %v2026 = vmul.f32 %v1000, %v1248
        %v2027 = vmul.f32 %v1001, %v1248
        %v2028 = vmul.f32 %v1002, %v1248
        %v2029 = vmul.f32 %v1003, %v1248
        %v2030 = vmul.f32 %v1004, %v1248
        %v2031 = vmul.f32 %v1005, %v1248
        %v2032 = vmul.f32 %v1006, %v1248
        %v2033 = vmul.f32 %v1007, %v1248
        %v2034 = vmul.f32 %v1008, %v1248
        %v2035 = vmul.f32 %v1009, %v1248
        %v2036 = vmul.f32 %v1010, %v1248
        %v2037 = vmul.f32 %v1011, %v1248
        %v2038 = vmul.f32 %v1012, %v1248
        %v2039 = vmul.f32 %v1013, %v1248
        %v2040 = vmul.f32 %v1014, %v1248
        %v2041 = vmul.f32 %v1015, %v1248
        %v2042 = vmul.f32 %v1016, %v1248
        %v2043 = vmul.f32 %v1017, %v1248
        %v2044 = vmul.f32 %v1018, %v1248
        %v2045 = vmul.f32 %v1019, %v1248
        %v2046 = vmul.f32 %v1020, %v1248
        %v2047 = vmul.f32 %v1021, %v1248
        %v2048 = vmul.f32 %v1022, %v1248
        %v2049 = vmul.f32 %v1023, %v1248
        %v2050 = vmul.f32 %v1024, %v1248
        %v2051 = vmul.f32 %v1025, %v1248
        %v2052 = vmul.f32 %v1026, %v1248
        %v2053 = vmul.f32 %v1027, %v1248
        %v2054 = vmul.f32 %v1028, %v1248
        %v2055 = vmul.f32 %v1029, %v1248
        %v2056 = vmul.f32 %v1030, %v1248
        %v2057 = vmul.f32 %v1031, %v1248
        %v2058 = vmul.f32 %v1032, %v1248
        %v2059 = vmul.f32 %v1033, %v1248
        %v2060 = vmul.f32 %v1034, %v1248
        %v2061 = vmul.f32 %v1035, %v1248
        %v2062 = vmul.f32 %v1036, %v1248
        %v2063 = vmul.f32 %v1037, %v1248
        %v2064 = vmul.f32 %v1038, %v1248
        %v2065 = vmul.f32 %v1039, %v1248
        %v2066 = vmul.f32 %v1040, %v1248
        %v2067 = vmul.f32 %v1041, %v1248
        %v2068 = vmul.f32 %v1042, %v1248
        %v2069 = vmul.f32 %v1043, %v1248
        %v2070 = vmul.f32 %v1044, %v1248
        %v2071 = vmul.f32 %v1045, %v1248
        %v2072 = vmul.f32 %v1046, %v1248
        %v2073 = vmul.f32 %v1047, %v1248
        %v2074 = vmul.f32 %v1048, %v1248
        %v2075 = vmul.f32 %v1049, %v1248
        %v2076 = vmul.f32 %v1050, %v1248
        %v2077 = vmul.f32 %v1051, %v1248
        %v2078 = vmul.f32 %v1052, %v1248
        %v2079 = vmul.f32 %v1053, %v1248
        %v2080 = vmul.f32 %v1054, %v1248
        %v2081 = vmul.f32 %v1055, %v1248
        %v2082 = vmul.f32 %v1056, %v1248
        %v2083 = vmul.f32 %v1057, %v1248
        %v2084 = vmul.f32 %v1058, %v1248
        %v2085 = vmul.f32 %v1059, %v1248
        %v2086 = vmul.f32 %v1060, %v1248
        %v2087 = vmul.f32 %v1061, %v1248
        %v2088 = vmul.f32 %v1062, %v1248
        %v2089 = vmul.f32 %v1063, %v1248
        %v2090 = vmul.f32 %v1064, %v1248
        %v2091 = vmul.f32 %v1065, %v1248
        %v2092 = vmul.f32 %v1066, %v1248
        %v2093 = vmul.f32 %v1067, %v1248
        %v2094 = vmul.f32 %v1068, %v1248
        %v2095 = vmul.f32 %v1069, %v1248
        %v2096 = vmul.f32 %v1070, %v1248
        %v2097 = vmul.f32 %v1071, %v1248
        %v2098 = vmul.f32 %v1072, %v1248
        %v2099 = vmul.f32 %v1073, %v1248
        %v2100 = vmul.f32 %v1074, %v1248
        %v2101 = vmul.f32 %v1075, %v1248
        %v2102 = vmul.f32 %v1076, %v1248
        %v2103 = vmul.f32 %v1077, %v1248
        %v2104 = vmul.f32 %v1078, %v1248
        %v2105 = vmul.f32 %v1079, %v1248
        %v2106 = vmul.f32 %v1080, %v1248
        %v2107 = vmul.f32 %v1081, %v1248
        %v2108 = vmul.f32 %v1082, %v1248
        %v2109 = vmul.f32 %v1083, %v1248
        %v2110 = vmul.f32 %v1084, %v1248
        %v2111 = vmul.f32 %v1085, %v1248
        %v2112 = vmul.f32 %v1086, %v1248
        %v2113 = vmul.f32 %v1087, %v1248
        %v2114 = vmul.f32 %v1088, %v1248
        %v2115 = vmul.f32 %v1089, %v1248
        %v2116 = vmul.f32 %v1090, %v1248
        %v2117 = vmul.f32 %v1091, %v1248
        %v2118 = vmul.f32 %v1092, %v1248
        %v2119 = vmul.f32 %v1093, %v1248
        %v2120 = vmul.f32 %v1094, %v1248
        %v2121 = vmul.f32 %v1095, %v1248
        %v2122 = vmul.f32 %v1096, %v1248
        %v2123 = vmul.f32 %v1097, %v1248
        %v2124 = vmul.f32 %v1098, %v1248
        %v2125 = vmul.f32 %v1099, %v1248
        %v2126 = vmul.f32 %v1100, %v1248
        %v2127 = vmul.f32 %v1101, %v1248
        %v2128 = vmul.f32 %v1102, %v1248
        %v2129 = vmul.f32 %v1103, %v1248
        %v2130 = vmul.f32 %v1104, %v1248
        %v2131 = vmul.f32 %v1105, %v1248
        %v2132 = vmul.f32 %v1106, %v1248
        %v2133 = vmul.f32 %v1107, %v1248
        %v2134 = vmul.f32 %v1108, %v1248
        %v2135 = vmul.f32 %v1109, %v1248
        %v2136 = vmul.f32 %v1110, %v1248
        %v2137 = vmul.f32 %v1111, %v1248
        %v2138 = vmul.f32 %v1112, %v1248
        %v2139 = vmul.f32 %v1113, %v1248
        %v2140 = vmul.f32 %v1114, %v1248
        %v2141 = vmul.f32 %v1115, %v1248
        %v2142 = vmul.f32 %v1116, %v1248
        %v2143 = vmul.f32 %v1117, %v1248
        %v2144 = vmul.f32 %v1118, %v1248
        %v2145 = vmul.f32 %v1119, %v1248
        %v2146 = vmul.f32 %v1120, %v1248
        %v2147 = vmul.f32 %v1121, %v1248
        %v2148 = vmul.f32 %v1122, %v1248
        %v2149 = vmul.f32 %v1123, %v1248
        %v2150 = vmul.f32 %v1124, %v1248
        %v2151 = vmul.f32 %v1125, %v1248
        %v2152 = vmul.f32 %v1126, %v1248
        %v2153 = vmul.f32 %v1127, %v1248
        %v2154 = vmul.f32 %v1128, %v1248
        %v2155 = vmul.f32 %v1129, %v1248
        %v2156 = vmul.f32 %v1130, %v1248
        %v2157 = vmul.f32 %v1131, %v1248
        %v2158 = vmul.f32 %v1132, %v1248
        %v2159 = vmul.f32 %v1133, %v1248
        %v2160 = vmul.f32 %v1134, %v1248
        %v2161 = vmul.f32 %v1135, %v1248
        %v2162 = vmul.f32 %v1136, %v1248
        %v2163 = vmul.f32 %v1137, %v1248
        %v2164 = vmul.f32 %v1138, %v1248
        %v2165 = vmul.f32 %v1139, %v1248
        %v2166 = vmul.f32 %v1140, %v1248
        %v2167 = vmul.f32 %v1141, %v1248
        %v2168 = vmul.f32 %v1142, %v1248
        %v2169 = vmul.f32 %v1143, %v1248
        %v2170 = vmul.f32 %v1144, %v1248
        %v2171 = vmul.f32 %v1145, %v1248
        %v2172 = vmul.f32 %v1146, %v1248
        %v2173 = vmul.f32 %v1147, %v1248
        %v2174 = vmul.f32 %v1148, %v1248
        %v2175 = vmul.f32 %v1149, %v1248
        %v2176 = vmul.f32 %v1150, %v1248
        %v2177 = vmul.f32 %v1151, %v1248
        %v2178 = vmul.f32 %v1152, %v1248
        %v2179 = vmul.f32 %v1153, %v1248
        %v2180 = vmul.f32 %v1154, %v1248
        %v2181 = vmul.f32 %v1155, %v1248
        %v2182 = vmul.f32 %v1156, %v1248
        %v2183 = vmul.f32 %v1157, %v1248
        %v2184 = vmul.f32 %v1158, %v1248
        %v2185 = vmul.f32 %v1159, %v1248
        %v2186 = vmul.f32 %v1160, %v1248
        %v2187 = vmul.f32 %v1161, %v1248
        %v2188 = vmul.f32 %v1162, %v1248
        %v2189 = vmul.f32 %v1163, %v1248
        %v2190 = vmul.f32 %v1164, %v1248
        %v2191 = vmul.f32 %v1165, %v1248
        %v2192 = vmul.f32 %v1166, %v1248
        %v2193 = vmul.f32 %v1167, %v1248
        %v2194 = vmul.f32 %v1168, %v1248
        %v2195 = vmul.f32 %v1169, %v1248
        %v2196 = vmul.f32 %v1170, %v1248
        %v2197 = vmul.f32 %v1171, %v1248
        %v2198 = vmul.f32 %v1172, %v1248
        %v2199 = vmul.f32 %v1173, %v1248
        %v2200 = vmul.f32 %v1174, %v1248
        %v2201 = vmul.f32 %v1175, %v1248
        %v2202 = vmul.f32 %v1176, %v1248
        %v2203 = vmul.f32 %v1177, %v1248
        %v2204 = vmul.f32 %v1178, %v1248
        %v2205 = vmul.f32 %v1179, %v1248
        %v2206 = vmul.f32 %v1180, %v1248
        %v2207 = vmul.f32 %v1181, %v1248
        %v2208 = vmul.f32 %v1182, %v1248
        %v2209 = vmul.f32 %v1183, %v1248
        %v2210 = vmul.f32 %v1184, %v1248
        %v2211 = vmul.f32 %v1185, %v1248
        %v2212 = vmul.f32 %v1186, %v1248
        %v2213 = vmul.f32 %v1187, %v1248
        %v2214 = vmul.f32 %v1188, %v1248
        %v2215 = vmul.f32 %v1189, %v1248
        %v2216 = vmul.f32 %v1190, %v1248
        %v2217 = vmul.f32 %v1191, %v1248
        %v2218 = vmul.f32 %v1192, %v1248
        %v2219 = vmul.f32 %v1193, %v1248
        %v2220 = vmul.f32 %v1194, %v1248
        %v2221 = vmul.f32 %v1195, %v1248
        %v2222 = vmul.f32 %v1196, %v1248
        %v2223 = vmul.f32 %v1197, %v1248
        %v2224 = vmul.f32 %v1198, %v1248
        %v2225 = vmul.f32 %v1199, %v1248
        %v2226 = vmul.f32 %v1200, %v1248
        %v2227 = vmul.f32 %v1201, %v1248
        %v2228 = vmul.f32 %v1202, %v1248
        %v2229 = vmul.f32 %v1203, %v1248
        %v2230 = vmul.f32 %v1204, %v1248
        %v2231 = vmul.f32 %v1205, %v1248
        %v2232 = vmul.f32 %v1206, %v1248
        %v2233 = vmul.f32 %v1207, %v1248
        %v2234 = vmul.f32 %v1208, %v1248
        %v2235 = vmul.f32 %v1209, %v1248
        %v2236 = vmul.f32 %v1210, %v1248
        %v2237 = vmul.f32 %v1211, %v1248
        %v2238 = vmul.f32 %v1212, %v1248
        %v2239 = vmul.f32 %v1213, %v1248
        %v2240 = vmul.f32 %v1214, %v1248
        %v2241 = vmul.f32 %v1215, %v1248
        %v2242 = vmul.f32 %v1216, %v1248
        %v2243 = vmul.f32 %v1217, %v1248
        %v2244 = vmul.f32 %v1218, %v1248
        %v2245 = vmul.f32 %v1219, %v1248
        %v2246 = vmul.f32 %v1220, %v1248
        %v2247 = vmul.f32 %v1221, %v1248
        %v2248 = vmul.f32 %v1222, %v1248
        %v2249 = vmul.f32 %v1223, %v1248
        %v2250 = vmul.f32 %v1224, %v1248
        %v2251 = vmul.f32 %v1225, %v1248
        %v2252 = vmul.f32 %v1226, %v1248
        %v2253 = vmul.f32 %v1227, %v1248
        %v2254 = vmul.f32 %v1228, %v1248
        %v2255 = vmul.f32 %v1229, %v1248
        %v2256 = vmul.f32 %v1230, %v1248
        %v2257 = vmul.f32 %v1231, %v1248
        %v2258 = vmul.f32 %v1232, %v1248
        %v2259 = vmul.f32 %v1233, %v1248
        %v2260 = vmul.f32 %v1234, %v1248
        %v2261 = vmul.f32 %v1235, %v1248
        %v2262 = vmul.f32 %v1236, %v1248
        %v2263 = vmul.f32 %v1237, %v1248
        %v2264 = vmul.f32 %v1238, %v1248
        %v2265 = vmul.f32 %v1239, %v1248
        %v2266 = vmul.f32 %v1240, %v1248
        %v2267 = vmul.f32 %v1241, %v1248
        %v2268 = vmul.f32 %v1242, %v1248
        %v2269 = vmul.f32 %v1243, %v1248
        %v2270 = vmul.f32 %v1244, %v1248
        %v2271 = vmul.f32 %v1245, %v1248
        %v2272 = vmul.f32 %v1246, %v1248
        %s2273 = sld [smem:[#allocation3]]
        %v2274 = vstv %s2273
        %v2275 = vadd.f32 %v1249, %v2274
        %v2276 = vadd.f32 %v1250, %v2274
        %v2277 = vadd.f32 %v1251, %v2274
        %v2278 = vadd.f32 %v1252, %v2274
        %v2279 = vadd.f32 %v1253, %v2274
        %v2280 = vadd.f32 %v1254, %v2274
        %v2281 = vadd.f32 %v1255, %v2274
        %v2282 = vadd.f32 %v1256, %v2274
        %v2283 = vadd.f32 %v1257, %v2274
        %v2284 = vadd.f32 %v1258, %v2274
        %v2285 = vadd.f32 %v1259, %v2274
        %v2286 = vadd.f32 %v1260, %v2274
        %v2287 = vadd.f32 %v1261, %v2274
        %v2288 = vadd.f32 %v1262, %v2274
        %v2289 = vadd.f32 %v1263, %v2274
        %v2290 = vadd.f32 %v1264, %v2274
        %v2291 = vadd.f32 %v1265, %v2274
        %v2292 = vadd.f32 %v1266, %v2274
        %v2293 = vadd.f32 %v1267, %v2274
        %v2294 = vadd.f32 %v1268, %v2274
        %v2295 = vadd.f32 %v1269, %v2274
        %v2296 = vadd.f32 %v1270, %v2274
        %v2297 = vadd.f32 %v1271, %v2274
        %v2298 = vadd.f32 %v1272, %v2274
        %v2299 = vadd.f32 %v1273, %v2274
        %v2300 = vadd.f32 %v1274, %v2274
        %v2301 = vadd.f32 %v1275, %v2274
        %v2302 = vadd.f32 %v1276, %v2274
        %v2303 = vadd.f32 %v1277, %v2274
        %v2304 = vadd.f32 %v1278, %v2274
        %v2305 = vadd.f32 %v1279, %v2274
        %v2306 = vadd.f32 %v1280, %v2274
        %v2307 = vadd.f32 %v1281, %v2274
        %v2308 = vadd.f32 %v1282, %v2274
        %v2309 = vadd.f32 %v1283, %v2274
        %v2310 = vadd.f32 %v1284, %v2274
        %v2311 = vadd.f32 %v1285, %v2274
        %v2312 = vadd.f32 %v1286, %v2274
        %v2313 = vadd.f32 %v1287, %v2274
        %v2314 = vadd.f32 %v1288, %v2274
        %v2315 = vadd.f32 %v1289, %v2274
        %v2316 = vadd.f32 %v1290, %v2274
        %v2317 = vadd.f32 %v1291, %v2274
        %v2318 = vadd.f32 %v1292, %v2274
        %v2319 = vadd.f32 %v1293, %v2274
        %v2320 = vadd.f32 %v1294, %v2274
        %v2321 = vadd.f32 %v1295, %v2274
        %v2322 = vadd.f32 %v1296, %v2274
        %v2323 = vadd.f32 %v1297, %v2274
        %v2324 = vadd.f32 %v1298, %v2274
        %v2325 = vadd.f32 %v1299, %v2274
        %v2326 = vadd.f32 %v1300, %v2274
        %v2327 = vadd.f32 %v1301, %v2274
        %v2328 = vadd.f32 %v1302, %v2274
        %v2329 = vadd.f32 %v1303, %v2274
        %v2330 = vadd.f32 %v1304, %v2274
        %v2331 = vadd.f32 %v1305, %v2274
        %v2332 = vadd.f32 %v1306, %v2274
        %v2333 = vadd.f32 %v1307, %v2274
        %v2334 = vadd.f32 %v1308, %v2274
        %v2335 = vadd.f32 %v1309, %v2274
        %v2336 = vadd.f32 %v1310, %v2274
        %v2337 = vadd.f32 %v1311, %v2274
        %v2338 = vadd.f32 %v1312, %v2274
        %v2339 = vadd.f32 %v1313, %v2274
        %v2340 = vadd.f32 %v1314, %v2274
        %v2341 = vadd.f32 %v1315, %v2274
        %v2342 = vadd.f32 %v1316, %v2274
        %v2343 = vadd.f32 %v1317, %v2274
        %v2344 = vadd.f32 %v1318, %v2274
        %v2345 = vadd.f32 %v1319, %v2274
        %v2346 = vadd.f32 %v1320, %v2274
        %v2347 = vadd.f32 %v1321, %v2274
        %v2348 = vadd.f32 %v1322, %v2274
        %v2349 = vadd.f32 %v1323, %v2274
        %v2350 = vadd.f32 %v1324, %v2274
        %v2351 = vadd.f32 %v1325, %v2274
        %v2352 = vadd.f32 %v1326, %v2274
        %v2353 = vadd.f32 %v1327, %v2274
        %v2354 = vadd.f32 %v1328, %v2274
        %v2355 = vadd.f32 %v1329, %v2274
        %v2356 = vadd.f32 %v1330, %v2274
        %v2357 = vadd.f32 %v1331, %v2274
        %v2358 = vadd.f32 %v1332, %v2274
        %v2359 = vadd.f32 %v1333, %v2274
        %v2360 = vadd.f32 %v1334, %v2274
        %v2361 = vadd.f32 %v1335, %v2274
        %v2362 = vadd.f32 %v1336, %v2274
        %v2363 = vadd.f32 %v1337, %v2274
        %v2364 = vadd.f32 %v1338, %v2274
        %v2365 = vadd.f32 %v1339, %v2274
        %v2366 = vadd.f32 %v1340, %v2274
        %v2367 = vadd.f32 %v1341, %v2274
        %v2368 = vadd.f32 %v1342, %v2274
        %v2369 = vadd.f32 %v1343, %v2274
        %v2370 = vadd.f32 %v1344, %v2274
        %v2371 = vadd.f32 %v1345, %v2274
        %v2372 = vadd.f32 %v1346, %v2274
        %v2373 = vadd.f32 %v1347, %v2274
        %v2374 = vadd.f32 %v1348, %v2274
        %v2375 = vadd.f32 %v1349, %v2274
        %v2376 = vadd.f32 %v1350, %v2274
        %v2377 = vadd.f32 %v1351, %v2274
        %v2378 = vadd.f32 %v1352, %v2274
        %v2379 = vadd.f32 %v1353, %v2274
        %v2380 = vadd.f32 %v1354, %v2274
        %v2381 = vadd.f32 %v1355, %v2274
        %v2382 = vadd.f32 %v1356, %v2274
        %v2383 = vadd.f32 %v1357, %v2274
        %v2384 = vadd.f32 %v1358, %v2274
        %v2385 = vadd.f32 %v1359, %v2274
        %v2386 = vadd.f32 %v1360, %v2274
        %v2387 = vadd.f32 %v1361, %v2274
        %v2388 = vadd.f32 %v1362, %v2274
        %v2389 = vadd.f32 %v1363, %v2274
        %v2390 = vadd.f32 %v1364, %v2274
        %v2391 = vadd.f32 %v1365, %v2274
        %v2392 = vadd.f32 %v1366, %v2274
        %v2393 = vadd.f32 %v1367, %v2274
        %v2394 = vadd.f32 %v1368, %v2274
        %v2395 = vadd.f32 %v1369, %v2274
        %v2396 = vadd.f32 %v1370, %v2274
        %v2397 = vadd.f32 %v1371, %v2274
        %v2398 = vadd.f32 %v1372, %v2274
        %v2399 = vadd.f32 %v1373, %v2274
        %v2400 = vadd.f32 %v1374, %v2274
        %v2401 = vadd.f32 %v1375, %v2274
        %v2402 = vadd.f32 %v1376, %v2274
        %v2403 = vadd.f32 %v1377, %v2274
        %v2404 = vadd.f32 %v1378, %v2274
        %v2405 = vadd.f32 %v1379, %v2274
        %v2406 = vadd.f32 %v1380, %v2274
        %v2407 = vadd.f32 %v1381, %v2274
        %v2408 = vadd.f32 %v1382, %v2274
        %v2409 = vadd.f32 %v1383, %v2274
        %v2410 = vadd.f32 %v1384, %v2274
        %v2411 = vadd.f32 %v1385, %v2274
        %v2412 = vadd.f32 %v1386, %v2274
        %v2413 = vadd.f32 %v1387, %v2274
        %v2414 = vadd.f32 %v1388, %v2274
        %v2415 = vadd.f32 %v1389, %v2274
        %v2416 = vadd.f32 %v1390, %v2274
        %v2417 = vadd.f32 %v1391, %v2274
        %v2418 = vadd.f32 %v1392, %v2274
        %v2419 = vadd.f32 %v1393, %v2274
        %v2420 = vadd.f32 %v1394, %v2274
        %v2421 = vadd.f32 %v1395, %v2274
        %v2422 = vadd.f32 %v1396, %v2274
        %v2423 = vadd.f32 %v1397, %v2274
        %v2424 = vadd.f32 %v1398, %v2274
        %v2425 = vadd.f32 %v1399, %v2274
        %v2426 = vadd.f32 %v1400, %v2274
        %v2427 = vadd.f32 %v1401, %v2274
        %v2428 = vadd.f32 %v1402, %v2274
        %v2429 = vadd.f32 %v1403, %v2274
        %v2430 = vadd.f32 %v1404, %v2274
        %v2431 = vadd.f32 %v1405, %v2274
        %v2432 = vadd.f32 %v1406, %v2274
        %v2433 = vadd.f32 %v1407, %v2274
        %v2434 = vadd.f32 %v1408, %v2274
        %v2435 = vadd.f32 %v1409, %v2274
        %v2436 = vadd.f32 %v1410, %v2274
        %v2437 = vadd.f32 %v1411, %v2274
        %v2438 = vadd.f32 %v1412, %v2274
        %v2439 = vadd.f32 %v1413, %v2274
        %v2440 = vadd.f32 %v1414, %v2274
        %v2441 = vadd.f32 %v1415, %v2274
        %v2442 = vadd.f32 %v1416, %v2274
        %v2443 = vadd.f32 %v1417, %v2274
        %v2444 = vadd.f32 %v1418, %v2274
        %v2445 = vadd.f32 %v1419, %v2274
        %v2446 = vadd.f32 %v1420, %v2274
        %v2447 = vadd.f32 %v1421, %v2274
        %v2448 = vadd.f32 %v1422, %v2274
        %v2449 = vadd.f32 %v1423, %v2274
        %v2450 = vadd.f32 %v1424, %v2274
        %v2451 = vadd.f32 %v1425, %v2274
        %v2452 = vadd.f32 %v1426, %v2274
        %v2453 = vadd.f32 %v1427, %v2274
        %v2454 = vadd.f32 %v1428, %v2274
        %v2455 = vadd.f32 %v1429, %v2274
        %v2456 = vadd.f32 %v1430, %v2274
        %v2457 = vadd.f32 %v1431, %v2274
        %v2458 = vadd.f32 %v1432, %v2274
        %v2459 = vadd.f32 %v1433, %v2274
        %v2460 = vadd.f32 %v1434, %v2274
        %v2461 = vadd.f32 %v1435, %v2274
        %v2462 = vadd.f32 %v1436, %v2274
        %v2463 = vadd.f32 %v1437, %v2274
        %v2464 = vadd.f32 %v1438, %v2274
        %v2465 = vadd.f32 %v1439, %v2274
        %v2466 = vadd.f32 %v1440, %v2274
        %v2467 = vadd.f32 %v1441, %v2274
        %v2468 = vadd.f32 %v1442, %v2274
        %v2469 = vadd.f32 %v1443, %v2274
        %v2470 = vadd.f32 %v1444, %v2274
        %v2471 = vadd.f32 %v1445, %v2274
        %v2472 = vadd.f32 %v1446, %v2274
        %v2473 = vadd.f32 %v1447, %v2274
        %v2474 = vadd.f32 %v1448, %v2274
        %v2475 = vadd.f32 %v1449, %v2274
        %v2476 = vadd.f32 %v1450, %v2274
        %v2477 = vadd.f32 %v1451, %v2274
        %v2478 = vadd.f32 %v1452, %v2274
        %v2479 = vadd.f32 %v1453, %v2274
        %v2480 = vadd.f32 %v1454, %v2274
        %v2481 = vadd.f32 %v1455, %v2274
        %v2482 = vadd.f32 %v1456, %v2274
        %v2483 = vadd.f32 %v1457, %v2274
        %v2484 = vadd.f32 %v1458, %v2274
        %v2485 = vadd.f32 %v1459, %v2274
        %v2486 = vadd.f32 %v1460, %v2274
        %v2487 = vadd.f32 %v1461, %v2274
        %v2488 = vadd.f32 %v1462, %v2274
        %v2489 = vadd.f32 %v1463, %v2274
        %v2490 = vadd.f32 %v1464, %v2274
        %v2491 = vadd.f32 %v1465, %v2274
        %v2492 = vadd.f32 %v1466, %v2274
        %v2493 = vadd.f32 %v1467, %v2274
        %v2494 = vadd.f32 %v1468, %v2274
        %v2495 = vadd.f32 %v1469, %v2274
        %v2496 = vadd.f32 %v1470, %v2274
        %v2497 = vadd.f32 %v1471, %v2274
        %v2498 = vadd.f32 %v1472, %v2274
        %v2499 = vadd.f32 %v1473, %v2274
        %v2500 = vadd.f32 %v1474, %v2274
        %v2501 = vadd.f32 %v1475, %v2274
        %v2502 = vadd.f32 %v1476, %v2274
        %v2503 = vadd.f32 %v1477, %v2274
        %v2504 = vadd.f32 %v1478, %v2274
        %v2505 = vadd.f32 %v1479, %v2274
        %v2506 = vadd.f32 %v1480, %v2274
        %v2507 = vadd.f32 %v1481, %v2274
        %v2508 = vadd.f32 %v1482, %v2274
        %v2509 = vadd.f32 %v1483, %v2274
        %v2510 = vadd.f32 %v1484, %v2274
        %v2511 = vadd.f32 %v1485, %v2274
        %v2512 = vadd.f32 %v1486, %v2274
        %v2513 = vadd.f32 %v1487, %v2274
        %v2514 = vadd.f32 %v1488, %v2274
        %v2515 = vadd.f32 %v1489, %v2274
        %v2516 = vadd.f32 %v1490, %v2274
        %v2517 = vadd.f32 %v1491, %v2274
        %v2518 = vadd.f32 %v1492, %v2274
        %v2519 = vadd.f32 %v1493, %v2274
        %v2520 = vadd.f32 %v1494, %v2274
        %v2521 = vadd.f32 %v1495, %v2274
        %v2522 = vadd.f32 %v1496, %v2274
        %v2523 = vadd.f32 %v1497, %v2274
        %v2524 = vadd.f32 %v1498, %v2274
        %v2525 = vadd.f32 %v1499, %v2274
        %v2526 = vadd.f32 %v1500, %v2274
        %v2527 = vadd.f32 %v1501, %v2274
        %v2528 = vadd.f32 %v1502, %v2274
        %v2529 = vadd.f32 %v1503, %v2274
        %v2530 = vadd.f32 %v1504, %v2274
        %v2531 = vadd.f32 %v1505, %v2274
        %v2532 = vadd.f32 %v1506, %v2274
        %v2533 = vadd.f32 %v1507, %v2274
        %v2534 = vadd.f32 %v1508, %v2274
        %v2535 = vadd.f32 %v1509, %v2274
        %v2536 = vadd.f32 %v1510, %v2274
        %v2537 = vadd.f32 %v1511, %v2274
        %v2538 = vadd.f32 %v1512, %v2274
        %v2539 = vadd.f32 %v1513, %v2274
        %v2540 = vadd.f32 %v1514, %v2274
        %v2541 = vadd.f32 %v1515, %v2274
        %v2542 = vadd.f32 %v1516, %v2274
        %v2543 = vadd.f32 %v1517, %v2274
        %v2544 = vadd.f32 %v1518, %v2274
        %v2545 = vadd.f32 %v1519, %v2274
        %v2546 = vadd.f32 %v1520, %v2274
        %v2547 = vadd.f32 %v1521, %v2274
        %v2548 = vadd.f32 %v1522, %v2274
        %v2549 = vadd.f32 %v1523, %v2274
        %v2550 = vadd.f32 %v1524, %v2274
        %v2551 = vadd.f32 %v1525, %v2274
        %v2552 = vadd.f32 %v1526, %v2274
        %v2553 = vadd.f32 %v1527, %v2274
        %v2554 = vadd.f32 %v1528, %v2274
        %v2555 = vadd.f32 %v1529, %v2274
        %v2556 = vadd.f32 %v1530, %v2274
        %v2557 = vadd.f32 %v1531, %v2274
        %v2558 = vadd.f32 %v1532, %v2274
        %v2559 = vadd.f32 %v1533, %v2274
        %v2560 = vadd.f32 %v1534, %v2274
        %v2561 = vadd.f32 %v1535, %v2274
        %v2562 = vadd.f32 %v1536, %v2274
        %v2563 = vadd.f32 %v1537, %v2274
        %v2564 = vadd.f32 %v1538, %v2274
        %v2565 = vadd.f32 %v1539, %v2274
        %v2566 = vadd.f32 %v1540, %v2274
        %v2567 = vadd.f32 %v1541, %v2274
        %v2568 = vadd.f32 %v1542, %v2274
        %v2569 = vadd.f32 %v1543, %v2274
        %v2570 = vadd.f32 %v1544, %v2274
        %v2571 = vadd.f32 %v1545, %v2274
        %v2572 = vadd.f32 %v1546, %v2274
        %v2573 = vadd.f32 %v1547, %v2274
        %v2574 = vadd.f32 %v1548, %v2274
        %v2575 = vadd.f32 %v1549, %v2274
        %v2576 = vadd.f32 %v1550, %v2274
        %v2577 = vadd.f32 %v1551, %v2274
        %v2578 = vadd.f32 %v1552, %v2274
        %v2579 = vadd.f32 %v1553, %v2274
        %v2580 = vadd.f32 %v1554, %v2274
        %v2581 = vadd.f32 %v1555, %v2274
        %v2582 = vadd.f32 %v1556, %v2274
        %v2583 = vadd.f32 %v1557, %v2274
        %v2584 = vadd.f32 %v1558, %v2274
        %v2585 = vadd.f32 %v1559, %v2274
        %v2586 = vadd.f32 %v1560, %v2274
        %v2587 = vadd.f32 %v1561, %v2274
        %v2588 = vadd.f32 %v1562, %v2274
        %v2589 = vadd.f32 %v1563, %v2274
        %v2590 = vadd.f32 %v1564, %v2274
        %v2591 = vadd.f32 %v1565, %v2274
        %v2592 = vadd.f32 %v1566, %v2274
        %v2593 = vadd.f32 %v1567, %v2274
        %v2594 = vadd.f32 %v1568, %v2274
        %v2595 = vadd.f32 %v1569, %v2274
        %v2596 = vadd.f32 %v1570, %v2274
        %v2597 = vadd.f32 %v1571, %v2274
        %v2598 = vadd.f32 %v1572, %v2274
        %v2599 = vadd.f32 %v1573, %v2274
        %v2600 = vadd.f32 %v1574, %v2274
        %v2601 = vadd.f32 %v1575, %v2274
        %v2602 = vadd.f32 %v1576, %v2274
        %v2603 = vadd.f32 %v1577, %v2274
        %v2604 = vadd.f32 %v1578, %v2274
        %v2605 = vadd.f32 %v1579, %v2274
        %v2606 = vadd.f32 %v1580, %v2274
        %v2607 = vadd.f32 %v1581, %v2274
        %v2608 = vadd.f32 %v1582, %v2274
        %v2609 = vadd.f32 %v1583, %v2274
        %v2610 = vadd.f32 %v1584, %v2274
        %v2611 = vadd.f32 %v1585, %v2274
        %v2612 = vadd.f32 %v1586, %v2274
        %v2613 = vadd.f32 %v1587, %v2274
        %v2614 = vadd.f32 %v1588, %v2274
        %v2615 = vadd.f32 %v1589, %v2274
        %v2616 = vadd.f32 %v1590, %v2274
        %v2617 = vadd.f32 %v1591, %v2274
        %v2618 = vadd.f32 %v1592, %v2274
        %v2619 = vadd.f32 %v1593, %v2274
        %v2620 = vadd.f32 %v1594, %v2274
        %v2621 = vadd.f32 %v1595, %v2274
        %v2622 = vadd.f32 %v1596, %v2274
        %v2623 = vadd.f32 %v1597, %v2274
        %v2624 = vadd.f32 %v1598, %v2274
        %v2625 = vadd.f32 %v1599, %v2274
        %v2626 = vadd.f32 %v1600, %v2274
        %v2627 = vadd.f32 %v1601, %v2274
        %v2628 = vadd.f32 %v1602, %v2274
        %v2629 = vadd.f32 %v1603, %v2274
        %v2630 = vadd.f32 %v1604, %v2274
        %v2631 = vadd.f32 %v1605, %v2274
        %v2632 = vadd.f32 %v1606, %v2274
        %v2633 = vadd.f32 %v1607, %v2274
        %v2634 = vadd.f32 %v1608, %v2274
        %v2635 = vadd.f32 %v1609, %v2274
        %v2636 = vadd.f32 %v1610, %v2274
        %v2637 = vadd.f32 %v1611, %v2274
        %v2638 = vadd.f32 %v1612, %v2274
        %v2639 = vadd.f32 %v1613, %v2274
        %v2640 = vadd.f32 %v1614, %v2274
        %v2641 = vadd.f32 %v1615, %v2274
        %v2642 = vadd.f32 %v1616, %v2274
        %v2643 = vadd.f32 %v1617, %v2274
        %v2644 = vadd.f32 %v1618, %v2274
        %v2645 = vadd.f32 %v1619, %v2274
        %v2646 = vadd.f32 %v1620, %v2274
        %v2647 = vadd.f32 %v1621, %v2274
        %v2648 = vadd.f32 %v1622, %v2274
        %v2649 = vadd.f32 %v1623, %v2274
        %v2650 = vadd.f32 %v1624, %v2274
        %v2651 = vadd.f32 %v1625, %v2274
        %v2652 = vadd.f32 %v1626, %v2274
        %v2653 = vadd.f32 %v1627, %v2274
        %v2654 = vadd.f32 %v1628, %v2274
        %v2655 = vadd.f32 %v1629, %v2274
        %v2656 = vadd.f32 %v1630, %v2274
        %v2657 = vadd.f32 %v1631, %v2274
        %v2658 = vadd.f32 %v1632, %v2274
        %v2659 = vadd.f32 %v1633, %v2274
        %v2660 = vadd.f32 %v1634, %v2274
        %v2661 = vadd.f32 %v1635, %v2274
        %v2662 = vadd.f32 %v1636, %v2274
        %v2663 = vadd.f32 %v1637, %v2274
        %v2664 = vadd.f32 %v1638, %v2274
        %v2665 = vadd.f32 %v1639, %v2274
        %v2666 = vadd.f32 %v1640, %v2274
        %v2667 = vadd.f32 %v1641, %v2274
        %v2668 = vadd.f32 %v1642, %v2274
        %v2669 = vadd.f32 %v1643, %v2274
        %v2670 = vadd.f32 %v1644, %v2274
        %v2671 = vadd.f32 %v1645, %v2274
        %v2672 = vadd.f32 %v1646, %v2274
        %v2673 = vadd.f32 %v1647, %v2274
        %v2674 = vadd.f32 %v1648, %v2274
        %v2675 = vadd.f32 %v1649, %v2274
        %v2676 = vadd.f32 %v1650, %v2274
        %v2677 = vadd.f32 %v1651, %v2274
        %v2678 = vadd.f32 %v1652, %v2274
        %v2679 = vadd.f32 %v1653, %v2274
        %v2680 = vadd.f32 %v1654, %v2274
        %v2681 = vadd.f32 %v1655, %v2274
        %v2682 = vadd.f32 %v1656, %v2274
        %v2683 = vadd.f32 %v1657, %v2274
        %v2684 = vadd.f32 %v1658, %v2274
        %v2685 = vadd.f32 %v1659, %v2274
        %v2686 = vadd.f32 %v1660, %v2274
        %v2687 = vadd.f32 %v1661, %v2274
        %v2688 = vadd.f32 %v1662, %v2274
        %v2689 = vadd.f32 %v1663, %v2274
        %v2690 = vadd.f32 %v1664, %v2274
        %v2691 = vadd.f32 %v1665, %v2274
        %v2692 = vadd.f32 %v1666, %v2274
        %v2693 = vadd.f32 %v1667, %v2274
        %v2694 = vadd.f32 %v1668, %v2274
        %v2695 = vadd.f32 %v1669, %v2274
        %v2696 = vadd.f32 %v1670, %v2274
        %v2697 = vadd.f32 %v1671, %v2274
        %v2698 = vadd.f32 %v1672, %v2274
        %v2699 = vadd.f32 %v1673, %v2274
        %v2700 = vadd.f32 %v1674, %v2274
        %v2701 = vadd.f32 %v1675, %v2274
        %v2702 = vadd.f32 %v1676, %v2274
        %v2703 = vadd.f32 %v1677, %v2274
        %v2704 = vadd.f32 %v1678, %v2274
        %v2705 = vadd.f32 %v1679, %v2274
        %v2706 = vadd.f32 %v1680, %v2274
        %v2707 = vadd.f32 %v1681, %v2274
        %v2708 = vadd.f32 %v1682, %v2274
        %v2709 = vadd.f32 %v1683, %v2274
        %v2710 = vadd.f32 %v1684, %v2274
        %v2711 = vadd.f32 %v1685, %v2274
        %v2712 = vadd.f32 %v1686, %v2274
        %v2713 = vadd.f32 %v1687, %v2274
        %v2714 = vadd.f32 %v1688, %v2274
        %v2715 = vadd.f32 %v1689, %v2274
        %v2716 = vadd.f32 %v1690, %v2274
        %v2717 = vadd.f32 %v1691, %v2274
        %v2718 = vadd.f32 %v1692, %v2274
        %v2719 = vadd.f32 %v1693, %v2274
        %v2720 = vadd.f32 %v1694, %v2274
        %v2721 = vadd.f32 %v1695, %v2274
        %v2722 = vadd.f32 %v1696, %v2274
        %v2723 = vadd.f32 %v1697, %v2274
        %v2724 = vadd.f32 %v1698, %v2274
        %v2725 = vadd.f32 %v1699, %v2274
        %v2726 = vadd.f32 %v1700, %v2274
        %v2727 = vadd.f32 %v1701, %v2274
        %v2728 = vadd.f32 %v1702, %v2274
        %v2729 = vadd.f32 %v1703, %v2274
        %v2730 = vadd.f32 %v1704, %v2274
        %v2731 = vadd.f32 %v1705, %v2274
        %v2732 = vadd.f32 %v1706, %v2274
        %v2733 = vadd.f32 %v1707, %v2274
        %v2734 = vadd.f32 %v1708, %v2274
        %v2735 = vadd.f32 %v1709, %v2274
        %v2736 = vadd.f32 %v1710, %v2274
        %v2737 = vadd.f32 %v1711, %v2274
        %v2738 = vadd.f32 %v1712, %v2274
        %v2739 = vadd.f32 %v1713, %v2274
        %v2740 = vadd.f32 %v1714, %v2274
        %v2741 = vadd.f32 %v1715, %v2274
        %v2742 = vadd.f32 %v1716, %v2274
        %v2743 = vadd.f32 %v1717, %v2274
        %v2744 = vadd.f32 %v1718, %v2274
        %v2745 = vadd.f32 %v1719, %v2274
        %v2746 = vadd.f32 %v1720, %v2274
        %v2747 = vadd.f32 %v1721, %v2274
        %v2748 = vadd.f32 %v1722, %v2274
        %v2749 = vadd.f32 %v1723, %v2274
        %v2750 = vadd.f32 %v1724, %v2274
        %v2751 = vadd.f32 %v1725, %v2274
        %v2752 = vadd.f32 %v1726, %v2274
        %v2753 = vadd.f32 %v1727, %v2274
        %v2754 = vadd.f32 %v1728, %v2274
        %v2755 = vadd.f32 %v1729, %v2274
        %v2756 = vadd.f32 %v1730, %v2274
        %v2757 = vadd.f32 %v1731, %v2274
        %v2758 = vadd.f32 %v1732, %v2274
        %v2759 = vadd.f32 %v1733, %v2274
        %v2760 = vadd.f32 %v1734, %v2274
        %v2761 = vadd.f32 %v1735, %v2274
        %v2762 = vadd.f32 %v1736, %v2274
        %v2763 = vadd.f32 %v1737, %v2274
        %v2764 = vadd.f32 %v1738, %v2274
        %v2765 = vadd.f32 %v1739, %v2274
        %v2766 = vadd.f32 %v1740, %v2274
        %v2767 = vadd.f32 %v1741, %v2274
        %v2768 = vadd.f32 %v1742, %v2274
        %v2769 = vadd.f32 %v1743, %v2274
        %v2770 = vadd.f32 %v1744, %v2274
        %v2771 = vadd.f32 %v1745, %v2274
        %v2772 = vadd.f32 %v1746, %v2274
        %v2773 = vadd.f32 %v1747, %v2274
        %v2774 = vadd.f32 %v1748, %v2274
        %v2775 = vadd.f32 %v1749, %v2274
        %v2776 = vadd.f32 %v1750, %v2274
        %v2777 = vadd.f32 %v1751, %v2274
        %v2778 = vadd.f32 %v1752, %v2274
        %v2779 = vadd.f32 %v1753, %v2274
        %v2780 = vadd.f32 %v1754, %v2274
        %v2781 = vadd.f32 %v1755, %v2274
        %v2782 = vadd.f32 %v1756, %v2274
        %v2783 = vadd.f32 %v1757, %v2274
        %v2784 = vadd.f32 %v1758, %v2274
        %v2785 = vadd.f32 %v1759, %v2274
        %v2786 = vadd.f32 %v1760, %v2274
        %v2787 = vadd.f32 %v1761, %v2274
        %v2788 = vadd.f32 %v1762, %v2274
        %v2789 = vadd.f32 %v1763, %v2274
        %v2790 = vadd.f32 %v1764, %v2274
        %v2791 = vadd.f32 %v1765, %v2274
        %v2792 = vadd.f32 %v1766, %v2274
        %v2793 = vadd.f32 %v1767, %v2274
        %v2794 = vadd.f32 %v1768, %v2274
        %v2795 = vadd.f32 %v1769, %v2274
        %v2796 = vadd.f32 %v1770, %v2274
        %v2797 = vadd.f32 %v1771, %v2274
        %v2798 = vadd.f32 %v1772, %v2274
        %v2799 = vadd.f32 %v1773, %v2274
        %v2800 = vadd.f32 %v1774, %v2274
        %v2801 = vadd.f32 %v1775, %v2274
        %v2802 = vadd.f32 %v1776, %v2274
        %v2803 = vadd.f32 %v1777, %v2274
        %v2804 = vadd.f32 %v1778, %v2274
        %v2805 = vadd.f32 %v1779, %v2274
        %v2806 = vadd.f32 %v1780, %v2274
        %v2807 = vadd.f32 %v1781, %v2274
        %v2808 = vadd.f32 %v1782, %v2274
        %v2809 = vadd.f32 %v1783, %v2274
        %v2810 = vadd.f32 %v1784, %v2274
        %v2811 = vadd.f32 %v1785, %v2274
        %v2812 = vadd.f32 %v1786, %v2274
        %v2813 = vadd.f32 %v1787, %v2274
        %v2814 = vadd.f32 %v1788, %v2274
        %v2815 = vadd.f32 %v1789, %v2274
        %v2816 = vadd.f32 %v1790, %v2274
        %v2817 = vadd.f32 %v1791, %v2274
        %v2818 = vadd.f32 %v1792, %v2274
        %v2819 = vadd.f32 %v1793, %v2274
        %v2820 = vadd.f32 %v1794, %v2274
        %v2821 = vadd.f32 %v1795, %v2274
        %v2822 = vadd.f32 %v1796, %v2274
        %v2823 = vadd.f32 %v1797, %v2274
        %v2824 = vadd.f32 %v1798, %v2274
        %v2825 = vadd.f32 %v1799, %v2274
        %v2826 = vadd.f32 %v1800, %v2274
        %v2827 = vadd.f32 %v1801, %v2274
        %v2828 = vadd.f32 %v1802, %v2274
        %v2829 = vadd.f32 %v1803, %v2274
        %v2830 = vadd.f32 %v1804, %v2274
        %v2831 = vadd.f32 %v1805, %v2274
        %v2832 = vadd.f32 %v1806, %v2274
        %v2833 = vadd.f32 %v1807, %v2274
        %v2834 = vadd.f32 %v1808, %v2274
        %v2835 = vadd.f32 %v1809, %v2274
        %v2836 = vadd.f32 %v1810, %v2274
        %v2837 = vadd.f32 %v1811, %v2274
        %v2838 = vadd.f32 %v1812, %v2274
        %v2839 = vadd.f32 %v1813, %v2274
        %v2840 = vadd.f32 %v1814, %v2274
        %v2841 = vadd.f32 %v1815, %v2274
        %v2842 = vadd.f32 %v1816, %v2274
        %v2843 = vadd.f32 %v1817, %v2274
        %v2844 = vadd.f32 %v1818, %v2274
        %v2845 = vadd.f32 %v1819, %v2274
        %v2846 = vadd.f32 %v1820, %v2274
        %v2847 = vadd.f32 %v1821, %v2274
        %v2848 = vadd.f32 %v1822, %v2274
        %v2849 = vadd.f32 %v1823, %v2274
        %v2850 = vadd.f32 %v1824, %v2274
        %v2851 = vadd.f32 %v1825, %v2274
        %v2852 = vadd.f32 %v1826, %v2274
        %v2853 = vadd.f32 %v1827, %v2274
        %v2854 = vadd.f32 %v1828, %v2274
        %v2855 = vadd.f32 %v1829, %v2274
        %v2856 = vadd.f32 %v1830, %v2274
        %v2857 = vadd.f32 %v1831, %v2274
        %v2858 = vadd.f32 %v1832, %v2274
        %v2859 = vadd.f32 %v1833, %v2274
        %v2860 = vadd.f32 %v1834, %v2274
        %v2861 = vadd.f32 %v1835, %v2274
        %v2862 = vadd.f32 %v1836, %v2274
        %v2863 = vadd.f32 %v1837, %v2274
        %v2864 = vadd.f32 %v1838, %v2274
        %v2865 = vadd.f32 %v1839, %v2274
        %v2866 = vadd.f32 %v1840, %v2274
        %v2867 = vadd.f32 %v1841, %v2274
        %v2868 = vadd.f32 %v1842, %v2274
        %v2869 = vadd.f32 %v1843, %v2274
        %v2870 = vadd.f32 %v1844, %v2274
        %v2871 = vadd.f32 %v1845, %v2274
        %v2872 = vadd.f32 %v1846, %v2274
        %v2873 = vadd.f32 %v1847, %v2274
        %v2874 = vadd.f32 %v1848, %v2274
        %v2875 = vadd.f32 %v1849, %v2274
        %v2876 = vadd.f32 %v1850, %v2274
        %v2877 = vadd.f32 %v1851, %v2274
        %v2878 = vadd.f32 %v1852, %v2274
        %v2879 = vadd.f32 %v1853, %v2274
        %v2880 = vadd.f32 %v1854, %v2274
        %v2881 = vadd.f32 %v1855, %v2274
        %v2882 = vadd.f32 %v1856, %v2274
        %v2883 = vadd.f32 %v1857, %v2274
        %v2884 = vadd.f32 %v1858, %v2274
        %v2885 = vadd.f32 %v1859, %v2274
        %v2886 = vadd.f32 %v1860, %v2274
        %v2887 = vadd.f32 %v1861, %v2274
        %v2888 = vadd.f32 %v1862, %v2274
        %v2889 = vadd.f32 %v1863, %v2274
        %v2890 = vadd.f32 %v1864, %v2274
        %v2891 = vadd.f32 %v1865, %v2274
        %v2892 = vadd.f32 %v1866, %v2274
        %v2893 = vadd.f32 %v1867, %v2274
        %v2894 = vadd.f32 %v1868, %v2274
        %v2895 = vadd.f32 %v1869, %v2274
        %v2896 = vadd.f32 %v1870, %v2274
        %v2897 = vadd.f32 %v1871, %v2274
        %v2898 = vadd.f32 %v1872, %v2274
        %v2899 = vadd.f32 %v1873, %v2274
        %v2900 = vadd.f32 %v1874, %v2274
        %v2901 = vadd.f32 %v1875, %v2274
        %v2902 = vadd.f32 %v1876, %v2274
        %v2903 = vadd.f32 %v1877, %v2274
        %v2904 = vadd.f32 %v1878, %v2274
        %v2905 = vadd.f32 %v1879, %v2274
        %v2906 = vadd.f32 %v1880, %v2274
        %v2907 = vadd.f32 %v1881, %v2274
        %v2908 = vadd.f32 %v1882, %v2274
        %v2909 = vadd.f32 %v1883, %v2274
        %v2910 = vadd.f32 %v1884, %v2274
        %v2911 = vadd.f32 %v1885, %v2274
        %v2912 = vadd.f32 %v1886, %v2274
        %v2913 = vadd.f32 %v1887, %v2274
        %v2914 = vadd.f32 %v1888, %v2274
        %v2915 = vadd.f32 %v1889, %v2274
        %v2916 = vadd.f32 %v1890, %v2274
        %v2917 = vadd.f32 %v1891, %v2274
        %v2918 = vadd.f32 %v1892, %v2274
        %v2919 = vadd.f32 %v1893, %v2274
        %v2920 = vadd.f32 %v1894, %v2274
        %v2921 = vadd.f32 %v1895, %v2274
        %v2922 = vadd.f32 %v1896, %v2274
        %v2923 = vadd.f32 %v1897, %v2274
        %v2924 = vadd.f32 %v1898, %v2274
        %v2925 = vadd.f32 %v1899, %v2274
        %v2926 = vadd.f32 %v1900, %v2274
        %v2927 = vadd.f32 %v1901, %v2274
        %v2928 = vadd.f32 %v1902, %v2274
        %v2929 = vadd.f32 %v1903, %v2274
        %v2930 = vadd.f32 %v1904, %v2274
        %v2931 = vadd.f32 %v1905, %v2274
        %v2932 = vadd.f32 %v1906, %v2274
        %v2933 = vadd.f32 %v1907, %v2274
        %v2934 = vadd.f32 %v1908, %v2274
        %v2935 = vadd.f32 %v1909, %v2274
        %v2936 = vadd.f32 %v1910, %v2274
        %v2937 = vadd.f32 %v1911, %v2274
        %v2938 = vadd.f32 %v1912, %v2274
        %v2939 = vadd.f32 %v1913, %v2274
        %v2940 = vadd.f32 %v1914, %v2274
        %v2941 = vadd.f32 %v1915, %v2274
        %v2942 = vadd.f32 %v1916, %v2274
        %v2943 = vadd.f32 %v1917, %v2274
        %v2944 = vadd.f32 %v1918, %v2274
        %v2945 = vadd.f32 %v1919, %v2274
        %v2946 = vadd.f32 %v1920, %v2274
        %v2947 = vadd.f32 %v1921, %v2274
        %v2948 = vadd.f32 %v1922, %v2274
        %v2949 = vadd.f32 %v1923, %v2274
        %v2950 = vadd.f32 %v1924, %v2274
        %v2951 = vadd.f32 %v1925, %v2274
        %v2952 = vadd.f32 %v1926, %v2274
        %v2953 = vadd.f32 %v1927, %v2274
        %v2954 = vadd.f32 %v1928, %v2274
        %v2955 = vadd.f32 %v1929, %v2274
        %v2956 = vadd.f32 %v1930, %v2274
        %v2957 = vadd.f32 %v1931, %v2274
        %v2958 = vadd.f32 %v1932, %v2274
        %v2959 = vadd.f32 %v1933, %v2274
        %v2960 = vadd.f32 %v1934, %v2274
        %v2961 = vadd.f32 %v1935, %v2274
        %v2962 = vadd.f32 %v1936, %v2274
        %v2963 = vadd.f32 %v1937, %v2274
        %v2964 = vadd.f32 %v1938, %v2274
        %v2965 = vadd.f32 %v1939, %v2274
        %v2966 = vadd.f32 %v1940, %v2274
        %v2967 = vadd.f32 %v1941, %v2274
        %v2968 = vadd.f32 %v1942, %v2274
        %v2969 = vadd.f32 %v1943, %v2274
        %v2970 = vadd.f32 %v1944, %v2274
        %v2971 = vadd.f32 %v1945, %v2274
        %v2972 = vadd.f32 %v1946, %v2274
        %v2973 = vadd.f32 %v1947, %v2274
        %v2974 = vadd.f32 %v1948, %v2274
        %v2975 = vadd.f32 %v1949, %v2274
        %v2976 = vadd.f32 %v1950, %v2274
        %v2977 = vadd.f32 %v1951, %v2274
        %v2978 = vadd.f32 %v1952, %v2274
        %v2979 = vadd.f32 %v1953, %v2274
        %v2980 = vadd.f32 %v1954, %v2274
        %v2981 = vadd.f32 %v1955, %v2274
        %v2982 = vadd.f32 %v1956, %v2274
        %v2983 = vadd.f32 %v1957, %v2274
        %v2984 = vadd.f32 %v1958, %v2274
        %v2985 = vadd.f32 %v1959, %v2274
        %v2986 = vadd.f32 %v1960, %v2274
        %v2987 = vadd.f32 %v1961, %v2274
        %v2988 = vadd.f32 %v1962, %v2274
        %v2989 = vadd.f32 %v1963, %v2274
        %v2990 = vadd.f32 %v1964, %v2274
        %v2991 = vadd.f32 %v1965, %v2274
        %v2992 = vadd.f32 %v1966, %v2274
        %v2993 = vadd.f32 %v1967, %v2274
        %v2994 = vadd.f32 %v1968, %v2274
        %v2995 = vadd.f32 %v1969, %v2274
        %v2996 = vadd.f32 %v1970, %v2274
        %v2997 = vadd.f32 %v1971, %v2274
        %v2998 = vadd.f32 %v1972, %v2274
        %v2999 = vadd.f32 %v1973, %v2274
        %v3000 = vadd.f32 %v1974, %v2274
        %v3001 = vadd.f32 %v1975, %v2274
        %v3002 = vadd.f32 %v1976, %v2274
        %v3003 = vadd.f32 %v1977, %v2274
        %v3004 = vadd.f32 %v1978, %v2274
        %v3005 = vadd.f32 %v1979, %v2274
        %v3006 = vadd.f32 %v1980, %v2274
        %v3007 = vadd.f32 %v1981, %v2274
        %v3008 = vadd.f32 %v1982, %v2274
        %v3009 = vadd.f32 %v1983, %v2274
        %v3010 = vadd.f32 %v1984, %v2274
        %v3011 = vadd.f32 %v1985, %v2274
        %v3012 = vadd.f32 %v1986, %v2274
        %v3013 = vadd.f32 %v1987, %v2274
        %v3014 = vadd.f32 %v1988, %v2274
        %v3015 = vadd.f32 %v1989, %v2274
        %v3016 = vadd.f32 %v1990, %v2274
        %v3017 = vadd.f32 %v1991, %v2274
        %v3018 = vadd.f32 %v1992, %v2274
        %v3019 = vadd.f32 %v1993, %v2274
        %v3020 = vadd.f32 %v1994, %v2274
        %v3021 = vadd.f32 %v1995, %v2274
        %v3022 = vadd.f32 %v1996, %v2274
        %v3023 = vadd.f32 %v1997, %v2274
        %v3024 = vadd.f32 %v1998, %v2274
        %v3025 = vadd.f32 %v1999, %v2274
        %v3026 = vadd.f32 %v2000, %v2274
        %v3027 = vadd.f32 %v2001, %v2274
        %v3028 = vadd.f32 %v2002, %v2274
        %v3029 = vadd.f32 %v2003, %v2274
        %v3030 = vadd.f32 %v2004, %v2274
        %v3031 = vadd.f32 %v2005, %v2274
        %v3032 = vadd.f32 %v2006, %v2274
        %v3033 = vadd.f32 %v2007, %v2274
        %v3034 = vadd.f32 %v2008, %v2274
        %v3035 = vadd.f32 %v2009, %v2274
        %v3036 = vadd.f32 %v2010, %v2274
        %v3037 = vadd.f32 %v2011, %v2274
        %v3038 = vadd.f32 %v2012, %v2274
        %v3039 = vadd.f32 %v2013, %v2274
        %v3040 = vadd.f32 %v2014, %v2274
        %v3041 = vadd.f32 %v2015, %v2274
        %v3042 = vadd.f32 %v2016, %v2274
        %v3043 = vadd.f32 %v2017, %v2274
        %v3044 = vadd.f32 %v2018, %v2274
        %v3045 = vadd.f32 %v2019, %v2274
        %v3046 = vadd.f32 %v2020, %v2274
        %v3047 = vadd.f32 %v2021, %v2274
        %v3048 = vadd.f32 %v2022, %v2274
        %v3049 = vadd.f32 %v2023, %v2274
        %v3050 = vadd.f32 %v2024, %v2274
        %v3051 = vadd.f32 %v2025, %v2274
        %v3052 = vadd.f32 %v2026, %v2274
        %v3053 = vadd.f32 %v2027, %v2274
        %v3054 = vadd.f32 %v2028, %v2274
        %v3055 = vadd.f32 %v2029, %v2274
        %v3056 = vadd.f32 %v2030, %v2274
        %v3057 = vadd.f32 %v2031, %v2274
        %v3058 = vadd.f32 %v2032, %v2274
        %v3059 = vadd.f32 %v2033, %v2274
        %v3060 = vadd.f32 %v2034, %v2274
        %v3061 = vadd.f32 %v2035, %v2274
        %v3062 = vadd.f32 %v2036, %v2274
        %v3063 = vadd.f32 %v2037, %v2274
        %v3064 = vadd.f32 %v2038, %v2274
        %v3065 = vadd.f32 %v2039, %v2274
        %v3066 = vadd.f32 %v2040, %v2274
        %v3067 = vadd.f32 %v2041, %v2274
        %v3068 = vadd.f32 %v2042, %v2274
        %v3069 = vadd.f32 %v2043, %v2274
        %v3070 = vadd.f32 %v2044, %v2274
        %v3071 = vadd.f32 %v2045, %v2274
        %v3072 = vadd.f32 %v2046, %v2274
        %v3073 = vadd.f32 %v2047, %v2274
        %v3074 = vadd.f32 %v2048, %v2274
        %v3075 = vadd.f32 %v2049, %v2274
        %v3076 = vadd.f32 %v2050, %v2274
        %v3077 = vadd.f32 %v2051, %v2274
        %v3078 = vadd.f32 %v2052, %v2274
        %v3079 = vadd.f32 %v2053, %v2274
        %v3080 = vadd.f32 %v2054, %v2274
        %v3081 = vadd.f32 %v2055, %v2274
        %v3082 = vadd.f32 %v2056, %v2274
        %v3083 = vadd.f32 %v2057, %v2274
        %v3084 = vadd.f32 %v2058, %v2274
        %v3085 = vadd.f32 %v2059, %v2274
        %v3086 = vadd.f32 %v2060, %v2274
        %v3087 = vadd.f32 %v2061, %v2274
        %v3088 = vadd.f32 %v2062, %v2274
        %v3089 = vadd.f32 %v2063, %v2274
        %v3090 = vadd.f32 %v2064, %v2274
        %v3091 = vadd.f32 %v2065, %v2274
        %v3092 = vadd.f32 %v2066, %v2274
        %v3093 = vadd.f32 %v2067, %v2274
        %v3094 = vadd.f32 %v2068, %v2274
        %v3095 = vadd.f32 %v2069, %v2274
        %v3096 = vadd.f32 %v2070, %v2274
        %v3097 = vadd.f32 %v2071, %v2274
        %v3098 = vadd.f32 %v2072, %v2274
        %v3099 = vadd.f32 %v2073, %v2274
        %v3100 = vadd.f32 %v2074, %v2274
        %v3101 = vadd.f32 %v2075, %v2274
        %v3102 = vadd.f32 %v2076, %v2274
        %v3103 = vadd.f32 %v2077, %v2274
        %v3104 = vadd.f32 %v2078, %v2274
        %v3105 = vadd.f32 %v2079, %v2274
        %v3106 = vadd.f32 %v2080, %v2274
        %v3107 = vadd.f32 %v2081, %v2274
        %v3108 = vadd.f32 %v2082, %v2274
        %v3109 = vadd.f32 %v2083, %v2274
        %v3110 = vadd.f32 %v2084, %v2274
        %v3111 = vadd.f32 %v2085, %v2274
        %v3112 = vadd.f32 %v2086, %v2274
        %v3113 = vadd.f32 %v2087, %v2274
        %v3114 = vadd.f32 %v2088, %v2274
        %v3115 = vadd.f32 %v2089, %v2274
        %v3116 = vadd.f32 %v2090, %v2274
        %v3117 = vadd.f32 %v2091, %v2274
        %v3118 = vadd.f32 %v2092, %v2274
        %v3119 = vadd.f32 %v2093, %v2274
        %v3120 = vadd.f32 %v2094, %v2274
        %v3121 = vadd.f32 %v2095, %v2274
        %v3122 = vadd.f32 %v2096, %v2274
        %v3123 = vadd.f32 %v2097, %v2274
        %v3124 = vadd.f32 %v2098, %v2274
        %v3125 = vadd.f32 %v2099, %v2274
        %v3126 = vadd.f32 %v2100, %v2274
        %v3127 = vadd.f32 %v2101, %v2274
        %v3128 = vadd.f32 %v2102, %v2274
        %v3129 = vadd.f32 %v2103, %v2274
        %v3130 = vadd.f32 %v2104, %v2274
        %v3131 = vadd.f32 %v2105, %v2274
        %v3132 = vadd.f32 %v2106, %v2274
        %v3133 = vadd.f32 %v2107, %v2274
        %v3134 = vadd.f32 %v2108, %v2274
        %v3135 = vadd.f32 %v2109, %v2274
        %v3136 = vadd.f32 %v2110, %v2274
        %v3137 = vadd.f32 %v2111, %v2274
        %v3138 = vadd.f32 %v2112, %v2274
        %v3139 = vadd.f32 %v2113, %v2274
        %v3140 = vadd.f32 %v2114, %v2274
        %v3141 = vadd.f32 %v2115, %v2274
        %v3142 = vadd.f32 %v2116, %v2274
        %v3143 = vadd.f32 %v2117, %v2274
        %v3144 = vadd.f32 %v2118, %v2274
        %v3145 = vadd.f32 %v2119, %v2274
        %v3146 = vadd.f32 %v2120, %v2274
        %v3147 = vadd.f32 %v2121, %v2274
        %v3148 = vadd.f32 %v2122, %v2274
        %v3149 = vadd.f32 %v2123, %v2274
        %v3150 = vadd.f32 %v2124, %v2274
        %v3151 = vadd.f32 %v2125, %v2274
        %v3152 = vadd.f32 %v2126, %v2274
        %v3153 = vadd.f32 %v2127, %v2274
        %v3154 = vadd.f32 %v2128, %v2274
        %v3155 = vadd.f32 %v2129, %v2274
        %v3156 = vadd.f32 %v2130, %v2274
        %v3157 = vadd.f32 %v2131, %v2274
        %v3158 = vadd.f32 %v2132, %v2274
        %v3159 = vadd.f32 %v2133, %v2274
        %v3160 = vadd.f32 %v2134, %v2274
        %v3161 = vadd.f32 %v2135, %v2274
        %v3162 = vadd.f32 %v2136, %v2274
        %v3163 = vadd.f32 %v2137, %v2274
        %v3164 = vadd.f32 %v2138, %v2274
        %v3165 = vadd.f32 %v2139, %v2274
        %v3166 = vadd.f32 %v2140, %v2274
        %v3167 = vadd.f32 %v2141, %v2274
        %v3168 = vadd.f32 %v2142, %v2274
        %v3169 = vadd.f32 %v2143, %v2274
        %v3170 = vadd.f32 %v2144, %v2274
        %v3171 = vadd.f32 %v2145, %v2274
        %v3172 = vadd.f32 %v2146, %v2274
        %v3173 = vadd.f32 %v2147, %v2274
        %v3174 = vadd.f32 %v2148, %v2274
        %v3175 = vadd.f32 %v2149, %v2274
        %v3176 = vadd.f32 %v2150, %v2274
        %v3177 = vadd.f32 %v2151, %v2274
        %v3178 = vadd.f32 %v2152, %v2274
        %v3179 = vadd.f32 %v2153, %v2274
        %v3180 = vadd.f32 %v2154, %v2274
        %v3181 = vadd.f32 %v2155, %v2274
        %v3182 = vadd.f32 %v2156, %v2274
        %v3183 = vadd.f32 %v2157, %v2274
        %v3184 = vadd.f32 %v2158, %v2274
        %v3185 = vadd.f32 %v2159, %v2274
        %v3186 = vadd.f32 %v2160, %v2274
        %v3187 = vadd.f32 %v2161, %v2274
        %v3188 = vadd.f32 %v2162, %v2274
        %v3189 = vadd.f32 %v2163, %v2274
        %v3190 = vadd.f32 %v2164, %v2274
        %v3191 = vadd.f32 %v2165, %v2274
        %v3192 = vadd.f32 %v2166, %v2274
        %v3193 = vadd.f32 %v2167, %v2274
        %v3194 = vadd.f32 %v2168, %v2274
        %v3195 = vadd.f32 %v2169, %v2274
        %v3196 = vadd.f32 %v2170, %v2274
        %v3197 = vadd.f32 %v2171, %v2274
        %v3198 = vadd.f32 %v2172, %v2274
        %v3199 = vadd.f32 %v2173, %v2274
        %v3200 = vadd.f32 %v2174, %v2274
        %v3201 = vadd.f32 %v2175, %v2274
        %v3202 = vadd.f32 %v2176, %v2274
        %v3203 = vadd.f32 %v2177, %v2274
        %v3204 = vadd.f32 %v2178, %v2274
        %v3205 = vadd.f32 %v2179, %v2274
        %v3206 = vadd.f32 %v2180, %v2274
        %v3207 = vadd.f32 %v2181, %v2274
        %v3208 = vadd.f32 %v2182, %v2274
        %v3209 = vadd.f32 %v2183, %v2274
        %v3210 = vadd.f32 %v2184, %v2274
        %v3211 = vadd.f32 %v2185, %v2274
        %v3212 = vadd.f32 %v2186, %v2274
        %v3213 = vadd.f32 %v2187, %v2274
        %v3214 = vadd.f32 %v2188, %v2274
        %v3215 = vadd.f32 %v2189, %v2274
        %v3216 = vadd.f32 %v2190, %v2274
        %v3217 = vadd.f32 %v2191, %v2274
        %v3218 = vadd.f32 %v2192, %v2274
        %v3219 = vadd.f32 %v2193, %v2274
        %v3220 = vadd.f32 %v2194, %v2274
        %v3221 = vadd.f32 %v2195, %v2274
        %v3222 = vadd.f32 %v2196, %v2274
        %v3223 = vadd.f32 %v2197, %v2274
        %v3224 = vadd.f32 %v2198, %v2274
        %v3225 = vadd.f32 %v2199, %v2274
        %v3226 = vadd.f32 %v2200, %v2274
        %v3227 = vadd.f32 %v2201, %v2274
        %v3228 = vadd.f32 %v2202, %v2274
        %v3229 = vadd.f32 %v2203, %v2274
        %v3230 = vadd.f32 %v2204, %v2274
        %v3231 = vadd.f32 %v2205, %v2274
        %v3232 = vadd.f32 %v2206, %v2274
        %v3233 = vadd.f32 %v2207, %v2274
        %v3234 = vadd.f32 %v2208, %v2274
        %v3235 = vadd.f32 %v2209, %v2274
        %v3236 = vadd.f32 %v2210, %v2274
        %v3237 = vadd.f32 %v2211, %v2274
        %v3238 = vadd.f32 %v2212, %v2274
        %v3239 = vadd.f32 %v2213, %v2274
        %v3240 = vadd.f32 %v2214, %v2274
        %v3241 = vadd.f32 %v2215, %v2274
        %v3242 = vadd.f32 %v2216, %v2274
        %v3243 = vadd.f32 %v2217, %v2274
        %v3244 = vadd.f32 %v2218, %v2274
        %v3245 = vadd.f32 %v2219, %v2274
        %v3246 = vadd.f32 %v2220, %v2274
        %v3247 = vadd.f32 %v2221, %v2274
        %v3248 = vadd.f32 %v2222, %v2274
        %v3249 = vadd.f32 %v2223, %v2274
        %v3250 = vadd.f32 %v2224, %v2274
        %v3251 = vadd.f32 %v2225, %v2274
        %v3252 = vadd.f32 %v2226, %v2274
        %v3253 = vadd.f32 %v2227, %v2274
        %v3254 = vadd.f32 %v2228, %v2274
        %v3255 = vadd.f32 %v2229, %v2274
        %v3256 = vadd.f32 %v2230, %v2274
        %v3257 = vadd.f32 %v2231, %v2274
        %v3258 = vadd.f32 %v2232, %v2274
        %v3259 = vadd.f32 %v2233, %v2274
        %v3260 = vadd.f32 %v2234, %v2274
        %v3261 = vadd.f32 %v2235, %v2274
        %v3262 = vadd.f32 %v2236, %v2274
        %v3263 = vadd.f32 %v2237, %v2274
        %v3264 = vadd.f32 %v2238, %v2274
        %v3265 = vadd.f32 %v2239, %v2274
        %v3266 = vadd.f32 %v2240, %v2274
        %v3267 = vadd.f32 %v2241, %v2274
        %v3268 = vadd.f32 %v2242, %v2274
        %v3269 = vadd.f32 %v2243, %v2274
        %v3270 = vadd.f32 %v2244, %v2274
        %v3271 = vadd.f32 %v2245, %v2274
        %v3272 = vadd.f32 %v2246, %v2274
        %v3273 = vadd.f32 %v2247, %v2274
        %v3274 = vadd.f32 %v2248, %v2274
        %v3275 = vadd.f32 %v2249, %v2274
        %v3276 = vadd.f32 %v2250, %v2274
        %v3277 = vadd.f32 %v2251, %v2274
        %v3278 = vadd.f32 %v2252, %v2274
        %v3279 = vadd.f32 %v2253, %v2274
        %v3280 = vadd.f32 %v2254, %v2274
        %v3281 = vadd.f32 %v2255, %v2274
        %v3282 = vadd.f32 %v2256, %v2274
        %v3283 = vadd.f32 %v2257, %v2274
        %v3284 = vadd.f32 %v2258, %v2274
        %v3285 = vadd.f32 %v2259, %v2274
        %v3286 = vadd.f32 %v2260, %v2274
        %v3287 = vadd.f32 %v2261, %v2274
        %v3288 = vadd.f32 %v2262, %v2274
        %v3289 = vadd.f32 %v2263, %v2274
        %v3290 = vadd.f32 %v2264, %v2274
        %v3291 = vadd.f32 %v2265, %v2274
        %v3292 = vadd.f32 %v2266, %v2274
        %v3293 = vadd.f32 %v2267, %v2274
        %v3294 = vadd.f32 %v2268, %v2274
        %v3295 = vadd.f32 %v2269, %v2274
        %v3296 = vadd.f32 %v2270, %v2274
        %v3297 = vadd.f32 %v2271, %v2274
        %v3298 = vadd.f32 %v2272, %v2274
        %3299 = vst [vmem:[%s212] sm:$0xff] %v2275
        %3300 = vst [vmem:[%s212 + $0x8] sm:$0xff] %v2276
        %3301 = vst [vmem:[%s212 + $0x10] sm:$0xff] %v2277
        %3302 = vst [vmem:[%s212 + $0x18] sm:$0xff] %v2278
        %3303 = vst [vmem:[%s212 + $0x20] sm:$0xff] %v2279
        %3304 = vst [vmem:[%s212 + $0x28] sm:$0xff] %v2280
        %3305 = vst [vmem:[%s212 + $0x30] sm:$0xff] %v2281
        %3306 = vst [vmem:[%s212 + $0x38] sm:$0xff] %v2282
        %3307 = vst [vmem:[%s212 + $0x40] sm:$0xff] %v2283
        %3308 = vst [vmem:[%s212 + $0x48] sm:$0xff] %v2284
        %3309 = vst [vmem:[%s212 + $0x50] sm:$0xff] %v2285
        %3310 = vst [vmem:[%s212 + $0x58] sm:$0xff] %v2286
        %3311 = vst [vmem:[%s212 + $0x60] sm:$0xff] %v2287
        %3312 = vst [vmem:[%s212 + $0x68] sm:$0xff] %v2288
        %3313 = vst [vmem:[%s212 + $0x70] sm:$0xff] %v2289
        %3314 = vst [vmem:[%s212 + $0x78] sm:$0xff] %v2290
        %3315 = vst [vmem:[%s212 + $0x80] sm:$0xff] %v2291
        %3316 = vst [vmem:[%s212 + $0x88] sm:$0xff] %v2292
        %3317 = vst [vmem:[%s212 + $0x90] sm:$0xff] %v2293
        %3318 = vst [vmem:[%s212 + $0x98] sm:$0xff] %v2294
        %3319 = vst [vmem:[%s212 + $0xa0] sm:$0xff] %v2295
        %3320 = vst [vmem:[%s212 + $0xa8] sm:$0xff] %v2296
        %3321 = vst [vmem:[%s212 + $0xb0] sm:$0xff] %v2297
        %3322 = vst [vmem:[%s212 + $0xb8] sm:$0xff] %v2298
        %3323 = vst [vmem:[%s212 + $0xc0] sm:$0xff] %v2299
        %3324 = vst [vmem:[%s212 + $0xc8] sm:$0xff] %v2300
        %3325 = vst [vmem:[%s212 + $0xd0] sm:$0xff] %v2301
        %3326 = vst [vmem:[%s212 + $0xd8] sm:$0xff] %v2302
        %3327 = vst [vmem:[%s212 + $0xe0] sm:$0xff] %v2303
        %3328 = vst [vmem:[%s212 + $0xe8] sm:$0xff] %v2304
        %3329 = vst [vmem:[%s212 + $0xf0] sm:$0xff] %v2305
        %3330 = vst [vmem:[%s212 + $0xf8] sm:$0xff] %v2306
        %3331 = vst [vmem:[%s212 + $0x100] sm:$0xff] %v2307
        %3332 = vst [vmem:[%s212 + $0x108] sm:$0xff] %v2308
        %3333 = vst [vmem:[%s212 + $0x110] sm:$0xff] %v2309
        %3334 = vst [vmem:[%s212 + $0x118] sm:$0xff] %v2310
        %3335 = vst [vmem:[%s212 + $0x120] sm:$0xff] %v2311
        %3336 = vst [vmem:[%s212 + $0x128] sm:$0xff] %v2312
        %3337 = vst [vmem:[%s212 + $0x130] sm:$0xff] %v2313
        %3338 = vst [vmem:[%s212 + $0x138] sm:$0xff] %v2314
        %3339 = vst [vmem:[%s212 + $0x140] sm:$0xff] %v2315
        %3340 = vst [vmem:[%s212 + $0x148] sm:$0xff] %v2316
        %3341 = vst [vmem:[%s212 + $0x150] sm:$0xff] %v2317
        %3342 = vst [vmem:[%s212 + $0x158] sm:$0xff] %v2318
        %3343 = vst [vmem:[%s212 + $0x160] sm:$0xff] %v2319
        %3344 = vst [vmem:[%s212 + $0x168] sm:$0xff] %v2320
        %3345 = vst [vmem:[%s212 + $0x170] sm:$0xff] %v2321
        %3346 = vst [vmem:[%s212 + $0x178] sm:$0xff] %v2322
        %3347 = vst [vmem:[%s212 + $0x180] sm:$0xff] %v2323
        %3348 = vst [vmem:[%s212 + $0x188] sm:$0xff] %v2324
        %3349 = vst [vmem:[%s212 + $0x190] sm:$0xff] %v2325
        %3350 = vst [vmem:[%s212 + $0x198] sm:$0xff] %v2326
        %3351 = vst [vmem:[%s212 + $0x1a0] sm:$0xff] %v2327
        %3352 = vst [vmem:[%s212 + $0x1a8] sm:$0xff] %v2328
        %3353 = vst [vmem:[%s212 + $0x1b0] sm:$0xff] %v2329
        %3354 = vst [vmem:[%s212 + $0x1b8] sm:$0xff] %v2330
        %3355 = vst [vmem:[%s212 + $0x1c0] sm:$0xff] %v2331
        %3356 = vst [vmem:[%s212 + $0x1c8] sm:$0xff] %v2332
        %3357 = vst [vmem:[%s212 + $0x1d0] sm:$0xff] %v2333
        %3358 = vst [vmem:[%s212 + $0x1d8] sm:$0xff] %v2334
        %3359 = vst [vmem:[%s212 + $0x1e0] sm:$0xff] %v2335
        %3360 = vst [vmem:[%s212 + $0x1e8] sm:$0xff] %v2336
        %3361 = vst [vmem:[%s212 + $0x1f0] sm:$0xff] %v2337
        %3362 = vst [vmem:[%s212 + $0x1f8] sm:$0xff] %v2338
        %3363 = vst [vmem:[%s212 + $0x200] sm:$0xff] %v2339
        %3364 = vst [vmem:[%s212 + $0x208] sm:$0xff] %v2340
        %3365 = vst [vmem:[%s212 + $0x210] sm:$0xff] %v2341
        %3366 = vst [vmem:[%s212 + $0x218] sm:$0xff] %v2342
        %3367 = vst [vmem:[%s212 + $0x220] sm:$0xff] %v2343
        %3368 = vst [vmem:[%s212 + $0x228] sm:$0xff] %v2344
        %3369 = vst [vmem:[%s212 + $0x230] sm:$0xff] %v2345
        %3370 = vst [vmem:[%s212 + $0x238] sm:$0xff] %v2346
        %3371 = vst [vmem:[%s212 + $0x240] sm:$0xff] %v2347
        %3372 = vst [vmem:[%s212 + $0x248] sm:$0xff] %v2348
        %3373 = vst [vmem:[%s212 + $0x250] sm:$0xff] %v2349
        %3374 = vst [vmem:[%s212 + $0x258] sm:$0xff] %v2350
        %3375 = vst [vmem:[%s212 + $0x260] sm:$0xff] %v2351
        %3376 = vst [vmem:[%s212 + $0x268] sm:$0xff] %v2352
        %3377 = vst [vmem:[%s212 + $0x270] sm:$0xff] %v2353
        %3378 = vst [vmem:[%s212 + $0x278] sm:$0xff] %v2354
        %3379 = vst [vmem:[%s212 + $0x280] sm:$0xff] %v2355
        %3380 = vst [vmem:[%s212 + $0x288] sm:$0xff] %v2356
        %3381 = vst [vmem:[%s212 + $0x290] sm:$0xff] %v2357
        %3382 = vst [vmem:[%s212 + $0x298] sm:$0xff] %v2358
        %3383 = vst [vmem:[%s212 + $0x2a0] sm:$0xff] %v2359
        %3384 = vst [vmem:[%s212 + $0x2a8] sm:$0xff] %v2360
        %3385 = vst [vmem:[%s212 + $0x2b0] sm:$0xff] %v2361
        %3386 = vst [vmem:[%s212 + $0x2b8] sm:$0xff] %v2362
        %3387 = vst [vmem:[%s212 + $0x2c0] sm:$0xff] %v2363
        %3388 = vst [vmem:[%s212 + $0x2c8] sm:$0xff] %v2364
        %3389 = vst [vmem:[%s212 + $0x2d0] sm:$0xff] %v2365
        %3390 = vst [vmem:[%s212 + $0x2d8] sm:$0xff] %v2366
        %3391 = vst [vmem:[%s212 + $0x2e0] sm:$0xff] %v2367
        %3392 = vst [vmem:[%s212 + $0x2e8] sm:$0xff] %v2368
        %3393 = vst [vmem:[%s212 + $0x2f0] sm:$0xff] %v2369
        %3394 = vst [vmem:[%s212 + $0x2f8] sm:$0xff] %v2370
        %3395 = vst [vmem:[%s212 + $0x300] sm:$0xff] %v2371
        %3396 = vst [vmem:[%s212 + $0x308] sm:$0xff] %v2372
        %3397 = vst [vmem:[%s212 + $0x310] sm:$0xff] %v2373
        %3398 = vst [vmem:[%s212 + $0x318] sm:$0xff] %v2374
        %3399 = vst [vmem:[%s212 + $0x320] sm:$0xff] %v2375
        %3400 = vst [vmem:[%s212 + $0x328] sm:$0xff] %v2376
        %3401 = vst [vmem:[%s212 + $0x330] sm:$0xff] %v2377
        %3402 = vst [vmem:[%s212 + $0x338] sm:$0xff] %v2378
        %3403 = vst [vmem:[%s212 + $0x340] sm:$0xff] %v2379
        %3404 = vst [vmem:[%s212 + $0x348] sm:$0xff] %v2380
        %3405 = vst [vmem:[%s212 + $0x350] sm:$0xff] %v2381
        %3406 = vst [vmem:[%s212 + $0x358] sm:$0xff] %v2382
        %3407 = vst [vmem:[%s212 + $0x360] sm:$0xff] %v2383
        %3408 = vst [vmem:[%s212 + $0x368] sm:$0xff] %v2384
        %3409 = vst [vmem:[%s212 + $0x370] sm:$0xff] %v2385
        %3410 = vst [vmem:[%s212 + $0x378] sm:$0xff] %v2386
        %3411 = vst [vmem:[%s212 + $0x380] sm:$0xff] %v2387
        %3412 = vst [vmem:[%s212 + $0x388] sm:$0xff] %v2388
        %3413 = vst [vmem:[%s212 + $0x390] sm:$0xff] %v2389
        %3414 = vst [vmem:[%s212 + $0x398] sm:$0xff] %v2390
        %3415 = vst [vmem:[%s212 + $0x3a0] sm:$0xff] %v2391
        %3416 = vst [vmem:[%s212 + $0x3a8] sm:$0xff] %v2392
        %3417 = vst [vmem:[%s212 + $0x3b0] sm:$0xff] %v2393
        %3418 = vst [vmem:[%s212 + $0x3b8] sm:$0xff] %v2394
        %3419 = vst [vmem:[%s212 + $0x3c0] sm:$0xff] %v2395
        %3420 = vst [vmem:[%s212 + $0x3c8] sm:$0xff] %v2396
        %3421 = vst [vmem:[%s212 + $0x3d0] sm:$0xff] %v2397
        %3422 = vst [vmem:[%s212 + $0x3d8] sm:$0xff] %v2398
        %3423 = vst [vmem:[%s212 + $0x3e0] sm:$0xff] %v2399
        %3424 = vst [vmem:[%s212 + $0x3e8] sm:$0xff] %v2400
        %3425 = vst [vmem:[%s212 + $0x3f0] sm:$0xff] %v2401
        %3426 = vst [vmem:[%s212 + $0x3f8] sm:$0xff] %v2402
        %3427 = vst [vmem:[%s212 + $0x400] sm:$0xff] %v2403
        %3428 = vst [vmem:[%s212 + $0x408] sm:$0xff] %v2404
        %3429 = vst [vmem:[%s212 + $0x410] sm:$0xff] %v2405
        %3430 = vst [vmem:[%s212 + $0x418] sm:$0xff] %v2406
        %3431 = vst [vmem:[%s212 + $0x420] sm:$0xff] %v2407
        %3432 = vst [vmem:[%s212 + $0x428] sm:$0xff] %v2408
        %3433 = vst [vmem:[%s212 + $0x430] sm:$0xff] %v2409
        %3434 = vst [vmem:[%s212 + $0x438] sm:$0xff] %v2410
        %3435 = vst [vmem:[%s212 + $0x440] sm:$0xff] %v2411
        %3436 = vst [vmem:[%s212 + $0x448] sm:$0xff] %v2412
        %3437 = vst [vmem:[%s212 + $0x450] sm:$0xff] %v2413
        %3438 = vst [vmem:[%s212 + $0x458] sm:$0xff] %v2414
        %3439 = vst [vmem:[%s212 + $0x460] sm:$0xff] %v2415
        %3440 = vst [vmem:[%s212 + $0x468] sm:$0xff] %v2416
        %3441 = vst [vmem:[%s212 + $0x470] sm:$0xff] %v2417
        %3442 = vst [vmem:[%s212 + $0x478] sm:$0xff] %v2418
        %3443 = vst [vmem:[%s212 + $0x480] sm:$0xff] %v2419
        %3444 = vst [vmem:[%s212 + $0x488] sm:$0xff] %v2420
        %3445 = vst [vmem:[%s212 + $0x490] sm:$0xff] %v2421
        %3446 = vst [vmem:[%s212 + $0x498] sm:$0xff] %v2422
        %3447 = vst [vmem:[%s212 + $0x4a0] sm:$0xff] %v2423
        %3448 = vst [vmem:[%s212 + $0x4a8] sm:$0xff] %v2424
        %3449 = vst [vmem:[%s212 + $0x4b0] sm:$0xff] %v2425
        %3450 = vst [vmem:[%s212 + $0x4b8] sm:$0xff] %v2426
        %3451 = vst [vmem:[%s212 + $0x4c0] sm:$0xff] %v2427
        %3452 = vst [vmem:[%s212 + $0x4c8] sm:$0xff] %v2428
        %3453 = vst [vmem:[%s212 + $0x4d0] sm:$0xff] %v2429
        %3454 = vst [vmem:[%s212 + $0x4d8] sm:$0xff] %v2430
        %3455 = vst [vmem:[%s212 + $0x4e0] sm:$0xff] %v2431
        %3456 = vst [vmem:[%s212 + $0x4e8] sm:$0xff] %v2432
        %3457 = vst [vmem:[%s212 + $0x4f0] sm:$0xff] %v2433
        %3458 = vst [vmem:[%s212 + $0x4f8] sm:$0xff] %v2434
        %3459 = vst [vmem:[%s212 + $0x500] sm:$0xff] %v2435
        %3460 = vst [vmem:[%s212 + $0x508] sm:$0xff] %v2436
        %3461 = vst [vmem:[%s212 + $0x510] sm:$0xff] %v2437
        %3462 = vst [vmem:[%s212 + $0x518] sm:$0xff] %v2438
        %3463 = vst [vmem:[%s212 + $0x520] sm:$0xff] %v2439
        %3464 = vst [vmem:[%s212 + $0x528] sm:$0xff] %v2440
        %3465 = vst [vmem:[%s212 + $0x530] sm:$0xff] %v2441
        %3466 = vst [vmem:[%s212 + $0x538] sm:$0xff] %v2442
        %3467 = vst [vmem:[%s212 + $0x540] sm:$0xff] %v2443
        %3468 = vst [vmem:[%s212 + $0x548] sm:$0xff] %v2444
        %3469 = vst [vmem:[%s212 + $0x550] sm:$0xff] %v2445
        %3470 = vst [vmem:[%s212 + $0x558] sm:$0xff] %v2446
        %3471 = vst [vmem:[%s212 + $0x560] sm:$0xff] %v2447
        %3472 = vst [vmem:[%s212 + $0x568] sm:$0xff] %v2448
        %3473 = vst [vmem:[%s212 + $0x570] sm:$0xff] %v2449
        %3474 = vst [vmem:[%s212 + $0x578] sm:$0xff] %v2450
        %3475 = vst [vmem:[%s212 + $0x580] sm:$0xff] %v2451
        %3476 = vst [vmem:[%s212 + $0x588] sm:$0xff] %v2452
        %3477 = vst [vmem:[%s212 + $0x590] sm:$0xff] %v2453
        %3478 = vst [vmem:[%s212 + $0x598] sm:$0xff] %v2454
        %3479 = vst [vmem:[%s212 + $0x5a0] sm:$0xff] %v2455
        %3480 = vst [vmem:[%s212 + $0x5a8] sm:$0xff] %v2456
        %3481 = vst [vmem:[%s212 + $0x5b0] sm:$0xff] %v2457
        %3482 = vst [vmem:[%s212 + $0x5b8] sm:$0xff] %v2458
        %3483 = vst [vmem:[%s212 + $0x5c0] sm:$0xff] %v2459
        %3484 = vst [vmem:[%s212 + $0x5c8] sm:$0xff] %v2460
        %3485 = vst [vmem:[%s212 + $0x5d0] sm:$0xff] %v2461
        %3486 = vst [vmem:[%s212 + $0x5d8] sm:$0xff] %v2462
        %3487 = vst [vmem:[%s212 + $0x5e0] sm:$0xff] %v2463
        %3488 = vst [vmem:[%s212 + $0x5e8] sm:$0xff] %v2464
        %3489 = vst [vmem:[%s212 + $0x5f0] sm:$0xff] %v2465
        %3490 = vst [vmem:[%s212 + $0x5f8] sm:$0xff] %v2466
        %3491 = vst [vmem:[%s212 + $0x600] sm:$0xff] %v2467
        %3492 = vst [vmem:[%s212 + $0x608] sm:$0xff] %v2468
        %3493 = vst [vmem:[%s212 + $0x610] sm:$0xff] %v2469
        %3494 = vst [vmem:[%s212 + $0x618] sm:$0xff] %v2470
        %3495 = vst [vmem:[%s212 + $0x620] sm:$0xff] %v2471
        %3496 = vst [vmem:[%s212 + $0x628] sm:$0xff] %v2472
        %3497 = vst [vmem:[%s212 + $0x630] sm:$0xff] %v2473
        %3498 = vst [vmem:[%s212 + $0x638] sm:$0xff] %v2474
        %3499 = vst [vmem:[%s212 + $0x640] sm:$0xff] %v2475
        %3500 = vst [vmem:[%s212 + $0x648] sm:$0xff] %v2476
        %3501 = vst [vmem:[%s212 + $0x650] sm:$0xff] %v2477
        %3502 = vst [vmem:[%s212 + $0x658] sm:$0xff] %v2478
        %3503 = vst [vmem:[%s212 + $0x660] sm:$0xff] %v2479
        %3504 = vst [vmem:[%s212 + $0x668] sm:$0xff] %v2480
        %3505 = vst [vmem:[%s212 + $0x670] sm:$0xff] %v2481
        %3506 = vst [vmem:[%s212 + $0x678] sm:$0xff] %v2482
        %3507 = vst [vmem:[%s212 + $0x680] sm:$0xff] %v2483
        %3508 = vst [vmem:[%s212 + $0x688] sm:$0xff] %v2484
        %3509 = vst [vmem:[%s212 + $0x690] sm:$0xff] %v2485
        %3510 = vst [vmem:[%s212 + $0x698] sm:$0xff] %v2486
        %3511 = vst [vmem:[%s212 + $0x6a0] sm:$0xff] %v2487
        %3512 = vst [vmem:[%s212 + $0x6a8] sm:$0xff] %v2488
        %3513 = vst [vmem:[%s212 + $0x6b0] sm:$0xff] %v2489
        %3514 = vst [vmem:[%s212 + $0x6b8] sm:$0xff] %v2490
        %3515 = vst [vmem:[%s212 + $0x6c0] sm:$0xff] %v2491
        %3516 = vst [vmem:[%s212 + $0x6c8] sm:$0xff] %v2492
        %3517 = vst [vmem:[%s212 + $0x6d0] sm:$0xff] %v2493
        %3518 = vst [vmem:[%s212 + $0x6d8] sm:$0xff] %v2494
        %3519 = vst [vmem:[%s212 + $0x6e0] sm:$0xff] %v2495
        %3520 = vst [vmem:[%s212 + $0x6e8] sm:$0xff] %v2496
        %3521 = vst [vmem:[%s212 + $0x6f0] sm:$0xff] %v2497
        %3522 = vst [vmem:[%s212 + $0x6f8] sm:$0xff] %v2498
        %3523 = vst [vmem:[%s212 + $0x700] sm:$0xff] %v2499
        %3524 = vst [vmem:[%s212 + $0x708] sm:$0xff] %v2500
        %3525 = vst [vmem:[%s212 + $0x710] sm:$0xff] %v2501
        %3526 = vst [vmem:[%s212 + $0x718] sm:$0xff] %v2502
        %3527 = vst [vmem:[%s212 + $0x720] sm:$0xff] %v2503
        %3528 = vst [vmem:[%s212 + $0x728] sm:$0xff] %v2504
        %3529 = vst [vmem:[%s212 + $0x730] sm:$0xff] %v2505
        %3530 = vst [vmem:[%s212 + $0x738] sm:$0xff] %v2506
        %3531 = vst [vmem:[%s212 + $0x740] sm:$0xff] %v2507
        %3532 = vst [vmem:[%s212 + $0x748] sm:$0xff] %v2508
        %3533 = vst [vmem:[%s212 + $0x750] sm:$0xff] %v2509
        %3534 = vst [vmem:[%s212 + $0x758] sm:$0xff] %v2510
        %3535 = vst [vmem:[%s212 + $0x760] sm:$0xff] %v2511
        %3536 = vst [vmem:[%s212 + $0x768] sm:$0xff] %v2512
        %3537 = vst [vmem:[%s212 + $0x770] sm:$0xff] %v2513
        %3538 = vst [vmem:[%s212 + $0x778] sm:$0xff] %v2514
        %3539 = vst [vmem:[%s212 + $0x780] sm:$0xff] %v2515
        %3540 = vst [vmem:[%s212 + $0x788] sm:$0xff] %v2516
        %3541 = vst [vmem:[%s212 + $0x790] sm:$0xff] %v2517
        %3542 = vst [vmem:[%s212 + $0x798] sm:$0xff] %v2518
        %3543 = vst [vmem:[%s212 + $0x7a0] sm:$0xff] %v2519
        %3544 = vst [vmem:[%s212 + $0x7a8] sm:$0xff] %v2520
        %3545 = vst [vmem:[%s212 + $0x7b0] sm:$0xff] %v2521
        %3546 = vst [vmem:[%s212 + $0x7b8] sm:$0xff] %v2522
        %3547 = vst [vmem:[%s212 + $0x7c0] sm:$0xff] %v2523
        %3548 = vst [vmem:[%s212 + $0x7c8] sm:$0xff] %v2524
        %3549 = vst [vmem:[%s212 + $0x7d0] sm:$0xff] %v2525
        %3550 = vst [vmem:[%s212 + $0x7d8] sm:$0xff] %v2526
        %3551 = vst [vmem:[%s212 + $0x7e0] sm:$0xff] %v2527
        %3552 = vst [vmem:[%s212 + $0x7e8] sm:$0xff] %v2528
        %3553 = vst [vmem:[%s212 + $0x7f0] sm:$0xff] %v2529
        %3554 = vst [vmem:[%s212 + $0x7f8] sm:$0xff] %v2530
        %3555 = vst [vmem:[%s212 + $0x800] sm:$0xff] %v2531
        %3556 = vst [vmem:[%s212 + $0x808] sm:$0xff] %v2532
        %3557 = vst [vmem:[%s212 + $0x810] sm:$0xff] %v2533
        %3558 = vst [vmem:[%s212 + $0x818] sm:$0xff] %v2534
        %3559 = vst [vmem:[%s212 + $0x820] sm:$0xff] %v2535
        %3560 = vst [vmem:[%s212 + $0x828] sm:$0xff] %v2536
        %3561 = vst [vmem:[%s212 + $0x830] sm:$0xff] %v2537
        %3562 = vst [vmem:[%s212 + $0x838] sm:$0xff] %v2538
        %3563 = vst [vmem:[%s212 + $0x840] sm:$0xff] %v2539
        %3564 = vst [vmem:[%s212 + $0x848] sm:$0xff] %v2540
        %3565 = vst [vmem:[%s212 + $0x850] sm:$0xff] %v2541
        %3566 = vst [vmem:[%s212 + $0x858] sm:$0xff] %v2542
        %3567 = vst [vmem:[%s212 + $0x860] sm:$0xff] %v2543
        %3568 = vst [vmem:[%s212 + $0x868] sm:$0xff] %v2544
        %3569 = vst [vmem:[%s212 + $0x870] sm:$0xff] %v2545
        %3570 = vst [vmem:[%s212 + $0x878] sm:$0xff] %v2546
        %3571 = vst [vmem:[%s212 + $0x880] sm:$0xff] %v2547
        %3572 = vst [vmem:[%s212 + $0x888] sm:$0xff] %v2548
        %3573 = vst [vmem:[%s212 + $0x890] sm:$0xff] %v2549
        %3574 = vst [vmem:[%s212 + $0x898] sm:$0xff] %v2550
        %3575 = vst [vmem:[%s212 + $0x8a0] sm:$0xff] %v2551
        %3576 = vst [vmem:[%s212 + $0x8a8] sm:$0xff] %v2552
        %3577 = vst [vmem:[%s212 + $0x8b0] sm:$0xff] %v2553
        %3578 = vst [vmem:[%s212 + $0x8b8] sm:$0xff] %v2554
        %3579 = vst [vmem:[%s212 + $0x8c0] sm:$0xff] %v2555
        %3580 = vst [vmem:[%s212 + $0x8c8] sm:$0xff] %v2556
        %3581 = vst [vmem:[%s212 + $0x8d0] sm:$0xff] %v2557
        %3582 = vst [vmem:[%s212 + $0x8d8] sm:$0xff] %v2558
        %3583 = vst [vmem:[%s212 + $0x8e0] sm:$0xff] %v2559
        %3584 = vst [vmem:[%s212 + $0x8e8] sm:$0xff] %v2560
        %3585 = vst [vmem:[%s212 + $0x8f0] sm:$0xff] %v2561
        %3586 = vst [vmem:[%s212 + $0x8f8] sm:$0xff] %v2562
        %3587 = vst [vmem:[%s212 + $0x900] sm:$0xff] %v2563
        %3588 = vst [vmem:[%s212 + $0x908] sm:$0xff] %v2564
        %3589 = vst [vmem:[%s212 + $0x910] sm:$0xff] %v2565
        %3590 = vst [vmem:[%s212 + $0x918] sm:$0xff] %v2566
        %3591 = vst [vmem:[%s212 + $0x920] sm:$0xff] %v2567
        %3592 = vst [vmem:[%s212 + $0x928] sm:$0xff] %v2568
        %3593 = vst [vmem:[%s212 + $0x930] sm:$0xff] %v2569
        %3594 = vst [vmem:[%s212 + $0x938] sm:$0xff] %v2570
        %3595 = vst [vmem:[%s212 + $0x940] sm:$0xff] %v2571
        %3596 = vst [vmem:[%s212 + $0x948] sm:$0xff] %v2572
        %3597 = vst [vmem:[%s212 + $0x950] sm:$0xff] %v2573
        %3598 = vst [vmem:[%s212 + $0x958] sm:$0xff] %v2574
        %3599 = vst [vmem:[%s212 + $0x960] sm:$0xff] %v2575
        %3600 = vst [vmem:[%s212 + $0x968] sm:$0xff] %v2576
        %3601 = vst [vmem:[%s212 + $0x970] sm:$0xff] %v2577
        %3602 = vst [vmem:[%s212 + $0x978] sm:$0xff] %v2578
        %3603 = vst [vmem:[%s212 + $0x980] sm:$0xff] %v2579
        %3604 = vst [vmem:[%s212 + $0x988] sm:$0xff] %v2580
        %3605 = vst [vmem:[%s212 + $0x990] sm:$0xff] %v2581
        %3606 = vst [vmem:[%s212 + $0x998] sm:$0xff] %v2582
        %3607 = vst [vmem:[%s212 + $0x9a0] sm:$0xff] %v2583
        %3608 = vst [vmem:[%s212 + $0x9a8] sm:$0xff] %v2584
        %3609 = vst [vmem:[%s212 + $0x9b0] sm:$0xff] %v2585
        %3610 = vst [vmem:[%s212 + $0x9b8] sm:$0xff] %v2586
        %3611 = vst [vmem:[%s212 + $0x9c0] sm:$0xff] %v2587
        %3612 = vst [vmem:[%s212 + $0x9c8] sm:$0xff] %v2588
        %3613 = vst [vmem:[%s212 + $0x9d0] sm:$0xff] %v2589
        %3614 = vst [vmem:[%s212 + $0x9d8] sm:$0xff] %v2590
        %3615 = vst [vmem:[%s212 + $0x9e0] sm:$0xff] %v2591
        %3616 = vst [vmem:[%s212 + $0x9e8] sm:$0xff] %v2592
        %3617 = vst [vmem:[%s212 + $0x9f0] sm:$0xff] %v2593
        %3618 = vst [vmem:[%s212 + $0x9f8] sm:$0xff] %v2594
        %3619 = vst [vmem:[%s212 + $0xa00] sm:$0xff] %v2595
        %3620 = vst [vmem:[%s212 + $0xa08] sm:$0xff] %v2596
        %3621 = vst [vmem:[%s212 + $0xa10] sm:$0xff] %v2597
        %3622 = vst [vmem:[%s212 + $0xa18] sm:$0xff] %v2598
        %3623 = vst [vmem:[%s212 + $0xa20] sm:$0xff] %v2599
        %3624 = vst [vmem:[%s212 + $0xa28] sm:$0xff] %v2600
        %3625 = vst [vmem:[%s212 + $0xa30] sm:$0xff] %v2601
        %3626 = vst [vmem:[%s212 + $0xa38] sm:$0xff] %v2602
        %3627 = vst [vmem:[%s212 + $0xa40] sm:$0xff] %v2603
        %3628 = vst [vmem:[%s212 + $0xa48] sm:$0xff] %v2604
        %3629 = vst [vmem:[%s212 + $0xa50] sm:$0xff] %v2605
        %3630 = vst [vmem:[%s212 + $0xa58] sm:$0xff] %v2606
        %3631 = vst [vmem:[%s212 + $0xa60] sm:$0xff] %v2607
        %3632 = vst [vmem:[%s212 + $0xa68] sm:$0xff] %v2608
        %3633 = vst [vmem:[%s212 + $0xa70] sm:$0xff] %v2609
        %3634 = vst [vmem:[%s212 + $0xa78] sm:$0xff] %v2610
        %3635 = vst [vmem:[%s212 + $0xa80] sm:$0xff] %v2611
        %3636 = vst [vmem:[%s212 + $0xa88] sm:$0xff] %v2612
        %3637 = vst [vmem:[%s212 + $0xa90] sm:$0xff] %v2613
        %3638 = vst [vmem:[%s212 + $0xa98] sm:$0xff] %v2614
        %3639 = vst [vmem:[%s212 + $0xaa0] sm:$0xff] %v2615
        %3640 = vst [vmem:[%s212 + $0xaa8] sm:$0xff] %v2616
        %3641 = vst [vmem:[%s212 + $0xab0] sm:$0xff] %v2617
        %3642 = vst [vmem:[%s212 + $0xab8] sm:$0xff] %v2618
        %3643 = vst [vmem:[%s212 + $0xac0] sm:$0xff] %v2619
        %3644 = vst [vmem:[%s212 + $0xac8] sm:$0xff] %v2620
        %3645 = vst [vmem:[%s212 + $0xad0] sm:$0xff] %v2621
        %3646 = vst [vmem:[%s212 + $0xad8] sm:$0xff] %v2622
        %3647 = vst [vmem:[%s212 + $0xae0] sm:$0xff] %v2623
        %3648 = vst [vmem:[%s212 + $0xae8] sm:$0xff] %v2624
        %3649 = vst [vmem:[%s212 + $0xaf0] sm:$0xff] %v2625
        %3650 = vst [vmem:[%s212 + $0xaf8] sm:$0xff] %v2626
        %3651 = vst [vmem:[%s212 + $0xb00] sm:$0xff] %v2627
        %3652 = vst [vmem:[%s212 + $0xb08] sm:$0xff] %v2628
        %3653 = vst [vmem:[%s212 + $0xb10] sm:$0xff] %v2629
        %3654 = vst [vmem:[%s212 + $0xb18] sm:$0xff] %v2630
        %3655 = vst [vmem:[%s212 + $0xb20] sm:$0xff] %v2631
        %3656 = vst [vmem:[%s212 + $0xb28] sm:$0xff] %v2632
        %3657 = vst [vmem:[%s212 + $0xb30] sm:$0xff] %v2633
        %3658 = vst [vmem:[%s212 + $0xb38] sm:$0xff] %v2634
        %3659 = vst [vmem:[%s212 + $0xb40] sm:$0xff] %v2635
        %3660 = vst [vmem:[%s212 + $0xb48] sm:$0xff] %v2636
        %3661 = vst [vmem:[%s212 + $0xb50] sm:$0xff] %v2637
        %3662 = vst [vmem:[%s212 + $0xb58] sm:$0xff] %v2638
        %3663 = vst [vmem:[%s212 + $0xb60] sm:$0xff] %v2639
        %3664 = vst [vmem:[%s212 + $0xb68] sm:$0xff] %v2640
        %3665 = vst [vmem:[%s212 + $0xb70] sm:$0xff] %v2641
        %3666 = vst [vmem:[%s212 + $0xb78] sm:$0xff] %v2642
        %3667 = vst [vmem:[%s212 + $0xb80] sm:$0xff] %v2643
        %3668 = vst [vmem:[%s212 + $0xb88] sm:$0xff] %v2644
        %3669 = vst [vmem:[%s212 + $0xb90] sm:$0xff] %v2645
        %3670 = vst [vmem:[%s212 + $0xb98] sm:$0xff] %v2646
        %3671 = vst [vmem:[%s212 + $0xba0] sm:$0xff] %v2647
        %3672 = vst [vmem:[%s212 + $0xba8] sm:$0xff] %v2648
        %3673 = vst [vmem:[%s212 + $0xbb0] sm:$0xff] %v2649
        %3674 = vst [vmem:[%s212 + $0xbb8] sm:$0xff] %v2650
        %3675 = vst [vmem:[%s212 + $0xbc0] sm:$0xff] %v2651
        %3676 = vst [vmem:[%s212 + $0xbc8] sm:$0xff] %v2652
        %3677 = vst [vmem:[%s212 + $0xbd0] sm:$0xff] %v2653
        %3678 = vst [vmem:[%s212 + $0xbd8] sm:$0xff] %v2654
        %3679 = vst [vmem:[%s212 + $0xbe0] sm:$0xff] %v2655
        %3680 = vst [vmem:[%s212 + $0xbe8] sm:$0xff] %v2656
        %3681 = vst [vmem:[%s212 + $0xbf0] sm:$0xff] %v2657
        %3682 = vst [vmem:[%s212 + $0xbf8] sm:$0xff] %v2658
        %3683 = vst [vmem:[%s212 + $0xc00] sm:$0xff] %v2659
        %3684 = vst [vmem:[%s212 + $0xc08] sm:$0xff] %v2660
        %3685 = vst [vmem:[%s212 + $0xc10] sm:$0xff] %v2661
        %3686 = vst [vmem:[%s212 + $0xc18] sm:$0xff] %v2662
        %3687 = vst [vmem:[%s212 + $0xc20] sm:$0xff] %v2663
        %3688 = vst [vmem:[%s212 + $0xc28] sm:$0xff] %v2664
        %3689 = vst [vmem:[%s212 + $0xc30] sm:$0xff] %v2665
        %3690 = vst [vmem:[%s212 + $0xc38] sm:$0xff] %v2666
        %3691 = vst [vmem:[%s212 + $0xc40] sm:$0xff] %v2667
        %3692 = vst [vmem:[%s212 + $0xc48] sm:$0xff] %v2668
        %3693 = vst [vmem:[%s212 + $0xc50] sm:$0xff] %v2669
        %3694 = vst [vmem:[%s212 + $0xc58] sm:$0xff] %v2670
        %3695 = vst [vmem:[%s212 + $0xc60] sm:$0xff] %v2671
        %3696 = vst [vmem:[%s212 + $0xc68] sm:$0xff] %v2672
        %3697 = vst [vmem:[%s212 + $0xc70] sm:$0xff] %v2673
        %3698 = vst [vmem:[%s212 + $0xc78] sm:$0xff] %v2674
        %3699 = vst [vmem:[%s212 + $0xc80] sm:$0xff] %v2675
        %3700 = vst [vmem:[%s212 + $0xc88] sm:$0xff] %v2676
        %3701 = vst [vmem:[%s212 + $0xc90] sm:$0xff] %v2677
        %3702 = vst [vmem:[%s212 + $0xc98] sm:$0xff] %v2678
        %3703 = vst [vmem:[%s212 + $0xca0] sm:$0xff] %v2679
        %3704 = vst [vmem:[%s212 + $0xca8] sm:$0xff] %v2680
        %3705 = vst [vmem:[%s212 + $0xcb0] sm:$0xff] %v2681
        %3706 = vst [vmem:[%s212 + $0xcb8] sm:$0xff] %v2682
        %3707 = vst [vmem:[%s212 + $0xcc0] sm:$0xff] %v2683
        %3708 = vst [vmem:[%s212 + $0xcc8] sm:$0xff] %v2684
        %3709 = vst [vmem:[%s212 + $0xcd0] sm:$0xff] %v2685
        %3710 = vst [vmem:[%s212 + $0xcd8] sm:$0xff] %v2686
        %3711 = vst [vmem:[%s212 + $0xce0] sm:$0xff] %v2687
        %3712 = vst [vmem:[%s212 + $0xce8] sm:$0xff] %v2688
        %3713 = vst [vmem:[%s212 + $0xcf0] sm:$0xff] %v2689
        %3714 = vst [vmem:[%s212 + $0xcf8] sm:$0xff] %v2690
        %3715 = vst [vmem:[%s212 + $0xd00] sm:$0xff] %v2691
        %3716 = vst [vmem:[%s212 + $0xd08] sm:$0xff] %v2692
        %3717 = vst [vmem:[%s212 + $0xd10] sm:$0xff] %v2693
        %3718 = vst [vmem:[%s212 + $0xd18] sm:$0xff] %v2694
        %3719 = vst [vmem:[%s212 + $0xd20] sm:$0xff] %v2695
        %3720 = vst [vmem:[%s212 + $0xd28] sm:$0xff] %v2696
        %3721 = vst [vmem:[%s212 + $0xd30] sm:$0xff] %v2697
        %3722 = vst [vmem:[%s212 + $0xd38] sm:$0xff] %v2698
        %3723 = vst [vmem:[%s212 + $0xd40] sm:$0xff] %v2699
        %3724 = vst [vmem:[%s212 + $0xd48] sm:$0xff] %v2700
        %3725 = vst [vmem:[%s212 + $0xd50] sm:$0xff] %v2701
        %3726 = vst [vmem:[%s212 + $0xd58] sm:$0xff] %v2702
        %3727 = vst [vmem:[%s212 + $0xd60] sm:$0xff] %v2703
        %3728 = vst [vmem:[%s212 + $0xd68] sm:$0xff] %v2704
        %3729 = vst [vmem:[%s212 + $0xd70] sm:$0xff] %v2705
        %3730 = vst [vmem:[%s212 + $0xd78] sm:$0xff] %v2706
        %3731 = vst [vmem:[%s212 + $0xd80] sm:$0xff] %v2707
        %3732 = vst [vmem:[%s212 + $0xd88] sm:$0xff] %v2708
        %3733 = vst [vmem:[%s212 + $0xd90] sm:$0xff] %v2709
        %3734 = vst [vmem:[%s212 + $0xd98] sm:$0xff] %v2710
        %3735 = vst [vmem:[%s212 + $0xda0] sm:$0xff] %v2711
        %3736 = vst [vmem:[%s212 + $0xda8] sm:$0xff] %v2712
        %3737 = vst [vmem:[%s212 + $0xdb0] sm:$0xff] %v2713
        %3738 = vst [vmem:[%s212 + $0xdb8] sm:$0xff] %v2714
        %3739 = vst [vmem:[%s212 + $0xdc0] sm:$0xff] %v2715
        %3740 = vst [vmem:[%s212 + $0xdc8] sm:$0xff] %v2716
        %3741 = vst [vmem:[%s212 + $0xdd0] sm:$0xff] %v2717
        %3742 = vst [vmem:[%s212 + $0xdd8] sm:$0xff] %v2718
        %3743 = vst [vmem:[%s212 + $0xde0] sm:$0xff] %v2719
        %3744 = vst [vmem:[%s212 + $0xde8] sm:$0xff] %v2720
        %3745 = vst [vmem:[%s212 + $0xdf0] sm:$0xff] %v2721
        %3746 = vst [vmem:[%s212 + $0xdf8] sm:$0xff] %v2722
        %3747 = vst [vmem:[%s212 + $0xe00] sm:$0xff] %v2723
        %3748 = vst [vmem:[%s212 + $0xe08] sm:$0xff] %v2724
        %3749 = vst [vmem:[%s212 + $0xe10] sm:$0xff] %v2725
        %3750 = vst [vmem:[%s212 + $0xe18] sm:$0xff] %v2726
        %3751 = vst [vmem:[%s212 + $0xe20] sm:$0xff] %v2727
        %3752 = vst [vmem:[%s212 + $0xe28] sm:$0xff] %v2728
        %3753 = vst [vmem:[%s212 + $0xe30] sm:$0xff] %v2729
        %3754 = vst [vmem:[%s212 + $0xe38] sm:$0xff] %v2730
        %3755 = vst [vmem:[%s212 + $0xe40] sm:$0xff] %v2731
        %3756 = vst [vmem:[%s212 + $0xe48] sm:$0xff] %v2732
        %3757 = vst [vmem:[%s212 + $0xe50] sm:$0xff] %v2733
        %3758 = vst [vmem:[%s212 + $0xe58] sm:$0xff] %v2734
        %3759 = vst [vmem:[%s212 + $0xe60] sm:$0xff] %v2735
        %3760 = vst [vmem:[%s212 + $0xe68] sm:$0xff] %v2736
        %3761 = vst [vmem:[%s212 + $0xe70] sm:$0xff] %v2737
        %3762 = vst [vmem:[%s212 + $0xe78] sm:$0xff] %v2738
        %3763 = vst [vmem:[%s212 + $0xe80] sm:$0xff] %v2739
        %3764 = vst [vmem:[%s212 + $0xe88] sm:$0xff] %v2740
        %3765 = vst [vmem:[%s212 + $0xe90] sm:$0xff] %v2741
        %3766 = vst [vmem:[%s212 + $0xe98] sm:$0xff] %v2742
        %3767 = vst [vmem:[%s212 + $0xea0] sm:$0xff] %v2743
        %3768 = vst [vmem:[%s212 + $0xea8] sm:$0xff] %v2744
        %3769 = vst [vmem:[%s212 + $0xeb0] sm:$0xff] %v2745
        %3770 = vst [vmem:[%s212 + $0xeb8] sm:$0xff] %v2746
        %3771 = vst [vmem:[%s212 + $0xec0] sm:$0xff] %v2747
        %3772 = vst [vmem:[%s212 + $0xec8] sm:$0xff] %v2748
        %3773 = vst [vmem:[%s212 + $0xed0] sm:$0xff] %v2749
        %3774 = vst [vmem:[%s212 + $0xed8] sm:$0xff] %v2750
        %3775 = vst [vmem:[%s212 + $0xee0] sm:$0xff] %v2751
        %3776 = vst [vmem:[%s212 + $0xee8] sm:$0xff] %v2752
        %3777 = vst [vmem:[%s212 + $0xef0] sm:$0xff] %v2753
        %3778 = vst [vmem:[%s212 + $0xef8] sm:$0xff] %v2754
        %3779 = vst [vmem:[%s212 + $0xf00] sm:$0xff] %v2755
        %3780 = vst [vmem:[%s212 + $0xf08] sm:$0xff] %v2756
        %3781 = vst [vmem:[%s212 + $0xf10] sm:$0xff] %v2757
        %3782 = vst [vmem:[%s212 + $0xf18] sm:$0xff] %v2758
        %3783 = vst [vmem:[%s212 + $0xf20] sm:$0xff] %v2759
        %3784 = vst [vmem:[%s212 + $0xf28] sm:$0xff] %v2760
        %3785 = vst [vmem:[%s212 + $0xf30] sm:$0xff] %v2761
        %3786 = vst [vmem:[%s212 + $0xf38] sm:$0xff] %v2762
        %3787 = vst [vmem:[%s212 + $0xf40] sm:$0xff] %v2763
        %3788 = vst [vmem:[%s212 + $0xf48] sm:$0xff] %v2764
        %3789 = vst [vmem:[%s212 + $0xf50] sm:$0xff] %v2765
        %3790 = vst [vmem:[%s212 + $0xf58] sm:$0xff] %v2766
        %3791 = vst [vmem:[%s212 + $0xf60] sm:$0xff] %v2767
        %3792 = vst [vmem:[%s212 + $0xf68] sm:$0xff] %v2768
        %3793 = vst [vmem:[%s212 + $0xf70] sm:$0xff] %v2769
        %3794 = vst [vmem:[%s212 + $0xf78] sm:$0xff] %v2770
        %3795 = vst [vmem:[%s212 + $0xf80] sm:$0xff] %v2771
        %3796 = vst [vmem:[%s212 + $0xf88] sm:$0xff] %v2772
        %3797 = vst [vmem:[%s212 + $0xf90] sm:$0xff] %v2773
        %3798 = vst [vmem:[%s212 + $0xf98] sm:$0xff] %v2774
        %3799 = vst [vmem:[%s212 + $0xfa0] sm:$0xff] %v2775
        %3800 = vst [vmem:[%s212 + $0xfa8] sm:$0xff] %v2776
        %3801 = vst [vmem:[%s212 + $0xfb0] sm:$0xff] %v2777
        %3802 = vst [vmem:[%s212 + $0xfb8] sm:$0xff] %v2778
        %3803 = vst [vmem:[%s212 + $0xfc0] sm:$0xff] %v2779
        %3804 = vst [vmem:[%s212 + $0xfc8] sm:$0xff] %v2780
        %3805 = vst [vmem:[%s212 + $0xfd0] sm:$0xff] %v2781
        %3806 = vst [vmem:[%s212 + $0xfd8] sm:$0xff] %v2782
        %3807 = vst [vmem:[%s212 + $0xfe0] sm:$0xff] %v2783
        %3808 = vst [vmem:[%s212 + $0xfe8] sm:$0xff] %v2784
        %3809 = vst [vmem:[%s212 + $0xff0] sm:$0xff] %v2785
        %3810 = vst [vmem:[%s212 + $0xff8] sm:$0xff] %v2786
        %3811 = vst [vmem:[%s212 + $0x1000] sm:$0xff] %v2787
        %3812 = vst [vmem:[%s212 + $0x1008] sm:$0xff] %v2788
        %3813 = vst [vmem:[%s212 + $0x1010] sm:$0xff] %v2789
        %3814 = vst [vmem:[%s212 + $0x1018] sm:$0xff] %v2790
        %3815 = vst [vmem:[%s212 + $0x1020] sm:$0xff] %v2791
        %3816 = vst [vmem:[%s212 + $0x1028] sm:$0xff] %v2792
        %3817 = vst [vmem:[%s212 + $0x1030] sm:$0xff] %v2793
        %3818 = vst [vmem:[%s212 + $0x1038] sm:$0xff] %v2794
        %3819 = vst [vmem:[%s212 + $0x1040] sm:$0xff] %v2795
        %3820 = vst [vmem:[%s212 + $0x1048] sm:$0xff] %v2796
        %3821 = vst [vmem:[%s212 + $0x1050] sm:$0xff] %v2797
        %3822 = vst [vmem:[%s212 + $0x1058] sm:$0xff] %v2798
        %3823 = vst [vmem:[%s212 + $0x1060] sm:$0xff] %v2799
        %3824 = vst [vmem:[%s212 + $0x1068] sm:$0xff] %v2800
        %3825 = vst [vmem:[%s212 + $0x1070] sm:$0xff] %v2801
        %3826 = vst [vmem:[%s212 + $0x1078] sm:$0xff] %v2802
        %3827 = vst [vmem:[%s212 + $0x1080] sm:$0xff] %v2803
        %3828 = vst [vmem:[%s212 + $0x1088] sm:$0xff] %v2804
        %3829 = vst [vmem:[%s212 + $0x1090] sm:$0xff] %v2805
        %3830 = vst [vmem:[%s212 + $0x1098] sm:$0xff] %v2806
        %3831 = vst [vmem:[%s212 + $0x10a0] sm:$0xff] %v2807
        %3832 = vst [vmem:[%s212 + $0x10a8] sm:$0xff] %v2808
        %3833 = vst [vmem:[%s212 + $0x10b0] sm:$0xff] %v2809
        %3834 = vst [vmem:[%s212 + $0x10b8] sm:$0xff] %v2810
        %3835 = vst [vmem:[%s212 + $0x10c0] sm:$0xff] %v2811
        %3836 = vst [vmem:[%s212 + $0x10c8] sm:$0xff] %v2812
        %3837 = vst [vmem:[%s212 + $0x10d0] sm:$0xff] %v2813
        %3838 = vst [vmem:[%s212 + $0x10d8] sm:$0xff] %v2814
        %3839 = vst [vmem:[%s212 + $0x10e0] sm:$0xff] %v2815
        %3840 = vst [vmem:[%s212 + $0x10e8] sm:$0xff] %v2816
        %3841 = vst [vmem:[%s212 + $0x10f0] sm:$0xff] %v2817
        %3842 = vst [vmem:[%s212 + $0x10f8] sm:$0xff] %v2818
        %3843 = vst [vmem:[%s212 + $0x1100] sm:$0xff] %v2819
        %3844 = vst [vmem:[%s212 + $0x1108] sm:$0xff] %v2820
        %3845 = vst [vmem:[%s212 + $0x1110] sm:$0xff] %v2821
        %3846 = vst [vmem:[%s212 + $0x1118] sm:$0xff] %v2822
        %3847 = vst [vmem:[%s212 + $0x1120] sm:$0xff] %v2823
        %3848 = vst [vmem:[%s212 + $0x1128] sm:$0xff] %v2824
        %3849 = vst [vmem:[%s212 + $0x1130] sm:$0xff] %v2825
        %3850 = vst [vmem:[%s212 + $0x1138] sm:$0xff] %v2826
        %3851 = vst [vmem:[%s212 + $0x1140] sm:$0xff] %v2827
        %3852 = vst [vmem:[%s212 + $0x1148] sm:$0xff] %v2828
        %3853 = vst [vmem:[%s212 + $0x1150] sm:$0xff] %v2829
        %3854 = vst [vmem:[%s212 + $0x1158] sm:$0xff] %v2830
        %3855 = vst [vmem:[%s212 + $0x1160] sm:$0xff] %v2831
        %3856 = vst [vmem:[%s212 + $0x1168] sm:$0xff] %v2832
        %3857 = vst [vmem:[%s212 + $0x1170] sm:$0xff] %v2833
        %3858 = vst [vmem:[%s212 + $0x1178] sm:$0xff] %v2834
        %3859 = vst [vmem:[%s212 + $0x1180] sm:$0xff] %v2835
        %3860 = vst [vmem:[%s212 + $0x1188] sm:$0xff] %v2836
        %3861 = vst [vmem:[%s212 + $0x1190] sm:$0xff] %v2837
        %3862 = vst [vmem:[%s212 + $0x1198] sm:$0xff] %v2838
        %3863 = vst [vmem:[%s212 + $0x11a0] sm:$0xff] %v2839
        %3864 = vst [vmem:[%s212 + $0x11a8] sm:$0xff] %v2840
        %3865 = vst [vmem:[%s212 + $0x11b0] sm:$0xff] %v2841
        %3866 = vst [vmem:[%s212 + $0x11b8] sm:$0xff] %v2842
        %3867 = vst [vmem:[%s212 + $0x11c0] sm:$0xff] %v2843
        %3868 = vst [vmem:[%s212 + $0x11c8] sm:$0xff] %v2844
        %3869 = vst [vmem:[%s212 + $0x11d0] sm:$0xff] %v2845
        %3870 = vst [vmem:[%s212 + $0x11d8] sm:$0xff] %v2846
        %3871 = vst [vmem:[%s212 + $0x11e0] sm:$0xff] %v2847
        %3872 = vst [vmem:[%s212 + $0x11e8] sm:$0xff] %v2848
        %3873 = vst [vmem:[%s212 + $0x11f0] sm:$0xff] %v2849
        %3874 = vst [vmem:[%s212 + $0x11f8] sm:$0xff] %v2850
        %3875 = vst [vmem:[%s212 + $0x1200] sm:$0xff] %v2851
        %3876 = vst [vmem:[%s212 + $0x1208] sm:$0xff] %v2852
        %3877 = vst [vmem:[%s212 + $0x1210] sm:$0xff] %v2853
        %3878 = vst [vmem:[%s212 + $0x1218] sm:$0xff] %v2854
        %3879 = vst [vmem:[%s212 + $0x1220] sm:$0xff] %v2855
        %3880 = vst [vmem:[%s212 + $0x1228] sm:$0xff] %v2856
        %3881 = vst [vmem:[%s212 + $0x1230] sm:$0xff] %v2857
        %3882 = vst [vmem:[%s212 + $0x1238] sm:$0xff] %v2858
        %3883 = vst [vmem:[%s212 + $0x1240] sm:$0xff] %v2859
        %3884 = vst [vmem:[%s212 + $0x1248] sm:$0xff] %v2860
        %3885 = vst [vmem:[%s212 + $0x1250] sm:$0xff] %v2861
        %3886 = vst [vmem:[%s212 + $0x1258] sm:$0xff] %v2862
        %3887 = vst [vmem:[%s212 + $0x1260] sm:$0xff] %v2863
        %3888 = vst [vmem:[%s212 + $0x1268] sm:$0xff] %v2864
        %3889 = vst [vmem:[%s212 + $0x1270] sm:$0xff] %v2865
        %3890 = vst [vmem:[%s212 + $0x1278] sm:$0xff] %v2866
        %3891 = vst [vmem:[%s212 + $0x1280] sm:$0xff] %v2867
        %3892 = vst [vmem:[%s212 + $0x1288] sm:$0xff] %v2868
        %3893 = vst [vmem:[%s212 + $0x1290] sm:$0xff] %v2869
        %3894 = vst [vmem:[%s212 + $0x1298] sm:$0xff] %v2870
        %3895 = vst [vmem:[%s212 + $0x12a0] sm:$0xff] %v2871
        %3896 = vst [vmem:[%s212 + $0x12a8] sm:$0xff] %v2872
        %3897 = vst [vmem:[%s212 + $0x12b0] sm:$0xff] %v2873
        %3898 = vst [vmem:[%s212 + $0x12b8] sm:$0xff] %v2874
        %3899 = vst [vmem:[%s212 + $0x12c0] sm:$0xff] %v2875
        %3900 = vst [vmem:[%s212 + $0x12c8] sm:$0xff] %v2876
        %3901 = vst [vmem:[%s212 + $0x12d0] sm:$0xff] %v2877
        %3902 = vst [vmem:[%s212 + $0x12d8] sm:$0xff] %v2878
        %3903 = vst [vmem:[%s212 + $0x12e0] sm:$0xff] %v2879
        %3904 = vst [vmem:[%s212 + $0x12e8] sm:$0xff] %v2880
        %3905 = vst [vmem:[%s212 + $0x12f0] sm:$0xff] %v2881
        %3906 = vst [vmem:[%s212 + $0x12f8] sm:$0xff] %v2882
        %3907 = vst [vmem:[%s212 + $0x1300] sm:$0xff] %v2883
        %3908 = vst [vmem:[%s212 + $0x1308] sm:$0xff] %v2884
        %3909 = vst [vmem:[%s212 + $0x1310] sm:$0xff] %v2885
        %3910 = vst [vmem:[%s212 + $0x1318] sm:$0xff] %v2886
        %3911 = vst [vmem:[%s212 + $0x1320] sm:$0xff] %v2887
        %3912 = vst [vmem:[%s212 + $0x1328] sm:$0xff] %v2888
        %3913 = vst [vmem:[%s212 + $0x1330] sm:$0xff] %v2889
        %3914 = vst [vmem:[%s212 + $0x1338] sm:$0xff] %v2890
        %3915 = vst [vmem:[%s212 + $0x1340] sm:$0xff] %v2891
        %3916 = vst [vmem:[%s212 + $0x1348] sm:$0xff] %v2892
        %3917 = vst [vmem:[%s212 + $0x1350] sm:$0xff] %v2893
        %3918 = vst [vmem:[%s212 + $0x1358] sm:$0xff] %v2894
        %3919 = vst [vmem:[%s212 + $0x1360] sm:$0xff] %v2895
        %3920 = vst [vmem:[%s212 + $0x1368] sm:$0xff] %v2896
        %3921 = vst [vmem:[%s212 + $0x1370] sm:$0xff] %v2897
        %3922 = vst [vmem:[%s212 + $0x1378] sm:$0xff] %v2898
        %3923 = vst [vmem:[%s212 + $0x1380] sm:$0xff] %v2899
        %3924 = vst [vmem:[%s212 + $0x1388] sm:$0xff] %v2900
        %3925 = vst [vmem:[%s212 + $0x1390] sm:$0xff] %v2901
        %3926 = vst [vmem:[%s212 + $0x1398] sm:$0xff] %v2902
        %3927 = vst [vmem:[%s212 + $0x13a0] sm:$0xff] %v2903
        %3928 = vst [vmem:[%s212 + $0x13a8] sm:$0xff] %v2904
        %3929 = vst [vmem:[%s212 + $0x13b0] sm:$0xff] %v2905
        %3930 = vst [vmem:[%s212 + $0x13b8] sm:$0xff] %v2906
        %3931 = vst [vmem:[%s212 + $0x13c0] sm:$0xff] %v2907
        %3932 = vst [vmem:[%s212 + $0x13c8] sm:$0xff] %v2908
        %3933 = vst [vmem:[%s212 + $0x13d0] sm:$0xff] %v2909
        %3934 = vst [vmem:[%s212 + $0x13d8] sm:$0xff] %v2910
        %3935 = vst [vmem:[%s212 + $0x13e0] sm:$0xff] %v2911
        %3936 = vst [vmem:[%s212 + $0x13e8] sm:$0xff] %v2912
        %3937 = vst [vmem:[%s212 + $0x13f0] sm:$0xff] %v2913
        %3938 = vst [vmem:[%s212 + $0x13f8] sm:$0xff] %v2914
        %3939 = vst [vmem:[%s212 + $0x1400] sm:$0xff] %v2915
        %3940 = vst [vmem:[%s212 + $0x1408] sm:$0xff] %v2916
        %3941 = vst [vmem:[%s212 + $0x1410] sm:$0xff] %v2917
        %3942 = vst [vmem:[%s212 + $0x1418] sm:$0xff] %v2918
        %3943 = vst [vmem:[%s212 + $0x1420] sm:$0xff] %v2919
        %3944 = vst [vmem:[%s212 + $0x1428] sm:$0xff] %v2920
        %3945 = vst [vmem:[%s212 + $0x1430] sm:$0xff] %v2921
        %3946 = vst [vmem:[%s212 + $0x1438] sm:$0xff] %v2922
        %3947 = vst [vmem:[%s212 + $0x1440] sm:$0xff] %v2923
        %3948 = vst [vmem:[%s212 + $0x1448] sm:$0xff] %v2924
        %3949 = vst [vmem:[%s212 + $0x1450] sm:$0xff] %v2925
        %3950 = vst [vmem:[%s212 + $0x1458] sm:$0xff] %v2926
        %3951 = vst [vmem:[%s212 + $0x1460] sm:$0xff] %v2927
        %3952 = vst [vmem:[%s212 + $0x1468] sm:$0xff] %v2928
        %3953 = vst [vmem:[%s212 + $0x1470] sm:$0xff] %v2929
        %3954 = vst [vmem:[%s212 + $0x1478] sm:$0xff] %v2930
        %3955 = vst [vmem:[%s212 + $0x1480] sm:$0xff] %v2931
        %3956 = vst [vmem:[%s212 + $0x1488] sm:$0xff] %v2932
        %3957 = vst [vmem:[%s212 + $0x1490] sm:$0xff] %v2933
        %3958 = vst [vmem:[%s212 + $0x1498] sm:$0xff] %v2934
        %3959 = vst [vmem:[%s212 + $0x14a0] sm:$0xff] %v2935
        %3960 = vst [vmem:[%s212 + $0x14a8] sm:$0xff] %v2936
        %3961 = vst [vmem:[%s212 + $0x14b0] sm:$0xff] %v2937
        %3962 = vst [vmem:[%s212 + $0x14b8] sm:$0xff] %v2938
        %3963 = vst [vmem:[%s212 + $0x14c0] sm:$0xff] %v2939
        %3964 = vst [vmem:[%s212 + $0x14c8] sm:$0xff] %v2940
        %3965 = vst [vmem:[%s212 + $0x14d0] sm:$0xff] %v2941
        %3966 = vst [vmem:[%s212 + $0x14d8] sm:$0xff] %v2942
        %3967 = vst [vmem:[%s212 + $0x14e0] sm:$0xff] %v2943
        %3968 = vst [vmem:[%s212 + $0x14e8] sm:$0xff] %v2944
        %3969 = vst [vmem:[%s212 + $0x14f0] sm:$0xff] %v2945
        %3970 = vst [vmem:[%s212 + $0x14f8] sm:$0xff] %v2946
        %3971 = vst [vmem:[%s212 + $0x1500] sm:$0xff] %v2947
        %3972 = vst [vmem:[%s212 + $0x1508] sm:$0xff] %v2948
        %3973 = vst [vmem:[%s212 + $0x1510] sm:$0xff] %v2949
        %3974 = vst [vmem:[%s212 + $0x1518] sm:$0xff] %v2950
        %3975 = vst [vmem:[%s212 + $0x1520] sm:$0xff] %v2951
        %3976 = vst [vmem:[%s212 + $0x1528] sm:$0xff] %v2952
        %3977 = vst [vmem:[%s212 + $0x1530] sm:$0xff] %v2953
        %3978 = vst [vmem:[%s212 + $0x1538] sm:$0xff] %v2954
        %3979 = vst [vmem:[%s212 + $0x1540] sm:$0xff] %v2955
        %3980 = vst [vmem:[%s212 + $0x1548] sm:$0xff] %v2956
        %3981 = vst [vmem:[%s212 + $0x1550] sm:$0xff] %v2957
        %3982 = vst [vmem:[%s212 + $0x1558] sm:$0xff] %v2958
        %3983 = vst [vmem:[%s212 + $0x1560] sm:$0xff] %v2959
        %3984 = vst [vmem:[%s212 + $0x1568] sm:$0xff] %v2960
        %3985 = vst [vmem:[%s212 + $0x1570] sm:$0xff] %v2961
        %3986 = vst [vmem:[%s212 + $0x1578] sm:$0xff] %v2962
        %3987 = vst [vmem:[%s212 + $0x1580] sm:$0xff] %v2963
        %3988 = vst [vmem:[%s212 + $0x1588] sm:$0xff] %v2964
        %3989 = vst [vmem:[%s212 + $0x1590] sm:$0xff] %v2965
        %3990 = vst [vmem:[%s212 + $0x1598] sm:$0xff] %v2966
        %3991 = vst [vmem:[%s212 + $0x15a0] sm:$0xff] %v2967
        %3992 = vst [vmem:[%s212 + $0x15a8] sm:$0xff] %v2968
        %3993 = vst [vmem:[%s212 + $0x15b0] sm:$0xff] %v2969
        %3994 = vst [vmem:[%s212 + $0x15b8] sm:$0xff] %v2970
        %3995 = vst [vmem:[%s212 + $0x15c0] sm:$0xff] %v2971
        %3996 = vst [vmem:[%s212 + $0x15c8] sm:$0xff] %v2972
        %3997 = vst [vmem:[%s212 + $0x15d0] sm:$0xff] %v2973
        %3998 = vst [vmem:[%s212 + $0x15d8] sm:$0xff] %v2974
        %3999 = vst [vmem:[%s212 + $0x15e0] sm:$0xff] %v2975
        %4000 = vst [vmem:[%s212 + $0x15e8] sm:$0xff] %v2976
        %4001 = vst [vmem:[%s212 + $0x15f0] sm:$0xff] %v2977
        %4002 = vst [vmem:[%s212 + $0x15f8] sm:$0xff] %v2978
        %4003 = vst [vmem:[%s212 + $0x1600] sm:$0xff] %v2979
        %4004 = vst [vmem:[%s212 + $0x1608] sm:$0xff] %v2980
        %4005 = vst [vmem:[%s212 + $0x1610] sm:$0xff] %v2981
        %4006 = vst [vmem:[%s212 + $0x1618] sm:$0xff] %v2982
        %4007 = vst [vmem:[%s212 + $0x1620] sm:$0xff] %v2983
        %4008 = vst [vmem:[%s212 + $0x1628] sm:$0xff] %v2984
        %4009 = vst [vmem:[%s212 + $0x1630] sm:$0xff] %v2985
        %4010 = vst [vmem:[%s212 + $0x1638] sm:$0xff] %v2986
        %4011 = vst [vmem:[%s212 + $0x1640] sm:$0xff] %v2987
        %4012 = vst [vmem:[%s212 + $0x1648] sm:$0xff] %v2988
        %4013 = vst [vmem:[%s212 + $0x1650] sm:$0xff] %v2989
        %4014 = vst [vmem:[%s212 + $0x1658] sm:$0xff] %v2990
        %4015 = vst [vmem:[%s212 + $0x1660] sm:$0xff] %v2991
        %4016 = vst [vmem:[%s212 + $0x1668] sm:$0xff] %v2992
        %4017 = vst [vmem:[%s212 + $0x1670] sm:$0xff] %v2993
        %4018 = vst [vmem:[%s212 + $0x1678] sm:$0xff] %v2994
        %4019 = vst [vmem:[%s212 + $0x1680] sm:$0xff] %v2995
        %4020 = vst [vmem:[%s212 + $0x1688] sm:$0xff] %v2996
        %4021 = vst [vmem:[%s212 + $0x1690] sm:$0xff] %v2997
        %4022 = vst [vmem:[%s212 + $0x1698] sm:$0xff] %v2998
        %4023 = vst [vmem:[%s212 + $0x16a0] sm:$0xff] %v2999
        %4024 = vst [vmem:[%s212 + $0x16a8] sm:$0xff] %v3000
        %4025 = vst [vmem:[%s212 + $0x16b0] sm:$0xff] %v3001
        %4026 = vst [vmem:[%s212 + $0x16b8] sm:$0xff] %v3002
        %4027 = vst [vmem:[%s212 + $0x16c0] sm:$0xff] %v3003
        %4028 = vst [vmem:[%s212 + $0x16c8] sm:$0xff] %v3004
        %4029 = vst [vmem:[%s212 + $0x16d0] sm:$0xff] %v3005
        %4030 = vst [vmem:[%s212 + $0x16d8] sm:$0xff] %v3006
        %4031 = vst [vmem:[%s212 + $0x16e0] sm:$0xff] %v3007
        %4032 = vst [vmem:[%s212 + $0x16e8] sm:$0xff] %v3008
        %4033 = vst [vmem:[%s212 + $0x16f0] sm:$0xff] %v3009
        %4034 = vst [vmem:[%s212 + $0x16f8] sm:$0xff] %v3010
        %4035 = vst [vmem:[%s212 + $0x1700] sm:$0xff] %v3011
        %4036 = vst [vmem:[%s212 + $0x1708] sm:$0xff] %v3012
        %4037 = vst [vmem:[%s212 + $0x1710] sm:$0xff] %v3013
        %4038 = vst [vmem:[%s212 + $0x1718] sm:$0xff] %v3014
        %4039 = vst [vmem:[%s212 + $0x1720] sm:$0xff] %v3015
        %4040 = vst [vmem:[%s212 + $0x1728] sm:$0xff] %v3016
        %4041 = vst [vmem:[%s212 + $0x1730] sm:$0xff] %v3017
        %4042 = vst [vmem:[%s212 + $0x1738] sm:$0xff] %v3018
        %4043 = vst [vmem:[%s212 + $0x1740] sm:$0xff] %v3019
        %4044 = vst [vmem:[%s212 + $0x1748] sm:$0xff] %v3020
        %4045 = vst [vmem:[%s212 + $0x1750] sm:$0xff] %v3021
        %4046 = vst [vmem:[%s212 + $0x1758] sm:$0xff] %v3022
        %4047 = vst [vmem:[%s212 + $0x1760] sm:$0xff] %v3023
        %4048 = vst [vmem:[%s212 + $0x1768] sm:$0xff] %v3024
        %4049 = vst [vmem:[%s212 + $0x1770] sm:$0xff] %v3025
        %4050 = vst [vmem:[%s212 + $0x1778] sm:$0xff] %v3026
        %4051 = vst [vmem:[%s212 + $0x1780] sm:$0xff] %v3027
        %4052 = vst [vmem:[%s212 + $0x1788] sm:$0xff] %v3028
        %4053 = vst [vmem:[%s212 + $0x1790] sm:$0xff] %v3029
        %4054 = vst [vmem:[%s212 + $0x1798] sm:$0xff] %v3030
        %4055 = vst [vmem:[%s212 + $0x17a0] sm:$0xff] %v3031
        %4056 = vst [vmem:[%s212 + $0x17a8] sm:$0xff] %v3032
        %4057 = vst [vmem:[%s212 + $0x17b0] sm:$0xff] %v3033
        %4058 = vst [vmem:[%s212 + $0x17b8] sm:$0xff] %v3034
        %4059 = vst [vmem:[%s212 + $0x17c0] sm:$0xff] %v3035
        %4060 = vst [vmem:[%s212 + $0x17c8] sm:$0xff] %v3036
        %4061 = vst [vmem:[%s212 + $0x17d0] sm:$0xff] %v3037
        %4062 = vst [vmem:[%s212 + $0x17d8] sm:$0xff] %v3038
        %4063 = vst [vmem:[%s212 + $0x17e0] sm:$0xff] %v3039
        %4064 = vst [vmem:[%s212 + $0x17e8] sm:$0xff] %v3040
        %4065 = vst [vmem:[%s212 + $0x17f0] sm:$0xff] %v3041
        %4066 = vst [vmem:[%s212 + $0x17f8] sm:$0xff] %v3042
        %4067 = vst [vmem:[%s212 + $0x1800] sm:$0xff] %v3043
        %4068 = vst [vmem:[%s212 + $0x1808] sm:$0xff] %v3044
        %4069 = vst [vmem:[%s212 + $0x1810] sm:$0xff] %v3045
        %4070 = vst [vmem:[%s212 + $0x1818] sm:$0xff] %v3046
        %4071 = vst [vmem:[%s212 + $0x1820] sm:$0xff] %v3047
        %4072 = vst [vmem:[%s212 + $0x1828] sm:$0xff] %v3048
        %4073 = vst [vmem:[%s212 + $0x1830] sm:$0xff] %v3049
        %4074 = vst [vmem:[%s212 + $0x1838] sm:$0xff] %v3050
        %4075 = vst [vmem:[%s212 + $0x1840] sm:$0xff] %v3051
        %4076 = vst [vmem:[%s212 + $0x1848] sm:$0xff] %v3052
        %4077 = vst [vmem:[%s212 + $0x1850] sm:$0xff] %v3053
        %4078 = vst [vmem:[%s212 + $0x1858] sm:$0xff] %v3054
        %4079 = vst [vmem:[%s212 + $0x1860] sm:$0xff] %v3055
        %4080 = vst [vmem:[%s212 + $0x1868] sm:$0xff] %v3056
        %4081 = vst [vmem:[%s212 + $0x1870] sm:$0xff] %v3057
        %4082 = vst [vmem:[%s212 + $0x1878] sm:$0xff] %v3058
        %4083 = vst [vmem:[%s212 + $0x1880] sm:$0xff] %v3059
        %4084 = vst [vmem:[%s212 + $0x1888] sm:$0xff] %v3060
        %4085 = vst [vmem:[%s212 + $0x1890] sm:$0xff] %v3061
        %4086 = vst [vmem:[%s212 + $0x1898] sm:$0xff] %v3062
        %4087 = vst [vmem:[%s212 + $0x18a0] sm:$0xff] %v3063
        %4088 = vst [vmem:[%s212 + $0x18a8] sm:$0xff] %v3064
        %4089 = vst [vmem:[%s212 + $0x18b0] sm:$0xff] %v3065
        %4090 = vst [vmem:[%s212 + $0x18b8] sm:$0xff] %v3066
        %4091 = vst [vmem:[%s212 + $0x18c0] sm:$0xff] %v3067
        %4092 = vst [vmem:[%s212 + $0x18c8] sm:$0xff] %v3068
        %4093 = vst [vmem:[%s212 + $0x18d0] sm:$0xff] %v3069
        %4094 = vst [vmem:[%s212 + $0x18d8] sm:$0xff] %v3070
        %4095 = vst [vmem:[%s212 + $0x18e0] sm:$0xff] %v3071
        %4096 = vst [vmem:[%s212 + $0x18e8] sm:$0xff] %v3072
        %4097 = vst [vmem:[%s212 + $0x18f0] sm:$0xff] %v3073
        %4098 = vst [vmem:[%s212 + $0x18f8] sm:$0xff] %v3074
        %4099 = vst [vmem:[%s212 + $0x1900] sm:$0xff] %v3075
        %4100 = vst [vmem:[%s212 + $0x1908] sm:$0xff] %v3076
        %4101 = vst [vmem:[%s212 + $0x1910] sm:$0xff] %v3077
        %4102 = vst [vmem:[%s212 + $0x1918] sm:$0xff] %v3078
        %4103 = vst [vmem:[%s212 + $0x1920] sm:$0xff] %v3079
        %4104 = vst [vmem:[%s212 + $0x1928] sm:$0xff] %v3080
        %4105 = vst [vmem:[%s212 + $0x1930] sm:$0xff] %v3081
        %4106 = vst [vmem:[%s212 + $0x1938] sm:$0xff] %v3082
        %4107 = vst [vmem:[%s212 + $0x1940] sm:$0xff] %v3083
        %4108 = vst [vmem:[%s212 + $0x1948] sm:$0xff] %v3084
        %4109 = vst [vmem:[%s212 + $0x1950] sm:$0xff] %v3085
        %4110 = vst [vmem:[%s212 + $0x1958] sm:$0xff] %v3086
        %4111 = vst [vmem:[%s212 + $0x1960] sm:$0xff] %v3087
        %4112 = vst [vmem:[%s212 + $0x1968] sm:$0xff] %v3088
        %4113 = vst [vmem:[%s212 + $0x1970] sm:$0xff] %v3089
        %4114 = vst [vmem:[%s212 + $0x1978] sm:$0xff] %v3090
        %4115 = vst [vmem:[%s212 + $0x1980] sm:$0xff] %v3091
        %4116 = vst [vmem:[%s212 + $0x1988] sm:$0xff] %v3092
        %4117 = vst [vmem:[%s212 + $0x1990] sm:$0xff] %v3093
        %4118 = vst [vmem:[%s212 + $0x1998] sm:$0xff] %v3094
        %4119 = vst [vmem:[%s212 + $0x19a0] sm:$0xff] %v3095
        %4120 = vst [vmem:[%s212 + $0x19a8] sm:$0xff] %v3096
        %4121 = vst [vmem:[%s212 + $0x19b0] sm:$0xff] %v3097
        %4122 = vst [vmem:[%s212 + $0x19b8] sm:$0xff] %v3098
        %4123 = vst [vmem:[%s212 + $0x19c0] sm:$0xff] %v3099
        %4124 = vst [vmem:[%s212 + $0x19c8] sm:$0xff] %v3100
        %4125 = vst [vmem:[%s212 + $0x19d0] sm:$0xff] %v3101
        %4126 = vst [vmem:[%s212 + $0x19d8] sm:$0xff] %v3102
        %4127 = vst [vmem:[%s212 + $0x19e0] sm:$0xff] %v3103
        %4128 = vst [vmem:[%s212 + $0x19e8] sm:$0xff] %v3104
        %4129 = vst [vmem:[%s212 + $0x19f0] sm:$0xff] %v3105
        %4130 = vst [vmem:[%s212 + $0x19f8] sm:$0xff] %v3106
        %4131 = vst [vmem:[%s212 + $0x1a00] sm:$0xff] %v3107
        %4132 = vst [vmem:[%s212 + $0x1a08] sm:$0xff] %v3108
        %4133 = vst [vmem:[%s212 + $0x1a10] sm:$0xff] %v3109
        %4134 = vst [vmem:[%s212 + $0x1a18] sm:$0xff] %v3110
        %4135 = vst [vmem:[%s212 + $0x1a20] sm:$0xff] %v3111
        %4136 = vst [vmem:[%s212 + $0x1a28] sm:$0xff] %v3112
        %4137 = vst [vmem:[%s212 + $0x1a30] sm:$0xff] %v3113
        %4138 = vst [vmem:[%s212 + $0x1a38] sm:$0xff] %v3114
        %4139 = vst [vmem:[%s212 + $0x1a40] sm:$0xff] %v3115
        %4140 = vst [vmem:[%s212 + $0x1a48] sm:$0xff] %v3116
        %4141 = vst [vmem:[%s212 + $0x1a50] sm:$0xff] %v3117
        %4142 = vst [vmem:[%s212 + $0x1a58] sm:$0xff] %v3118
        %4143 = vst [vmem:[%s212 + $0x1a60] sm:$0xff] %v3119
        %4144 = vst [vmem:[%s212 + $0x1a68] sm:$0xff] %v3120
        %4145 = vst [vmem:[%s212 + $0x1a70] sm:$0xff] %v3121
        %4146 = vst [vmem:[%s212 + $0x1a78] sm:$0xff] %v3122
        %4147 = vst [vmem:[%s212 + $0x1a80] sm:$0xff] %v3123
        %4148 = vst [vmem:[%s212 + $0x1a88] sm:$0xff] %v3124
        %4149 = vst [vmem:[%s212 + $0x1a90] sm:$0xff] %v3125
        %4150 = vst [vmem:[%s212 + $0x1a98] sm:$0xff] %v3126
        %4151 = vst [vmem:[%s212 + $0x1aa0] sm:$0xff] %v3127
        %4152 = vst [vmem:[%s212 + $0x1aa8] sm:$0xff] %v3128
        %4153 = vst [vmem:[%s212 + $0x1ab0] sm:$0xff] %v3129
        %4154 = vst [vmem:[%s212 + $0x1ab8] sm:$0xff] %v3130
        %4155 = vst [vmem:[%s212 + $0x1ac0] sm:$0xff] %v3131
        %4156 = vst [vmem:[%s212 + $0x1ac8] sm:$0xff] %v3132
        %4157 = vst [vmem:[%s212 + $0x1ad0] sm:$0xff] %v3133
        %4158 = vst [vmem:[%s212 + $0x1ad8] sm:$0xff] %v3134
        %4159 = vst [vmem:[%s212 + $0x1ae0] sm:$0xff] %v3135
        %4160 = vst [vmem:[%s212 + $0x1ae8] sm:$0xff] %v3136
        %4161 = vst [vmem:[%s212 + $0x1af0] sm:$0xff] %v3137
        %4162 = vst [vmem:[%s212 + $0x1af8] sm:$0xff] %v3138
        %4163 = vst [vmem:[%s212 + $0x1b00] sm:$0xff] %v3139
        %4164 = vst [vmem:[%s212 + $0x1b08] sm:$0xff] %v3140
        %4165 = vst [vmem:[%s212 + $0x1b10] sm:$0xff] %v3141
        %4166 = vst [vmem:[%s212 + $0x1b18] sm:$0xff] %v3142
        %4167 = vst [vmem:[%s212 + $0x1b20] sm:$0xff] %v3143
        %4168 = vst [vmem:[%s212 + $0x1b28] sm:$0xff] %v3144
        %4169 = vst [vmem:[%s212 + $0x1b30] sm:$0xff] %v3145
        %4170 = vst [vmem:[%s212 + $0x1b38] sm:$0xff] %v3146
        %4171 = vst [vmem:[%s212 + $0x1b40] sm:$0xff] %v3147
        %4172 = vst [vmem:[%s212 + $0x1b48] sm:$0xff] %v3148
        %4173 = vst [vmem:[%s212 + $0x1b50] sm:$0xff] %v3149
        %4174 = vst [vmem:[%s212 + $0x1b58] sm:$0xff] %v3150
        %4175 = vst [vmem:[%s212 + $0x1b60] sm:$0xff] %v3151
        %4176 = vst [vmem:[%s212 + $0x1b68] sm:$0xff] %v3152
        %4177 = vst [vmem:[%s212 + $0x1b70] sm:$0xff] %v3153
        %4178 = vst [vmem:[%s212 + $0x1b78] sm:$0xff] %v3154
        %4179 = vst [vmem:[%s212 + $0x1b80] sm:$0xff] %v3155
        %4180 = vst [vmem:[%s212 + $0x1b88] sm:$0xff] %v3156
        %4181 = vst [vmem:[%s212 + $0x1b90] sm:$0xff] %v3157
        %4182 = vst [vmem:[%s212 + $0x1b98] sm:$0xff] %v3158
        %4183 = vst [vmem:[%s212 + $0x1ba0] sm:$0xff] %v3159
        %4184 = vst [vmem:[%s212 + $0x1ba8] sm:$0xff] %v3160
        %4185 = vst [vmem:[%s212 + $0x1bb0] sm:$0xff] %v3161
        %4186 = vst [vmem:[%s212 + $0x1bb8] sm:$0xff] %v3162
        %4187 = vst [vmem:[%s212 + $0x1bc0] sm:$0xff] %v3163
        %4188 = vst [vmem:[%s212 + $0x1bc8] sm:$0xff] %v3164
        %4189 = vst [vmem:[%s212 + $0x1bd0] sm:$0xff] %v3165
        %4190 = vst [vmem:[%s212 + $0x1bd8] sm:$0xff] %v3166
        %4191 = vst [vmem:[%s212 + $0x1be0] sm:$0xff] %v3167
        %4192 = vst [vmem:[%s212 + $0x1be8] sm:$0xff] %v3168
        %4193 = vst [vmem:[%s212 + $0x1bf0] sm:$0xff] %v3169
        %4194 = vst [vmem:[%s212 + $0x1bf8] sm:$0xff] %v3170
        %4195 = vst [vmem:[%s212 + $0x1c00] sm:$0xff] %v3171
        %4196 = vst [vmem:[%s212 + $0x1c08] sm:$0xff] %v3172
        %4197 = vst [vmem:[%s212 + $0x1c10] sm:$0xff] %v3173
        %4198 = vst [vmem:[%s212 + $0x1c18] sm:$0xff] %v3174
        %4199 = vst [vmem:[%s212 + $0x1c20] sm:$0xff] %v3175
        %4200 = vst [vmem:[%s212 + $0x1c28] sm:$0xff] %v3176
        %4201 = vst [vmem:[%s212 + $0x1c30] sm:$0xff] %v3177
        %4202 = vst [vmem:[%s212 + $0x1c38] sm:$0xff] %v3178
        %4203 = vst [vmem:[%s212 + $0x1c40] sm:$0xff] %v3179
        %4204 = vst [vmem:[%s212 + $0x1c48] sm:$0xff] %v3180
        %4205 = vst [vmem:[%s212 + $0x1c50] sm:$0xff] %v3181
        %4206 = vst [vmem:[%s212 + $0x1c58] sm:$0xff] %v3182
        %4207 = vst [vmem:[%s212 + $0x1c60] sm:$0xff] %v3183
        %4208 = vst [vmem:[%s212 + $0x1c68] sm:$0xff] %v3184
        %4209 = vst [vmem:[%s212 + $0x1c70] sm:$0xff] %v3185
        %4210 = vst [vmem:[%s212 + $0x1c78] sm:$0xff] %v3186
        %4211 = vst [vmem:[%s212 + $0x1c80] sm:$0xff] %v3187
        %4212 = vst [vmem:[%s212 + $0x1c88] sm:$0xff] %v3188
        %4213 = vst [vmem:[%s212 + $0x1c90] sm:$0xff] %v3189
        %4214 = vst [vmem:[%s212 + $0x1c98] sm:$0xff] %v3190
        %4215 = vst [vmem:[%s212 + $0x1ca0] sm:$0xff] %v3191
        %4216 = vst [vmem:[%s212 + $0x1ca8] sm:$0xff] %v3192
        %4217 = vst [vmem:[%s212 + $0x1cb0] sm:$0xff] %v3193
        %4218 = vst [vmem:[%s212 + $0x1cb8] sm:$0xff] %v3194
        %4219 = vst [vmem:[%s212 + $0x1cc0] sm:$0xff] %v3195
        %4220 = vst [vmem:[%s212 + $0x1cc8] sm:$0xff] %v3196
        %4221 = vst [vmem:[%s212 + $0x1cd0] sm:$0xff] %v3197
        %4222 = vst [vmem:[%s212 + $0x1cd8] sm:$0xff] %v3198
        %4223 = vst [vmem:[%s212 + $0x1ce0] sm:$0xff] %v3199
        %4224 = vst [vmem:[%s212 + $0x1ce8] sm:$0xff] %v3200
        %4225 = vst [vmem:[%s212 + $0x1cf0] sm:$0xff] %v3201
        %4226 = vst [vmem:[%s212 + $0x1cf8] sm:$0xff] %v3202
        %4227 = vst [vmem:[%s212 + $0x1d00] sm:$0xff] %v3203
        %4228 = vst [vmem:[%s212 + $0x1d08] sm:$0xff] %v3204
        %4229 = vst [vmem:[%s212 + $0x1d10] sm:$0xff] %v3205
        %4230 = vst [vmem:[%s212 + $0x1d18] sm:$0xff] %v3206
        %4231 = vst [vmem:[%s212 + $0x1d20] sm:$0xff] %v3207
        %4232 = vst [vmem:[%s212 + $0x1d28] sm:$0xff] %v3208
        %4233 = vst [vmem:[%s212 + $0x1d30] sm:$0xff] %v3209
        %4234 = vst [vmem:[%s212 + $0x1d38] sm:$0xff] %v3210
        %4235 = vst [vmem:[%s212 + $0x1d40] sm:$0xff] %v3211
        %4236 = vst [vmem:[%s212 + $0x1d48] sm:$0xff] %v3212
        %4237 = vst [vmem:[%s212 + $0x1d50] sm:$0xff] %v3213
        %4238 = vst [vmem:[%s212 + $0x1d58] sm:$0xff] %v3214
        %4239 = vst [vmem:[%s212 + $0x1d60] sm:$0xff] %v3215
        %4240 = vst [vmem:[%s212 + $0x1d68] sm:$0xff] %v3216
        %4241 = vst [vmem:[%s212 + $0x1d70] sm:$0xff] %v3217
        %4242 = vst [vmem:[%s212 + $0x1d78] sm:$0xff] %v3218
        %4243 = vst [vmem:[%s212 + $0x1d80] sm:$0xff] %v3219
        %4244 = vst [vmem:[%s212 + $0x1d88] sm:$0xff] %v3220
        %4245 = vst [vmem:[%s212 + $0x1d90] sm:$0xff] %v3221
        %4246 = vst [vmem:[%s212 + $0x1d98] sm:$0xff] %v3222
        %4247 = vst [vmem:[%s212 + $0x1da0] sm:$0xff] %v3223
        %4248 = vst [vmem:[%s212 + $0x1da8] sm:$0xff] %v3224
        %4249 = vst [vmem:[%s212 + $0x1db0] sm:$0xff] %v3225
        %4250 = vst [vmem:[%s212 + $0x1db8] sm:$0xff] %v3226
        %4251 = vst [vmem:[%s212 + $0x1dc0] sm:$0xff] %v3227
        %4252 = vst [vmem:[%s212 + $0x1dc8] sm:$0xff] %v3228
        %4253 = vst [vmem:[%s212 + $0x1dd0] sm:$0xff] %v3229
        %4254 = vst [vmem:[%s212 + $0x1dd8] sm:$0xff] %v3230
        %4255 = vst [vmem:[%s212 + $0x1de0] sm:$0xff] %v3231
        %4256 = vst [vmem:[%s212 + $0x1de8] sm:$0xff] %v3232
        %4257 = vst [vmem:[%s212 + $0x1df0] sm:$0xff] %v3233
        %4258 = vst [vmem:[%s212 + $0x1df8] sm:$0xff] %v3234
        %4259 = vst [vmem:[%s212 + $0x1e00] sm:$0xff] %v3235
        %4260 = vst [vmem:[%s212 + $0x1e08] sm:$0xff] %v3236
        %4261 = vst [vmem:[%s212 + $0x1e10] sm:$0xff] %v3237
        %4262 = vst [vmem:[%s212 + $0x1e18] sm:$0xff] %v3238
        %4263 = vst [vmem:[%s212 + $0x1e20] sm:$0xff] %v3239
        %4264 = vst [vmem:[%s212 + $0x1e28] sm:$0xff] %v3240
        %4265 = vst [vmem:[%s212 + $0x1e30] sm:$0xff] %v3241
        %4266 = vst [vmem:[%s212 + $0x1e38] sm:$0xff] %v3242
        %4267 = vst [vmem:[%s212 + $0x1e40] sm:$0xff] %v3243
        %4268 = vst [vmem:[%s212 + $0x1e48] sm:$0xff] %v3244
        %4269 = vst [vmem:[%s212 + $0x1e50] sm:$0xff] %v3245
        %4270 = vst [vmem:[%s212 + $0x1e58] sm:$0xff] %v3246
        %4271 = vst [vmem:[%s212 + $0x1e60] sm:$0xff] %v3247
        %4272 = vst [vmem:[%s212 + $0x1e68] sm:$0xff] %v3248
        %4273 = vst [vmem:[%s212 + $0x1e70] sm:$0xff] %v3249
        %4274 = vst [vmem:[%s212 + $0x1e78] sm:$0xff] %v3250
        %4275 = vst [vmem:[%s212 + $0x1e80] sm:$0xff] %v3251
        %4276 = vst [vmem:[%s212 + $0x1e88] sm:$0xff] %v3252
        %4277 = vst [vmem:[%s212 + $0x1e90] sm:$0xff] %v3253
        %4278 = vst [vmem:[%s212 + $0x1e98] sm:$0xff] %v3254
        %4279 = vst [vmem:[%s212 + $0x1ea0] sm:$0xff] %v3255
        %4280 = vst [vmem:[%s212 + $0x1ea8] sm:$0xff] %v3256
        %4281 = vst [vmem:[%s212 + $0x1eb0] sm:$0xff] %v3257
        %4282 = vst [vmem:[%s212 + $0x1eb8] sm:$0xff] %v3258
        %4283 = vst [vmem:[%s212 + $0x1ec0] sm:$0xff] %v3259
        %4284 = vst [vmem:[%s212 + $0x1ec8] sm:$0xff] %v3260
        %4285 = vst [vmem:[%s212 + $0x1ed0] sm:$0xff] %v3261
        %4286 = vst [vmem:[%s212 + $0x1ed8] sm:$0xff] %v3262
        %4287 = vst [vmem:[%s212 + $0x1ee0] sm:$0xff] %v3263
        %4288 = vst [vmem:[%s212 + $0x1ee8] sm:$0xff] %v3264
        %4289 = vst [vmem:[%s212 + $0x1ef0] sm:$0xff] %v3265
        %4290 = vst [vmem:[%s212 + $0x1ef8] sm:$0xff] %v3266
        %4291 = vst [vmem:[%s212 + $0x1f00] sm:$0xff] %v3267
        %4292 = vst [vmem:[%s212 + $0x1f08] sm:$0xff] %v3268
        %4293 = vst [vmem:[%s212 + $0x1f10] sm:$0xff] %v3269
        %4294 = vst [vmem:[%s212 + $0x1f18] sm:$0xff] %v3270
        %4295 = vst [vmem:[%s212 + $0x1f20] sm:$0xff] %v3271
        %4296 = vst [vmem:[%s212 + $0x1f28] sm:$0xff] %v3272
        %4297 = vst [vmem:[%s212 + $0x1f30] sm:$0xff] %v3273
        %4298 = vst [vmem:[%s212 + $0x1f38] sm:$0xff] %v3274
        %4299 = vst [vmem:[%s212 + $0x1f40] sm:$0xff] %v3275
        %4300 = vst [vmem:[%s212 + $0x1f48] sm:$0xff] %v3276
        %4301 = vst [vmem:[%s212 + $0x1f50] sm:$0xff] %v3277
        %4302 = vst [vmem:[%s212 + $0x1f58] sm:$0xff] %v3278
        %4303 = vst [vmem:[%s212 + $0x1f60] sm:$0xff] %v3279
        %4304 = vst [vmem:[%s212 + $0x1f68] sm:$0xff] %v3280
        %4305 = vst [vmem:[%s212 + $0x1f70] sm:$0xff] %v3281
        %4306 = vst [vmem:[%s212 + $0x1f78] sm:$0xff] %v3282
        %4307 = vst [vmem:[%s212 + $0x1f80] sm:$0xff] %v3283
        %4308 = vst [vmem:[%s212 + $0x1f88] sm:$0xff] %v3284
        %4309 = vst [vmem:[%s212 + $0x1f90] sm:$0xff] %v3285
        %4310 = vst [vmem:[%s212 + $0x1f98] sm:$0xff] %v3286
        %4311 = vst [vmem:[%s212 + $0x1fa0] sm:$0xff] %v3287
        %4312 = vst [vmem:[%s212 + $0x1fa8] sm:$0xff] %v3288
        %4313 = vst [vmem:[%s212 + $0x1fb0] sm:$0xff] %v3289
        %4314 = vst [vmem:[%s212 + $0x1fb8] sm:$0xff] %v3290
        %4315 = vst [vmem:[%s212 + $0x1fc0] sm:$0xff] %v3291
        %4316 = vst [vmem:[%s212 + $0x1fc8] sm:$0xff] %v3292
        %4317 = vst [vmem:[%s212 + $0x1fd0] sm:$0xff] %v3293
        %4318 = vst [vmem:[%s212 + $0x1fd8] sm:$0xff] %v3294
        %4319 = vst [vmem:[%s212 + $0x1fe0] sm:$0xff] %v3295
        %4320 = vst [vmem:[%s212 + $0x1fe8] sm:$0xff] %v3296
        %4321 = vst [vmem:[%s212 + $0x1ff0] sm:$0xff] %v3297
        %4322 = vst [vmem:[%s212 + $0x1ff8] sm:$0xff] %v3298
        %s4323 = sand.u32 %s114, 1
        %s4324 = scalar_lea.sflag [#allocation6], %s4323
        %s4325 = sand.u32 %s114, 1
        %s4326 = smul.addr %s4325, 8192
        %s4327 = scalar_lea.vmem [#allocation7], %s4326
        // Predicated region
        $region37: #{tpu_custom_call.1} parent=31 // pred_check
          %p4328 = pneg %p124
        $region38: #{tpu_custom_call.1} parent=31 // pred_check_branch
          %4330 = sbr.rel (%p4328) target = $region40
        $region39: #{tpu_custom_call.1} parent=31 // pred_region
          %s4331 = smul.u32 4096, %s27
          %s4332 = ssub.s32 4688, %s4331
          %p4333 = scmp.lt.s32.totalorder %s4332, 4096
          %s4334 = scalar_select %p4333, %s4332, 4096
          %s4335 = smul.u32 32, %s4334
          %s4337 = ssub.s32 131072, %s4335
          %4338 = vsyncadd %s4324, %s4337
          %p4339 = scmp.ne.s32.totalorder 0, %s4335
          %s4340 = smul.addr %s26, 4688
          %s4341 = sadd.s32 %s4331, %s4340
          %s4342 = smul.addr %s4341, 32
          %s4343 = scalar_lea.hbm %s3, %s4342
          %s4344 = smul.u32 %s4334, 2
          %s4345 = sshll.u32 %s4344, 4
          %s4346 = sshll.u32 %s4327, 4
          %s4347 = int_to_ptr.vmem [resolvable:$true] %s4346
          %4349 = dma.vmem_to_hbm [thread:$0]  (%p4339), %s4347, %s4345, %s4343, %s4324
        $region40: #{tpu_custom_call.1} parent=31 // pred_fallthru
          _
      $region32: #{tpu_custom_call.1} parent=5 // pred_fallthru
        _
      %p4350 = scmp.le.s32.totalorder 2, %s17
      // Predicated region
      $region41: #{tpu_custom_call.1} parent=5 // pred_check
        %p4351 = pneg %p4350
      $region42: #{tpu_custom_call.1} parent=5 // pred_check_branch
        %4353 = sbr.rel (%p4351) target = $region44
      $region43: #{tpu_custom_call.1} parent=5 // pred_region
        %s4354 = ssub.s32 %s17, 2
        // Predicated region
        $region45: #{tpu_custom_call.1} parent=43 // pred_check
          %p4355 = pneg %p130
        $region46: #{tpu_custom_call.1} parent=43 // pred_check_branch
          %4357 = sbr.rel (%p4355) target = $region48
        $region47: #{tpu_custom_call.1} parent=43 // pred_region
          %s4358 = sand.u32 %s115, 1
          %s4359 = scalar_lea.sflag [#allocation6], %s4358
          %s4360 = sand.u32 %s115, 1
          %s4361 = smul.addr %s4360, 8192
          %s4362 = scalar_lea.vmem [#allocation7], %s4361
          %4363 = dma.done %s4359, 131072
        $region48: #{tpu_custom_call.1} parent=43 // pred_fallthru
          _
      $region44: #{tpu_custom_call.1} parent=5 // pred_fallthru
        _
    $region6: #{tpu_custom_call.1} parent=1 // loop_footer
      %s21 = sadd.s32 1, %s17
    $region7: #{tpu_custom_call.1} parent=1 // loop_footer_branch
      %16 = sbr.rel target = $region3
    $region8: #{tpu_custom_call.1} parent=1 // loop_exit
      _
    %4364 = vsyncpa [#allocation5], 1
    %s4365 = scalar_lea.sflag [#allocation5], 1
    %4366 = vsyncpa %s4365, 1
    %4367 = vsyncpa [#allocation6], 1
    %s4368 = scalar_lea.sflag [#allocation6], 1
    %4369 = vsyncpa %s4368, 1

</llo_original>
